<compile_context>
chip_gen: v5e
topology: v5e:2x2
jax: 0.10.0
libtpu: 0.0.40
codegen_flags: <defaults>
</compile_context>

<pallas_src>
import jax
import jax.numpy as jnp
from jax import lax
from jax.experimental import pallas as pl
from jax.experimental.pallas import tpu as pltpu

LEAKY_SLOPE = 0.2
BN_EPS = 1e-5


# ---------------------------------------------------------------------------
# Conv2d (stride 2) + bias, fused with per-image per-channel BN partial stats.
# Input arrives as 4 parity sub-arrays (even/odd rows x even/odd cols of the
# zero-padded image) so every tap is a contiguous (un-strided) window.
# ---------------------------------------------------------------------------
def _make_conv_kernel(Cin, Cout, KH, KW, Ho, Wo, out_dtype):
    def kernel(xee_ref, xeo_ref, xoe_ref, xoo_ref, w_ref, b_ref, o_ref, st_ref):
        # w_ref: SMEM (Cout*Cin*KH*KW,) f32 ; b_ref: SMEM (Cout,) f32
        refs = ((xee_ref, xeo_ref), (xoe_ref, xoo_ref))
        accs = [None] * Cout
        # taps-outer / channels-inner: each shifted window is loaded exactly once
        # and reused for all Cout output channels.
        for ci in range(Cin):
            for kh in range(KH):
                for kw in range(KW):
                    src = refs[kh % 2][kw % 2]
                    r0, c0 = kh // 2, kw // 2
                    win = src[0, ci, r0:r0 + Ho, c0:c0 + Wo]           # (Ho, Wo)
                    for co in range(Cout):
                        wi = w_ref[((co * Cin + ci) * KH + kh) * KW + kw]
                        term = wi * win
                        accs[co] = term if accs[co] is None else accs[co] + term
        rows = []
        for co in range(Cout):
            yc = accs[co] + b_ref[co]                                  # f32 (Ho, Wo)
            o_ref[0, co] = yc.astype(out_dtype)
            # BN partial statistics for this (image, channel): sum and sum of squares.
            rs = jnp.sum(yc, axis=1, keepdims=True)                    # (Ho, 1)
            qs = jnp.sum(yc * yc, axis=1, keepdims=True)               # (Ho, 1)
            rows.append(jnp.concatenate(
                [jnp.sum(rs, axis=0, keepdims=True),
                 jnp.sum(qs, axis=0, keepdims=True)], axis=1))         # (1, 2)
        st_ref[0] = jnp.concatenate(rows, axis=0)                      # one (Cout,2) store
    return kernel


def conv2d_bias_stats(x, w, b, *, stride=2, padding=(1, 2), out_dtype=jnp.bfloat16):
    """x: (B, Cin, H, W); w: (Cout, Cin, KH, KW); b: (Cout,).
    Returns (y, pstats): y (B, Cout, Ho, Wo) out_dtype, pstats (B, Cout, 2) f32."""
    assert stride == 2, "parity-split conv kernel implements the module default stride=2"
    if x.dtype != jnp.float32:
        x = x.astype(jnp.float32)
    B, Cin, H, W = x.shape
    Cout, _, KH, KW = w.shape
    ph, pw = padding
    Ho = (H + 2 * ph - KH) // stride + 1
    Wo = (W + 2 * pw - KW) // stride + 1
    He = Ho + (KH - 1) // 2
    We = Wo + (KW - 1) // 2

    # Single zero-pad sized so every parity slice is exactly (He, We); the extra
    # bottom/right padding beyond the true conv padding is never read by the kernel.
    Hp = max(H + 2 * ph, 2 * He)
    Wp = max(W + 2 * pw, 2 * We)
    xp = jnp.pad(x, ((0, 0), (0, 0), (ph, Hp - H - ph), (pw, Wp - W - pw)))
    parts = [xp[:, :, rp::2, cp::2][:, :, :He, :We]
             for rp in (0, 1) for cp in (0, 1)]                        # ee, eo, oe, oo

    x_spec = pl.BlockSpec((1, Cin, He, We), lambda n: (n, 0, 0, 0))
    y, pstats = pl.pallas_call(
        _make_conv_kernel(Cin, Cout, KH, KW, Ho, Wo, out_dtype),
        out_shape=(jax.ShapeDtypeStruct((B, Cout, Ho, Wo), out_dtype),
                   jax.ShapeDtypeStruct((B, Cout, 2), jnp.float32)),
        grid=(B,),
        in_specs=[x_spec, x_spec, x_spec, x_spec,
                  pl.BlockSpec(memory_space=pltpu.MemorySpace.SMEM),
                  pl.BlockSpec(memory_space=pltpu.MemorySpace.SMEM)],
        out_specs=(pl.BlockSpec((1, Cout, Ho, Wo), lambda n: (n, 0, 0, 0)),
                   pl.BlockSpec((1, Cout, 2), lambda n: (n, 0, 0))),
        compiler_params=pltpu.CompilerParams(dimension_semantics=("parallel",)),
    )(*parts, w.reshape(-1).astype(jnp.float32), b.astype(jnp.float32))
    return y, pstats


# ---------------------------------------------------------------------------
# BatchNorm2d (training-mode batch stats) + LeakyReLU.  Scale/shift are
# precomputed per channel in the wrapper (tiny) and passed as SMEM scalars;
# the kernel is a pure scale/shift/LReLU stream, bf16 in / bf16 out.
# ---------------------------------------------------------------------------
def _make_bn_lrelu_kernel(C, slope):
    def kernel(y_ref, sc_ref, sh_ref, o_ref):
        for c in range(C):
            v = y_ref[0, c].astype(jnp.float32) * sc_ref[c] + sh_ref[c]
            o_ref[0, c] = jnp.where(v > 0, v, slope * v).astype(jnp.bfloat16)
    return kernel


def bn_lrelu(y, pstats, gamma, beta, *, eps=BN_EPS, slope=LEAKY_SLOPE):
    B, C, Ho, Wo = y.shape
    count = B * Ho * Wo
    # Tiny (C,) JAX glue: fold batch stats into per-channel scale/shift once.
    tot = jnp.sum(pstats.astype(jnp.float32), axis=0)            # (C, 2)
    mean = tot[:, 0] / count
    var = tot[:, 1] / count - mean * mean                        # biased variance
    scale = gamma.astype(jnp.float32) * lax.rsqrt(var + eps)
    shift = beta.astype(jnp.float32) - mean * scale
    return pl.pallas_call(
        _make_bn_lrelu_kernel(C, slope),
        out_shape=jax.ShapeDtypeStruct((B, C, Ho, Wo), jnp.bfloat16),
        grid=(B,),
        in_specs=[pl.BlockSpec((1, C, Ho, Wo), lambda n: (n, 0, 0, 0)),
                  pl.BlockSpec(memory_space=pltpu.MemorySpace.SMEM),
                  pl.BlockSpec(memory_space=pltpu.MemorySpace.SMEM)],
        out_specs=pl.BlockSpec((1, C, Ho, Wo), lambda n: (n, 0, 0, 0)),
        compiler_params=pltpu.CompilerParams(dimension_semantics=("parallel",)),
    )(y, scale, shift)


# ---------------------------------------------------------------------------
# Fused Linear head: Linear(D->L0)+LReLU (K-tiled bf16 MXU matmul with a
# pre-transposed lane-dense (L0, D) weight, f32 VMEM accumulator) and all
# remaining tiny Linear layers (+LReLU / final Sigmoid) applied in the finalize.
# ---------------------------------------------------------------------------
def _make_head_kernel(n_tail, slope):
    def kernel(*refs):
        x_ref, w1_ref, b1_ref = refs[0], refs[1], refs[2]
        tail = refs[3:3 + 2 * n_tail]
        o_ref = refs[3 + 2 * n_tail]
        acc_ref = refs[4 + 2 * n_tail]

        @pl.when(pl.program_id(0) == 0)
        def _init():
            acc_ref[...] = jnp.zeros_like(acc_ref)

        # W1 is stored transposed (L0, tk): contract dim 1 of both operands so the
        # dominant operand stays lane-dense (no 16->128 lane padding on DMA).
        acc_ref[...] += lax.dot_general(
            x_ref[...], w1_ref[...],
            dimension_numbers=(((1,), (1,)), ((), ())),
            preferred_element_type=jnp.float32)

        @pl.when(pl.program_id(0) == pl.num_programs(0) - 1)
        def _finish():
            z = acc_ref[...] + b1_ref[...]                       # (B, L0)
            z = jnp.where(z > 0, z, slope * z)                   # LeakyReLU
            for i in range(n_tail):                              # tiny fused layers
                w = tail[2 * i][...]
                b = tail[2 * i + 1][...]
                z = jnp.dot(z, w, preferred_element_type=jnp.float32) + b
                if i == n_tail - 1:
                    z = jax.nn.sigmoid(z)
                else:
                    z = jnp.where(z > 0, z, slope * z)
            o_ref[...] = z
    return kernel


def linear_head(x, w1T, b1, tail, *, slope=LEAKY_SLOPE, tile_k=16384,
                vmem_budget=24 * 1024 * 1024):
    """x: (B, D) bf16. w1T: (L0, D) bf16 (pre-cast / pre-transposed at init).
    tail: [(w_i (Li, Lj) f32, b_i (Lj,) f32), ...] with LeakyReLU between and
    Sigmoid after the last layer."""
    B, D = x.shape
    L0 = w1T.shape[0]
    # Single K step whenever the double-buffered x/W1 blocks fit scoped VMEM
    # (true for the module's default shapes on all TPU generations); otherwise
    # tile K in 128-aligned chunks with a zero-padded tail (contributes 0).
    single_bytes = 2 * 2 * (B + L0) * D
    if D <= tile_k or single_bytes <= vmem_budget:
        tk, nk = D, 1
        xb, wb = x, w1T
    else:
        tk = tile_k
        Dp = pl.cdiv(D, tk) * tk
        xb = jnp.pad(x, ((0, 0), (0, Dp - D)))
        wb = jnp.pad(w1T, ((0, 0), (0, Dp - D)))
        nk = Dp // tk

    n_tail = len(tail)
    n_out = tail[-1][0].shape[1] if n_tail else L0
    in_specs = [pl.BlockSpec((B, tk), lambda k: (0, k)),
                pl.BlockSpec((L0, tk), lambda k: (0, k)),
                pl.BlockSpec((1, L0), lambda k: (0, 0))]
    args = [xb, wb, b1.reshape(1, L0).astype(jnp.float32)]
    for (w, bb) in tail:
        in_specs.append(pl.BlockSpec(w.shape, lambda k: (0, 0)))
        in_specs.append(pl.BlockSpec((1, w.shape[1]), lambda k: (0, 0)))
        args.append(w.astype(jnp.float32))
        args.append(bb.reshape(1, -1).astype(jnp.float32))

    return pl.pallas_call(
        _make_head_kernel(n_tail, slope),
        out_shape=jax.ShapeDtypeStruct((B, n_out), jnp.float32),
        grid=(nk,),
        in_specs=in_specs,
        out_specs=pl.BlockSpec((B, n_out), lambda k: (0, 0)),
        scratch_shapes=[pltpu.VMEM((B, L0), jnp.float32)],
        compiler_params=pltpu.CompilerParams(dimension_semantics=("arbitrary",)),
    )(*args)


# ---------------------------------------------------------------------------
# Discriminator (parameter container + forward composed of the Pallas kernels)
# ---------------------------------------------------------------------------
class DiscriminatorPallas:
    def __init__(self, cv_channels=(1, 8), cv_kernel=(3, 5), cv_stride=2,
                 cv_padding=(1, 2), lin_num_neurons=(16,), n_classes=1,
                 input_shape=(127, 800), seed=0):
        self.cv_stride = cv_stride
        self.cv_padding = cv_padding
        keys = iter(jax.random.split(jax.random.PRNGKey(seed), 64))
        KH, KW = cv_kernel
        H, W = input_shape

        # Conv blocks: Conv2d + BatchNorm2d + LeakyReLU for each channel pair.
        self.cv_params = []
        for i in range(len(cv_channels) - 1):
            cin, cout = cv_channels[i], cv_channels[i + 1]
            w = jax.random.normal(next(keys), (cout, cin, KH, KW), jnp.float32) * 0.05
            bb = jax.random.normal(next(keys), (cout,), jnp.float32) * 0.05
            gamma = jnp.ones((cout,), jnp.float32)     # PyTorch BN init
            beta = jnp.zeros((cout,), jnp.float32)
            self.cv_params.append((w, bb, gamma, beta))
            H = (H + 2 * cv_padding[0] - KH) // cv_stride + 1
            W = (W + 2 * cv_padding[1] - KW) // cv_stride + 1

        # Flattened feature count (replaces the torch dummy-forward shape probe).
        D = cv_channels[-1] * H * W

        dims = [D] + list(lin_num_neurons)
        w0 = jax.random.normal(next(keys), (dims[0], dims[1]), jnp.float32) * 0.05
        b0 = jax.random.normal(next(keys), (dims[1],), jnp.float32) * 0.05
        # Perf: big first-Linear weight pre-cast to bf16 and pre-transposed to (L0, D)
        # once here so the forward never re-casts / re-pads it.
        self.w1T = jnp.asarray(w0.T, dtype=jnp.bfloat16)
        self.b1 = b0

        # Remaining tiny Linear layers (LeakyReLU between, Sigmoid after the last),
        # fused into the head kernel's finalize.
        self.tail = []
        for i in range(1, len(dims) - 1):
            w = jax.random.normal(next(keys), (dims[i], dims[i + 1]), jnp.float32) * 0.05
            bb = jax.random.normal(next(keys), (dims[i + 1],), jnp.float32) * 0.05
            self.tail.append((w, bb))
        w = jax.random.normal(next(keys), (dims[-1], n_classes), jnp.float32) * 0.05
        bb = jax.random.normal(next(keys), (n_classes,), jnp.float32) * 0.05
        self.tail.append((w, bb))

    def __call__(self, x):
        h = x
        for (w, bb, gamma, beta) in self.cv_params:
            h, pstats = conv2d_bias_stats(h, w, bb, stride=self.cv_stride,
                                          padding=self.cv_padding)
            h = bn_lrelu(h, pstats, gamma, beta)       # bf16, NCHW
        B = h.shape[0]
        h = h.reshape(B, -1)                           # == torch .view(B, -1) order
        return self_head if False else linear_head(h, self.w1T, self.b1, self.tail)


if __name__ == "__main__":
    # Small configuration consistent with the module: single conv block 1->8,
    # kernel (3,5), stride 2, padding (1,2); spatial 63x100 -> conv out 8x32x50
    # (D = 12800), lin_num_neurons=[16], 1 class.
    disc = DiscriminatorPallas(cv_channels=(1, 8), cv_kernel=(3, 5), cv_stride=2,
                               cv_padding=(1, 2), lin_num_neurons=(16,), n_classes=1,
                               input_shape=(63, 100), seed=0)

    x = jax.random.normal(jax.random.PRNGKey(0), (2, 1, 63, 100), jnp.float32)
    y = disc(x)
    jax.block_until_ready(y)
    assert y.shape == (2, 1), y.shape
    assert bool(jnp.all(jnp.isfinite(y)))
    assert bool(jnp.all((y >= 0.0) & (y <= 1.0)))
    print("KERNEL_OK")
</pallas_src>

<mosaic_0001>
module attributes {stable_mosaic.version = 11 : i64} {
  func.func @kernel(%arg0: i32, %arg1: memref<1x1x33x52xf32, #tpu.memory_space<vmem>>, %arg2: memref<1x1x33x52xf32, #tpu.memory_space<vmem>>, %arg3: memref<1x1x33x52xf32, #tpu.memory_space<vmem>>, %arg4: memref<1x1x33x52xf32, #tpu.memory_space<vmem>>, %arg5: memref<120xf32, #tpu.memory_space<smem>>, %arg6: memref<8xf32, #tpu.memory_space<smem>>, %arg7: memref<1x8x32x50xbf16, #tpu.memory_space<vmem>>, %arg8: memref<1x8x2xf32, #tpu.memory_space<vmem>>) attributes {dimension_semantics = [#tpu.dimension_semantics<parallel>], iteration_bounds = array<i64: 2>, scalar_prefetch = 0 : i64, scratch_operands = 0 : i64, tpu.core_type = #tpu.core_type<tc>, window_params = [{transform_indices = @transform_0, window_bounds = array<i64: 1, 1, 33, 52>}, {transform_indices = @transform_1, window_bounds = array<i64: 1, 1, 33, 52>}, {transform_indices = @transform_2, window_bounds = array<i64: 1, 1, 33, 52>}, {transform_indices = @transform_3, window_bounds = array<i64: 1, 1, 33, 52>}, {transform_indices = @transform_4, window_bounds = array<i64: 120>}, {transform_indices = @transform_5, window_bounds = array<i64: 8>}, {transform_indices = @transform_6, window_bounds = array<i64: 1, 8, 32, 50>}, {transform_indices = @transform_7, window_bounds = array<i64: 1, 8, 2>}]} {
    %c0 = arith.constant 0 : index
    %c0_0 = arith.constant 0 : index
    %c0_1 = arith.constant 0 : index
    %c0_2 = arith.constant 0 : index
    %0 = vector.load %arg1[%c0, %c0_0, %c0_1, %c0_2] : memref<1x1x33x52xf32, #tpu.memory_space<vmem>>, vector<1x1x32x50xf32>
    %1 = vector.shape_cast %0 : vector<1x1x32x50xf32> to vector<32x50xf32>
    %c0_3 = arith.constant 0 : index
    %2 = memref.load %arg5[%c0_3] : memref<120xf32, #tpu.memory_space<smem>>
    %3 = vector.broadcast %2 : f32 to vector<32x50xf32>
    %4 = arith.mulf %3, %1 : vector<32x50xf32>
    %c15 = arith.constant 15 : index
    %5 = memref.load %arg5[%c15] : memref<120xf32, #tpu.memory_space<smem>>
    %6 = vector.broadcast %5 : f32 to vector<32x50xf32>
    %7 = arith.mulf %6, %1 : vector<32x50xf32>
    %c30 = arith.constant 30 : index
    %8 = memref.load %arg5[%c30] : memref<120xf32, #tpu.memory_space<smem>>
    %9 = vector.broadcast %8 : f32 to vector<32x50xf32>
    %10 = arith.mulf %9, %1 : vector<32x50xf32>
    %c45 = arith.constant 45 : index
    %11 = memref.load %arg5[%c45] : memref<120xf32, #tpu.memory_space<smem>>
    %12 = vector.broadcast %11 : f32 to vector<32x50xf32>
    %13 = arith.mulf %12, %1 : vector<32x50xf32>
    %c60 = arith.constant 60 : index
    %14 = memref.load %arg5[%c60] : memref<120xf32, #tpu.memory_space<smem>>
    %15 = vector.broadcast %14 : f32 to vector<32x50xf32>
    %16 = arith.mulf %15, %1 : vector<32x50xf32>
    %c75 = arith.constant 75 : index
    %17 = memref.load %arg5[%c75] : memref<120xf32, #tpu.memory_space<smem>>
    %18 = vector.broadcast %17 : f32 to vector<32x50xf32>
    %19 = arith.mulf %18, %1 : vector<32x50xf32>
    %c90 = arith.constant 90 : index
    %20 = memref.load %arg5[%c90] : memref<120xf32, #tpu.memory_space<smem>>
    %21 = vector.broadcast %20 : f32 to vector<32x50xf32>
    %22 = arith.mulf %21, %1 : vector<32x50xf32>
    %c105 = arith.constant 105 : index
    %23 = memref.load %arg5[%c105] : memref<120xf32, #tpu.memory_space<smem>>
    %24 = vector.broadcast %23 : f32 to vector<32x50xf32>
    %25 = arith.mulf %24, %1 : vector<32x50xf32>
    %c0_4 = arith.constant 0 : index
    %c0_5 = arith.constant 0 : index
    %c0_6 = arith.constant 0 : index
    %c0_7 = arith.constant 0 : index
    %26 = vector.load %arg2[%c0_4, %c0_5, %c0_6, %c0_7] : memref<1x1x33x52xf32, #tpu.memory_space<vmem>>, vector<1x1x32x50xf32>
    %27 = vector.shape_cast %26 : vector<1x1x32x50xf32> to vector<32x50xf32>
    %c1 = arith.constant 1 : index
    %28 = memref.load %arg5[%c1] : memref<120xf32, #tpu.memory_space<smem>>
    %29 = vector.broadcast %28 : f32 to vector<32x50xf32>
    %30 = arith.mulf %29, %27 : vector<32x50xf32>
    %31 = arith.addf %4, %30 : vector<32x50xf32>
    %c16 = arith.constant 16 : index
    %32 = memref.load %arg5[%c16] : memref<120xf32, #tpu.memory_space<smem>>
    %33 = vector.broadcast %32 : f32 to vector<32x50xf32>
    %34 = arith.mulf %33, %27 : vector<32x50xf32>
    %35 = arith.addf %7, %34 : vector<32x50xf32>
    %c31 = arith.constant 31 : index
    %36 = memref.load %arg5[%c31] : memref<120xf32, #tpu.memory_space<smem>>
    %37 = vector.broadcast %36 : f32 to vector<32x50xf32>
    %38 = arith.mulf %37, %27 : vector<32x50xf32>
    %39 = arith.addf %10, %38 : vector<32x50xf32>
    %c46 = arith.constant 46 : index
    %40 = memref.load %arg5[%c46] : memref<120xf32, #tpu.memory_space<smem>>
    %41 = vector.broadcast %40 : f32 to vector<32x50xf32>
    %42 = arith.mulf %41, %27 : vector<32x50xf32>
    %43 = arith.addf %13, %42 : vector<32x50xf32>
    %c61 = arith.constant 61 : index
    %44 = memref.load %arg5[%c61] : memref<120xf32, #tpu.memory_space<smem>>
    %45 = vector.broadcast %44 : f32 to vector<32x50xf32>
    %46 = arith.mulf %45, %27 : vector<32x50xf32>
    %47 = arith.addf %16, %46 : vector<32x50xf32>
    %c76 = arith.constant 76 : index
    %48 = memref.load %arg5[%c76] : memref<120xf32, #tpu.memory_space<smem>>
    %49 = vector.broadcast %48 : f32 to vector<32x50xf32>
    %50 = arith.mulf %49, %27 : vector<32x50xf32>
    %51 = arith.addf %19, %50 : vector<32x50xf32>
    %c91 = arith.constant 91 : index
    %52 = memref.load %arg5[%c91] : memref<120xf32, #tpu.memory_space<smem>>
    %53 = vector.broadcast %52 : f32 to vector<32x50xf32>
    %54 = arith.mulf %53, %27 : vector<32x50xf32>
    %55 = arith.addf %22, %54 : vector<32x50xf32>
    %c106 = arith.constant 106 : index
    %56 = memref.load %arg5[%c106] : memref<120xf32, #tpu.memory_space<smem>>
    %57 = vector.broadcast %56 : f32 to vector<32x50xf32>
    %58 = arith.mulf %57, %27 : vector<32x50xf32>
    %59 = arith.addf %25, %58 : vector<32x50xf32>
    %c0_8 = arith.constant 0 : index
    %c0_9 = arith.constant 0 : index
    %c0_10 = arith.constant 0 : index
    %c1_11 = arith.constant 1 : index
    %60 = vector.load %arg1[%c0_8, %c0_9, %c0_10, %c1_11] : memref<1x1x33x52xf32, #tpu.memory_space<vmem>>, vector<1x1x32x50xf32>
    %61 = vector.shape_cast %60 : vector<1x1x32x50xf32> to vector<32x50xf32>
    %c2 = arith.constant 2 : index
    %62 = memref.load %arg5[%c2] : memref<120xf32, #tpu.memory_space<smem>>
    %63 = vector.broadcast %62 : f32 to vector<32x50xf32>
    %64 = arith.mulf %63, %61 : vector<32x50xf32>
    %65 = arith.addf %31, %64 : vector<32x50xf32>
    %c17 = arith.constant 17 : index
    %66 = memref.load %arg5[%c17] : memref<120xf32, #tpu.memory_space<smem>>
    %67 = vector.broadcast %66 : f32 to vector<32x50xf32>
    %68 = arith.mulf %67, %61 : vector<32x50xf32>
    %69 = arith.addf %35, %68 : vector<32x50xf32>
    %c32 = arith.constant 32 : index
    %70 = memref.load %arg5[%c32] : memref<120xf32, #tpu.memory_space<smem>>
    %71 = vector.broadcast %70 : f32 to vector<32x50xf32>
    %72 = arith.mulf %71, %61 : vector<32x50xf32>
    %73 = arith.addf %39, %72 : vector<32x50xf32>
    %c47 = arith.constant 47 : index
    %74 = memref.load %arg5[%c47] : memref<120xf32, #tpu.memory_space<smem>>
    %75 = vector.broadcast %74 : f32 to vector<32x50xf32>
    %76 = arith.mulf %75, %61 : vector<32x50xf32>
    %77 = arith.addf %43, %76 : vector<32x50xf32>
    %c62 = arith.constant 62 : index
    %78 = memref.load %arg5[%c62] : memref<120xf32, #tpu.memory_space<smem>>
    %79 = vector.broadcast %78 : f32 to vector<32x50xf32>
    %80 = arith.mulf %79, %61 : vector<32x50xf32>
    %81 = arith.addf %47, %80 : vector<32x50xf32>
    %c77 = arith.constant 77 : index
    %82 = memref.load %arg5[%c77] : memref<120xf32, #tpu.memory_space<smem>>
    %83 = vector.broadcast %82 : f32 to vector<32x50xf32>
    %84 = arith.mulf %83, %61 : vector<32x50xf32>
    %85 = arith.addf %51, %84 : vector<32x50xf32>
    %c92 = arith.constant 92 : index
    %86 = memref.load %arg5[%c92] : memref<120xf32, #tpu.memory_space<smem>>
    %87 = vector.broadcast %86 : f32 to vector<32x50xf32>
    %88 = arith.mulf %87, %61 : vector<32x50xf32>
    %89 = arith.addf %55, %88 : vector<32x50xf32>
    %c107 = arith.constant 107 : index
    %90 = memref.load %arg5[%c107] : memref<120xf32, #tpu.memory_space<smem>>
    %91 = vector.broadcast %90 : f32 to vector<32x50xf32>
    %92 = arith.mulf %91, %61 : vector<32x50xf32>
    %93 = arith.addf %59, %92 : vector<32x50xf32>
    %c0_12 = arith.constant 0 : index
    %c0_13 = arith.constant 0 : index
    %c0_14 = arith.constant 0 : index
    %c1_15 = arith.constant 1 : index
    %94 = vector.load %arg2[%c0_12, %c0_13, %c0_14, %c1_15] : memref<1x1x33x52xf32, #tpu.memory_space<vmem>>, vector<1x1x32x50xf32>
    %95 = vector.shape_cast %94 : vector<1x1x32x50xf32> to vector<32x50xf32>
    %c3 = arith.constant 3 : index
    %96 = memref.load %arg5[%c3] : memref<120xf32, #tpu.memory_space<smem>>
    %97 = vector.broadcast %96 : f32 to vector<32x50xf32>
    %98 = arith.mulf %97, %95 : vector<32x50xf32>
    %99 = arith.addf %65, %98 : vector<32x50xf32>
    %c18 = arith.constant 18 : index
    %100 = memref.load %arg5[%c18] : memref<120xf32, #tpu.memory_space<smem>>
    %101 = vector.broadcast %100 : f32 to vector<32x50xf32>
    %102 = arith.mulf %101, %95 : vector<32x50xf32>
    %103 = arith.addf %69, %102 : vector<32x50xf32>
    %c33 = arith.constant 33 : index
    %104 = memref.load %arg5[%c33] : memref<120xf32, #tpu.memory_space<smem>>
    %105 = vector.broadcast %104 : f32 to vector<32x50xf32>
    %106 = arith.mulf %105, %95 : vector<32x50xf32>
    %107 = arith.addf %73, %106 : vector<32x50xf32>
    %c48 = arith.constant 48 : index
    %108 = memref.load %arg5[%c48] : memref<120xf32, #tpu.memory_space<smem>>
    %109 = vector.broadcast %108 : f32 to vector<32x50xf32>
    %110 = arith.mulf %109, %95 : vector<32x50xf32>
    %111 = arith.addf %77, %110 : vector<32x50xf32>
    %c63 = arith.constant 63 : index
    %112 = memref.load %arg5[%c63] : memref<120xf32, #tpu.memory_space<smem>>
    %113 = vector.broadcast %112 : f32 to vector<32x50xf32>
    %114 = arith.mulf %113, %95 : vector<32x50xf32>
    %115 = arith.addf %81, %114 : vector<32x50xf32>
    %c78 = arith.constant 78 : index
    %116 = memref.load %arg5[%c78] : memref<120xf32, #tpu.memory_space<smem>>
    %117 = vector.broadcast %116 : f32 to vector<32x50xf32>
    %118 = arith.mulf %117, %95 : vector<32x50xf32>
    %119 = arith.addf %85, %118 : vector<32x50xf32>
    %c93 = arith.constant 93 : index
    %120 = memref.load %arg5[%c93] : memref<120xf32, #tpu.memory_space<smem>>
    %121 = vector.broadcast %120 : f32 to vector<32x50xf32>
    %122 = arith.mulf %121, %95 : vector<32x50xf32>
    %123 = arith.addf %89, %122 : vector<32x50xf32>
    %c108 = arith.constant 108 : index
    %124 = memref.load %arg5[%c108] : memref<120xf32, #tpu.memory_space<smem>>
    %125 = vector.broadcast %124 : f32 to vector<32x50xf32>
    %126 = arith.mulf %125, %95 : vector<32x50xf32>
    %127 = arith.addf %93, %126 : vector<32x50xf32>
    %c0_16 = arith.constant 0 : index
    %c0_17 = arith.constant 0 : index
    %c0_18 = arith.constant 0 : index
    %c2_19 = arith.constant 2 : index
    %128 = vector.load %arg1[%c0_16, %c0_17, %c0_18, %c2_19] : memref<1x1x33x52xf32, #tpu.memory_space<vmem>>, vector<1x1x32x50xf32>
    %129 = vector.shape_cast %128 : vector<1x1x32x50xf32> to vector<32x50xf32>
    %c4 = arith.constant 4 : index
    %130 = memref.load %arg5[%c4] : memref<120xf32, #tpu.memory_space<smem>>
    %131 = vector.broadcast %130 : f32 to vector<32x50xf32>
    %132 = arith.mulf %131, %129 : vector<32x50xf32>
    %133 = arith.addf %99, %132 : vector<32x50xf32>
    %c19 = arith.constant 19 : index
    %134 = memref.load %arg5[%c19] : memref<120xf32, #tpu.memory_space<smem>>
    %135 = vector.broadcast %134 : f32 to vector<32x50xf32>
    %136 = arith.mulf %135, %129 : vector<32x50xf32>
    %137 = arith.addf %103, %136 : vector<32x50xf32>
    %c34 = arith.constant 34 : index
    %138 = memref.load %arg5[%c34] : memref<120xf32, #tpu.memory_space<smem>>
    %139 = vector.broadcast %138 : f32 to vector<32x50xf32>
    %140 = arith.mulf %139, %129 : vector<32x50xf32>
    %141 = arith.addf %107, %140 : vector<32x50xf32>
    %c49 = arith.constant 49 : index
    %142 = memref.load %arg5[%c49] : memref<120xf32, #tpu.memory_space<smem>>
    %143 = vector.broadcast %142 : f32 to vector<32x50xf32>
    %144 = arith.mulf %143, %129 : vector<32x50xf32>
    %145 = arith.addf %111, %144 : vector<32x50xf32>
    %c64 = arith.constant 64 : index
    %146 = memref.load %arg5[%c64] : memref<120xf32, #tpu.memory_space<smem>>
    %147 = vector.broadcast %146 : f32 to vector<32x50xf32>
    %148 = arith.mulf %147, %129 : vector<32x50xf32>
    %149 = arith.addf %115, %148 : vector<32x50xf32>
    %c79 = arith.constant 79 : index
    %150 = memref.load %arg5[%c79] : memref<120xf32, #tpu.memory_space<smem>>
    %151 = vector.broadcast %150 : f32 to vector<32x50xf32>
    %152 = arith.mulf %151, %129 : vector<32x50xf32>
    %153 = arith.addf %119, %152 : vector<32x50xf32>
    %c94 = arith.constant 94 : index
    %154 = memref.load %arg5[%c94] : memref<120xf32, #tpu.memory_space<smem>>
    %155 = vector.broadcast %154 : f32 to vector<32x50xf32>
    %156 = arith.mulf %155, %129 : vector<32x50xf32>
    %157 = arith.addf %123, %156 : vector<32x50xf32>
    %c109 = arith.constant 109 : index
    %158 = memref.load %arg5[%c109] : memref<120xf32, #tpu.memory_space<smem>>
    %159 = vector.broadcast %158 : f32 to vector<32x50xf32>
    %160 = arith.mulf %159, %129 : vector<32x50xf32>
    %161 = arith.addf %127, %160 : vector<32x50xf32>
    %c0_20 = arith.constant 0 : index
    %c0_21 = arith.constant 0 : index
    %c0_22 = arith.constant 0 : index
    %c0_23 = arith.constant 0 : index
    %162 = vector.load %arg3[%c0_20, %c0_21, %c0_22, %c0_23] : memref<1x1x33x52xf32, #tpu.memory_space<vmem>>, vector<1x1x32x50xf32>
    %163 = vector.shape_cast %162 : vector<1x1x32x50xf32> to vector<32x50xf32>
    %c5 = arith.constant 5 : index
    %164 = memref.load %arg5[%c5] : memref<120xf32, #tpu.memory_space<smem>>
    %165 = vector.broadcast %164 : f32 to vector<32x50xf32>
    %166 = arith.mulf %165, %163 : vector<32x50xf32>
    %167 = arith.addf %133, %166 : vector<32x50xf32>
    %c20 = arith.constant 20 : index
    %168 = memref.load %arg5[%c20] : memref<120xf32, #tpu.memory_space<smem>>
    %169 = vector.broadcast %168 : f32 to vector<32x50xf32>
    %170 = arith.mulf %169, %163 : vector<32x50xf32>
    %171 = arith.addf %137, %170 : vector<32x50xf32>
    %c35 = arith.constant 35 : index
    %172 = memref.load %arg5[%c35] : memref<120xf32, #tpu.memory_space<smem>>
    %173 = vector.broadcast %172 : f32 to vector<32x50xf32>
    %174 = arith.mulf %173, %163 : vector<32x50xf32>
    %175 = arith.addf %141, %174 : vector<32x50xf32>
    %c50 = arith.constant 50 : index
    %176 = memref.load %arg5[%c50] : memref<120xf32, #tpu.memory_space<smem>>
    %177 = vector.broadcast %176 : f32 to vector<32x50xf32>
    %178 = arith.mulf %177, %163 : vector<32x50xf32>
    %179 = arith.addf %145, %178 : vector<32x50xf32>
    %c65 = arith.constant 65 : index
    %180 = memref.load %arg5[%c65] : memref<120xf32, #tpu.memory_space<smem>>
    %181 = vector.broadcast %180 : f32 to vector<32x50xf32>
    %182 = arith.mulf %181, %163 : vector<32x50xf32>
    %183 = arith.addf %149, %182 : vector<32x50xf32>
    %c80 = arith.constant 80 : index
    %184 = memref.load %arg5[%c80] : memref<120xf32, #tpu.memory_space<smem>>
    %185 = vector.broadcast %184 : f32 to vector<32x50xf32>
    %186 = arith.mulf %185, %163 : vector<32x50xf32>
    %187 = arith.addf %153, %186 : vector<32x50xf32>
    %c95 = arith.constant 95 : index
    %188 = memref.load %arg5[%c95] : memref<120xf32, #tpu.memory_space<smem>>
    %189 = vector.broadcast %188 : f32 to vector<32x50xf32>
    %190 = arith.mulf %189, %163 : vector<32x50xf32>
    %191 = arith.addf %157, %190 : vector<32x50xf32>
    %c110 = arith.constant 110 : index
    %192 = memref.load %arg5[%c110] : memref<120xf32, #tpu.memory_space<smem>>
    %193 = vector.broadcast %192 : f32 to vector<32x50xf32>
    %194 = arith.mulf %193, %163 : vector<32x50xf32>
    %195 = arith.addf %161, %194 : vector<32x50xf32>
    %c0_24 = arith.constant 0 : index
    %c0_25 = arith.constant 0 : index
    %c0_26 = arith.constant 0 : index
    %c0_27 = arith.constant 0 : index
    %196 = vector.load %arg4[%c0_24, %c0_25, %c0_26, %c0_27] : memref<1x1x33x52xf32, #tpu.memory_space<vmem>>, vector<1x1x32x50xf32>
    %197 = vector.shape_cast %196 : vector<1x1x32x50xf32> to vector<32x50xf32>
    %c6 = arith.constant 6 : index
    %198 = memref.load %arg5[%c6] : memref<120xf32, #tpu.memory_space<smem>>
    %199 = vector.broadcast %198 : f32 to vector<32x50xf32>
    %200 = arith.mulf %199, %197 : vector<32x50xf32>
    %201 = arith.addf %167, %200 : vector<32x50xf32>
    %c21 = arith.constant 21 : index
    %202 = memref.load %arg5[%c21] : memref<120xf32, #tpu.memory_space<smem>>
    %203 = vector.broadcast %202 : f32 to vector<32x50xf32>
    %204 = arith.mulf %203, %197 : vector<32x50xf32>
    %205 = arith.addf %171, %204 : vector<32x50xf32>
    %c36 = arith.constant 36 : index
    %206 = memref.load %arg5[%c36] : memref<120xf32, #tpu.memory_space<smem>>
    %207 = vector.broadcast %206 : f32 to vector<32x50xf32>
    %208 = arith.mulf %207, %197 : vector<32x50xf32>
    %209 = arith.addf %175, %208 : vector<32x50xf32>
    %c51 = arith.constant 51 : index
    %210 = memref.load %arg5[%c51] : memref<120xf32, #tpu.memory_space<smem>>
    %211 = vector.broadcast %210 : f32 to vector<32x50xf32>
    %212 = arith.mulf %211, %197 : vector<32x50xf32>
    %213 = arith.addf %179, %212 : vector<32x50xf32>
    %c66 = arith.constant 66 : index
    %214 = memref.load %arg5[%c66] : memref<120xf32, #tpu.memory_space<smem>>
    %215 = vector.broadcast %214 : f32 to vector<32x50xf32>
    %216 = arith.mulf %215, %197 : vector<32x50xf32>
    %217 = arith.addf %183, %216 : vector<32x50xf32>
    %c81 = arith.constant 81 : index
    %218 = memref.load %arg5[%c81] : memref<120xf32, #tpu.memory_space<smem>>
    %219 = vector.broadcast %218 : f32 to vector<32x50xf32>
    %220 = arith.mulf %219, %197 : vector<32x50xf32>
    %221 = arith.addf %187, %220 : vector<32x50xf32>
    %c96 = arith.constant 96 : index
    %222 = memref.load %arg5[%c96] : memref<120xf32, #tpu.memory_space<smem>>
    %223 = vector.broadcast %222 : f32 to vector<32x50xf32>
    %224 = arith.mulf %223, %197 : vector<32x50xf32>
    %225 = arith.addf %191, %224 : vector<32x50xf32>
    %c111 = arith.constant 111 : index
    %226 = memref.load %arg5[%c111] : memref<120xf32, #tpu.memory_space<smem>>
    %227 = vector.broadcast %226 : f32 to vector<32x50xf32>
    %228 = arith.mulf %227, %197 : vector<32x50xf32>
    %229 = arith.addf %195, %228 : vector<32x50xf32>
    %c0_28 = arith.constant 0 : index
    %c0_29 = arith.constant 0 : index
    %c0_30 = arith.constant 0 : index
    %c1_31 = arith.constant 1 : index
    %230 = vector.load %arg3[%c0_28, %c0_29, %c0_30, %c1_31] : memref<1x1x33x52xf32, #tpu.memory_space<vmem>>, vector<1x1x32x50xf32>
    %231 = vector.shape_cast %230 : vector<1x1x32x50xf32> to vector<32x50xf32>
    %c7 = arith.constant 7 : index
    %232 = memref.load %arg5[%c7] : memref<120xf32, #tpu.memory_space<smem>>
    %233 = vector.broadcast %232 : f32 to vector<32x50xf32>
    %234 = arith.mulf %233, %231 : vector<32x50xf32>
    %235 = arith.addf %201, %234 : vector<32x50xf32>
    %c22 = arith.constant 22 : index
    %236 = memref.load %arg5[%c22] : memref<120xf32, #tpu.memory_space<smem>>
    %237 = vector.broadcast %236 : f32 to vector<32x50xf32>
    %238 = arith.mulf %237, %231 : vector<32x50xf32>
    %239 = arith.addf %205, %238 : vector<32x50xf32>
    %c37 = arith.constant 37 : index
    %240 = memref.load %arg5[%c37] : memref<120xf32, #tpu.memory_space<smem>>
    %241 = vector.broadcast %240 : f32 to vector<32x50xf32>
    %242 = arith.mulf %241, %231 : vector<32x50xf32>
    %243 = arith.addf %209, %242 : vector<32x50xf32>
    %c52 = arith.constant 52 : index
    %244 = memref.load %arg5[%c52] : memref<120xf32, #tpu.memory_space<smem>>
    %245 = vector.broadcast %244 : f32 to vector<32x50xf32>
    %246 = arith.mulf %245, %231 : vector<32x50xf32>
    %247 = arith.addf %213, %246 : vector<32x50xf32>
    %c67 = arith.constant 67 : index
    %248 = memref.load %arg5[%c67] : memref<120xf32, #tpu.memory_space<smem>>
    %249 = vector.broadcast %248 : f32 to vector<32x50xf32>
    %250 = arith.mulf %249, %231 : vector<32x50xf32>
    %251 = arith.addf %217, %250 : vector<32x50xf32>
    %c82 = arith.constant 82 : index
    %252 = memref.load %arg5[%c82] : memref<120xf32, #tpu.memory_space<smem>>
    %253 = vector.broadcast %252 : f32 to vector<32x50xf32>
    %254 = arith.mulf %253, %231 : vector<32x50xf32>
    %255 = arith.addf %221, %254 : vector<32x50xf32>
    %c97 = arith.constant 97 : index
    %256 = memref.load %arg5[%c97] : memref<120xf32, #tpu.memory_space<smem>>
    %257 = vector.broadcast %256 : f32 to vector<32x50xf32>
    %258 = arith.mulf %257, %231 : vector<32x50xf32>
    %259 = arith.addf %225, %258 : vector<32x50xf32>
    %c112 = arith.constant 112 : index
    %260 = memref.load %arg5[%c112] : memref<120xf32, #tpu.memory_space<smem>>
    %261 = vector.broadcast %260 : f32 to vector<32x50xf32>
    %262 = arith.mulf %261, %231 : vector<32x50xf32>
    %263 = arith.addf %229, %262 : vector<32x50xf32>
    %c0_32 = arith.constant 0 : index
    %c0_33 = arith.constant 0 : index
    %c0_34 = arith.constant 0 : index
    %c1_35 = arith.constant 1 : index
    %264 = vector.load %arg4[%c0_32, %c0_33, %c0_34, %c1_35] : memref<1x1x33x52xf32, #tpu.memory_space<vmem>>, vector<1x1x32x50xf32>
    %265 = vector.shape_cast %264 : vector<1x1x32x50xf32> to vector<32x50xf32>
    %c8 = arith.constant 8 : index
    %266 = memref.load %arg5[%c8] : memref<120xf32, #tpu.memory_space<smem>>
    %267 = vector.broadcast %266 : f32 to vector<32x50xf32>
    %268 = arith.mulf %267, %265 : vector<32x50xf32>
    %269 = arith.addf %235, %268 : vector<32x50xf32>
    %c23 = arith.constant 23 : index
    %270 = memref.load %arg5[%c23] : memref<120xf32, #tpu.memory_space<smem>>
    %271 = vector.broadcast %270 : f32 to vector<32x50xf32>
    %272 = arith.mulf %271, %265 : vector<32x50xf32>
    %273 = arith.addf %239, %272 : vector<32x50xf32>
    %c38 = arith.constant 38 : index
    %274 = memref.load %arg5[%c38] : memref<120xf32, #tpu.memory_space<smem>>
    %275 = vector.broadcast %274 : f32 to vector<32x50xf32>
    %276 = arith.mulf %275, %265 : vector<32x50xf32>
    %277 = arith.addf %243, %276 : vector<32x50xf32>
    %c53 = arith.constant 53 : index
    %278 = memref.load %arg5[%c53] : memref<120xf32, #tpu.memory_space<smem>>
    %279 = vector.broadcast %278 : f32 to vector<32x50xf32>
    %280 = arith.mulf %279, %265 : vector<32x50xf32>
    %281 = arith.addf %247, %280 : vector<32x50xf32>
    %c68 = arith.constant 68 : index
    %282 = memref.load %arg5[%c68] : memref<120xf32, #tpu.memory_space<smem>>
    %283 = vector.broadcast %282 : f32 to vector<32x50xf32>
    %284 = arith.mulf %283, %265 : vector<32x50xf32>
    %285 = arith.addf %251, %284 : vector<32x50xf32>
    %c83 = arith.constant 83 : index
    %286 = memref.load %arg5[%c83] : memref<120xf32, #tpu.memory_space<smem>>
    %287 = vector.broadcast %286 : f32 to vector<32x50xf32>
    %288 = arith.mulf %287, %265 : vector<32x50xf32>
    %289 = arith.addf %255, %288 : vector<32x50xf32>
    %c98 = arith.constant 98 : index
    %290 = memref.load %arg5[%c98] : memref<120xf32, #tpu.memory_space<smem>>
    %291 = vector.broadcast %290 : f32 to vector<32x50xf32>
    %292 = arith.mulf %291, %265 : vector<32x50xf32>
    %293 = arith.addf %259, %292 : vector<32x50xf32>
    %c113 = arith.constant 113 : index
    %294 = memref.load %arg5[%c113] : memref<120xf32, #tpu.memory_space<smem>>
    %295 = vector.broadcast %294 : f32 to vector<32x50xf32>
    %296 = arith.mulf %295, %265 : vector<32x50xf32>
    %297 = arith.addf %263, %296 : vector<32x50xf32>
    %c0_36 = arith.constant 0 : index
    %c0_37 = arith.constant 0 : index
    %c0_38 = arith.constant 0 : index
    %c2_39 = arith.constant 2 : index
    %298 = vector.load %arg3[%c0_36, %c0_37, %c0_38, %c2_39] : memref<1x1x33x52xf32, #tpu.memory_space<vmem>>, vector<1x1x32x50xf32>
    %299 = vector.shape_cast %298 : vector<1x1x32x50xf32> to vector<32x50xf32>
    %c9 = arith.constant 9 : index
    %300 = memref.load %arg5[%c9] : memref<120xf32, #tpu.memory_space<smem>>
    %301 = vector.broadcast %300 : f32 to vector<32x50xf32>
    %302 = arith.mulf %301, %299 : vector<32x50xf32>
    %303 = arith.addf %269, %302 : vector<32x50xf32>
    %c24 = arith.constant 24 : index
    %304 = memref.load %arg5[%c24] : memref<120xf32, #tpu.memory_space<smem>>
    %305 = vector.broadcast %304 : f32 to vector<32x50xf32>
    %306 = arith.mulf %305, %299 : vector<32x50xf32>
    %307 = arith.addf %273, %306 : vector<32x50xf32>
    %c39 = arith.constant 39 : index
    %308 = memref.load %arg5[%c39] : memref<120xf32, #tpu.memory_space<smem>>
    %309 = vector.broadcast %308 : f32 to vector<32x50xf32>
    %310 = arith.mulf %309, %299 : vector<32x50xf32>
    %311 = arith.addf %277, %310 : vector<32x50xf32>
    %c54 = arith.constant 54 : index
    %312 = memref.load %arg5[%c54] : memref<120xf32, #tpu.memory_space<smem>>
    %313 = vector.broadcast %312 : f32 to vector<32x50xf32>
    %314 = arith.mulf %313, %299 : vector<32x50xf32>
    %315 = arith.addf %281, %314 : vector<32x50xf32>
    %c69 = arith.constant 69 : index
    %316 = memref.load %arg5[%c69] : memref<120xf32, #tpu.memory_space<smem>>
    %317 = vector.broadcast %316 : f32 to vector<32x50xf32>
    %318 = arith.mulf %317, %299 : vector<32x50xf32>
    %319 = arith.addf %285, %318 : vector<32x50xf32>
    %c84 = arith.constant 84 : index
    %320 = memref.load %arg5[%c84] : memref<120xf32, #tpu.memory_space<smem>>
    %321 = vector.broadcast %320 : f32 to vector<32x50xf32>
    %322 = arith.mulf %321, %299 : vector<32x50xf32>
    %323 = arith.addf %289, %322 : vector<32x50xf32>
    %c99 = arith.constant 99 : index
    %324 = memref.load %arg5[%c99] : memref<120xf32, #tpu.memory_space<smem>>
    %325 = vector.broadcast %324 : f32 to vector<32x50xf32>
    %326 = arith.mulf %325, %299 : vector<32x50xf32>
    %327 = arith.addf %293, %326 : vector<32x50xf32>
    %c114 = arith.constant 114 : index
    %328 = memref.load %arg5[%c114] : memref<120xf32, #tpu.memory_space<smem>>
    %329 = vector.broadcast %328 : f32 to vector<32x50xf32>
    %330 = arith.mulf %329, %299 : vector<32x50xf32>
    %331 = arith.addf %297, %330 : vector<32x50xf32>
    %c0_40 = arith.constant 0 : index
    %c0_41 = arith.constant 0 : index
    %c1_42 = arith.constant 1 : index
    %c0_43 = arith.constant 0 : index
    %332 = vector.load %arg1[%c0_40, %c0_41, %c1_42, %c0_43] : memref<1x1x33x52xf32, #tpu.memory_space<vmem>>, vector<1x1x32x50xf32>
    %333 = vector.shape_cast %332 : vector<1x1x32x50xf32> to vector<32x50xf32>
    %c10 = arith.constant 10 : index
    %334 = memref.load %arg5[%c10] : memref<120xf32, #tpu.memory_space<smem>>
    %335 = vector.broadcast %334 : f32 to vector<32x50xf32>
    %336 = arith.mulf %335, %333 : vector<32x50xf32>
    %337 = arith.addf %303, %336 : vector<32x50xf32>
    %c25 = arith.constant 25 : index
    %338 = memref.load %arg5[%c25] : memref<120xf32, #tpu.memory_space<smem>>
    %339 = vector.broadcast %338 : f32 to vector<32x50xf32>
    %340 = arith.mulf %339, %333 : vector<32x50xf32>
    %341 = arith.addf %307, %340 : vector<32x50xf32>
    %c40 = arith.constant 40 : index
    %342 = memref.load %arg5[%c40] : memref<120xf32, #tpu.memory_space<smem>>
    %343 = vector.broadcast %342 : f32 to vector<32x50xf32>
    %344 = arith.mulf %343, %333 : vector<32x50xf32>
    %345 = arith.addf %311, %344 : vector<32x50xf32>
    %c55 = arith.constant 55 : index
    %346 = memref.load %arg5[%c55] : memref<120xf32, #tpu.memory_space<smem>>
    %347 = vector.broadcast %346 : f32 to vector<32x50xf32>
    %348 = arith.mulf %347, %333 : vector<32x50xf32>
    %349 = arith.addf %315, %348 : vector<32x50xf32>
    %c70 = arith.constant 70 : index
    %350 = memref.load %arg5[%c70] : memref<120xf32, #tpu.memory_space<smem>>
    %351 = vector.broadcast %350 : f32 to vector<32x50xf32>
    %352 = arith.mulf %351, %333 : vector<32x50xf32>
    %353 = arith.addf %319, %352 : vector<32x50xf32>
    %c85 = arith.constant 85 : index
    %354 = memref.load %arg5[%c85] : memref<120xf32, #tpu.memory_space<smem>>
    %355 = vector.broadcast %354 : f32 to vector<32x50xf32>
    %356 = arith.mulf %355, %333 : vector<32x50xf32>
    %357 = arith.addf %323, %356 : vector<32x50xf32>
    %c100 = arith.constant 100 : index
    %358 = memref.load %arg5[%c100] : memref<120xf32, #tpu.memory_space<smem>>
    %359 = vector.broadcast %358 : f32 to vector<32x50xf32>
    %360 = arith.mulf %359, %333 : vector<32x50xf32>
    %361 = arith.addf %327, %360 : vector<32x50xf32>
    %c115 = arith.constant 115 : index
    %362 = memref.load %arg5[%c115] : memref<120xf32, #tpu.memory_space<smem>>
    %363 = vector.broadcast %362 : f32 to vector<32x50xf32>
    %364 = arith.mulf %363, %333 : vector<32x50xf32>
    %365 = arith.addf %331, %364 : vector<32x50xf32>
    %c0_44 = arith.constant 0 : index
    %c0_45 = arith.constant 0 : index
    %c1_46 = arith.constant 1 : index
    %c0_47 = arith.constant 0 : index
    %366 = vector.load %arg2[%c0_44, %c0_45, %c1_46, %c0_47] : memref<1x1x33x52xf32, #tpu.memory_space<vmem>>, vector<1x1x32x50xf32>
    %367 = vector.shape_cast %366 : vector<1x1x32x50xf32> to vector<32x50xf32>
    %c11 = arith.constant 11 : index
    %368 = memref.load %arg5[%c11] : memref<120xf32, #tpu.memory_space<smem>>
    %369 = vector.broadcast %368 : f32 to vector<32x50xf32>
    %370 = arith.mulf %369, %367 : vector<32x50xf32>
    %371 = arith.addf %337, %370 : vector<32x50xf32>
    %c26 = arith.constant 26 : index
    %372 = memref.load %arg5[%c26] : memref<120xf32, #tpu.memory_space<smem>>
    %373 = vector.broadcast %372 : f32 to vector<32x50xf32>
    %374 = arith.mulf %373, %367 : vector<32x50xf32>
    %375 = arith.addf %341, %374 : vector<32x50xf32>
    %c41 = arith.constant 41 : index
    %376 = memref.load %arg5[%c41] : memref<120xf32, #tpu.memory_space<smem>>
    %377 = vector.broadcast %376 : f32 to vector<32x50xf32>
    %378 = arith.mulf %377, %367 : vector<32x50xf32>
    %379 = arith.addf %345, %378 : vector<32x50xf32>
    %c56 = arith.constant 56 : index
    %380 = memref.load %arg5[%c56] : memref<120xf32, #tpu.memory_space<smem>>
    %381 = vector.broadcast %380 : f32 to vector<32x50xf32>
    %382 = arith.mulf %381, %367 : vector<32x50xf32>
    %383 = arith.addf %349, %382 : vector<32x50xf32>
    %c71 = arith.constant 71 : index
    %384 = memref.load %arg5[%c71] : memref<120xf32, #tpu.memory_space<smem>>
    %385 = vector.broadcast %384 : f32 to vector<32x50xf32>
    %386 = arith.mulf %385, %367 : vector<32x50xf32>
    %387 = arith.addf %353, %386 : vector<32x50xf32>
    %c86 = arith.constant 86 : index
    %388 = memref.load %arg5[%c86] : memref<120xf32, #tpu.memory_space<smem>>
    %389 = vector.broadcast %388 : f32 to vector<32x50xf32>
    %390 = arith.mulf %389, %367 : vector<32x50xf32>
    %391 = arith.addf %357, %390 : vector<32x50xf32>
    %c101 = arith.constant 101 : index
    %392 = memref.load %arg5[%c101] : memref<120xf32, #tpu.memory_space<smem>>
    %393 = vector.broadcast %392 : f32 to vector<32x50xf32>
    %394 = arith.mulf %393, %367 : vector<32x50xf32>
    %395 = arith.addf %361, %394 : vector<32x50xf32>
    %c116 = arith.constant 116 : index
    %396 = memref.load %arg5[%c116] : memref<120xf32, #tpu.memory_space<smem>>
    %397 = vector.broadcast %396 : f32 to vector<32x50xf32>
    %398 = arith.mulf %397, %367 : vector<32x50xf32>
    %399 = arith.addf %365, %398 : vector<32x50xf32>
    %c0_48 = arith.constant 0 : index
    %c0_49 = arith.constant 0 : index
    %c1_50 = arith.constant 1 : index
    %c1_51 = arith.constant 1 : index
    %400 = vector.load %arg1[%c0_48, %c0_49, %c1_50, %c1_51] : memref<1x1x33x52xf32, #tpu.memory_space<vmem>>, vector<1x1x32x50xf32>
    %401 = vector.shape_cast %400 : vector<1x1x32x50xf32> to vector<32x50xf32>
    %c12 = arith.constant 12 : index
    %402 = memref.load %arg5[%c12] : memref<120xf32, #tpu.memory_space<smem>>
    %403 = vector.broadcast %402 : f32 to vector<32x50xf32>
    %404 = arith.mulf %403, %401 : vector<32x50xf32>
    %405 = arith.addf %371, %404 : vector<32x50xf32>
    %c27 = arith.constant 27 : index
    %406 = memref.load %arg5[%c27] : memref<120xf32, #tpu.memory_space<smem>>
    %407 = vector.broadcast %406 : f32 to vector<32x50xf32>
    %408 = arith.mulf %407, %401 : vector<32x50xf32>
    %409 = arith.addf %375, %408 : vector<32x50xf32>
    %c42 = arith.constant 42 : index
    %410 = memref.load %arg5[%c42] : memref<120xf32, #tpu.memory_space<smem>>
    %411 = vector.broadcast %410 : f32 to vector<32x50xf32>
    %412 = arith.mulf %411, %401 : vector<32x50xf32>
    %413 = arith.addf %379, %412 : vector<32x50xf32>
    %c57 = arith.constant 57 : index
    %414 = memref.load %arg5[%c57] : memref<120xf32, #tpu.memory_space<smem>>
    %415 = vector.broadcast %414 : f32 to vector<32x50xf32>
    %416 = arith.mulf %415, %401 : vector<32x50xf32>
    %417 = arith.addf %383, %416 : vector<32x50xf32>
    %c72 = arith.constant 72 : index
    %418 = memref.load %arg5[%c72] : memref<120xf32, #tpu.memory_space<smem>>
    %419 = vector.broadcast %418 : f32 to vector<32x50xf32>
    %420 = arith.mulf %419, %401 : vector<32x50xf32>
    %421 = arith.addf %387, %420 : vector<32x50xf32>
    %c87 = arith.constant 87 : index
    %422 = memref.load %arg5[%c87] : memref<120xf32, #tpu.memory_space<smem>>
    %423 = vector.broadcast %422 : f32 to vector<32x50xf32>
    %424 = arith.mulf %423, %401 : vector<32x50xf32>
    %425 = arith.addf %391, %424 : vector<32x50xf32>
    %c102 = arith.constant 102 : index
    %426 = memref.load %arg5[%c102] : memref<120xf32, #tpu.memory_space<smem>>
    %427 = vector.broadcast %426 : f32 to vector<32x50xf32>
    %428 = arith.mulf %427, %401 : vector<32x50xf32>
    %429 = arith.addf %395, %428 : vector<32x50xf32>
    %c117 = arith.constant 117 : index
    %430 = memref.load %arg5[%c117] : memref<120xf32, #tpu.memory_space<smem>>
    %431 = vector.broadcast %430 : f32 to vector<32x50xf32>
    %432 = arith.mulf %431, %401 : vector<32x50xf32>
    %433 = arith.addf %399, %432 : vector<32x50xf32>
    %c0_52 = arith.constant 0 : index
    %c0_53 = arith.constant 0 : index
    %c1_54 = arith.constant 1 : index
    %c1_55 = arith.constant 1 : index
    %434 = vector.load %arg2[%c0_52, %c0_53, %c1_54, %c1_55] : memref<1x1x33x52xf32, #tpu.memory_space<vmem>>, vector<1x1x32x50xf32>
    %435 = vector.shape_cast %434 : vector<1x1x32x50xf32> to vector<32x50xf32>
    %c13 = arith.constant 13 : index
    %436 = memref.load %arg5[%c13] : memref<120xf32, #tpu.memory_space<smem>>
    %437 = vector.broadcast %436 : f32 to vector<32x50xf32>
    %438 = arith.mulf %437, %435 : vector<32x50xf32>
    %439 = arith.addf %405, %438 : vector<32x50xf32>
    %c28 = arith.constant 28 : index
    %440 = memref.load %arg5[%c28] : memref<120xf32, #tpu.memory_space<smem>>
    %441 = vector.broadcast %440 : f32 to vector<32x50xf32>
    %442 = arith.mulf %441, %435 : vector<32x50xf32>
    %443 = arith.addf %409, %442 : vector<32x50xf32>
    %c43 = arith.constant 43 : index
    %444 = memref.load %arg5[%c43] : memref<120xf32, #tpu.memory_space<smem>>
    %445 = vector.broadcast %444 : f32 to vector<32x50xf32>
    %446 = arith.mulf %445, %435 : vector<32x50xf32>
    %447 = arith.addf %413, %446 : vector<32x50xf32>
    %c58 = arith.constant 58 : index
    %448 = memref.load %arg5[%c58] : memref<120xf32, #tpu.memory_space<smem>>
    %449 = vector.broadcast %448 : f32 to vector<32x50xf32>
    %450 = arith.mulf %449, %435 : vector<32x50xf32>
    %451 = arith.addf %417, %450 : vector<32x50xf32>
    %c73 = arith.constant 73 : index
    %452 = memref.load %arg5[%c73] : memref<120xf32, #tpu.memory_space<smem>>
    %453 = vector.broadcast %452 : f32 to vector<32x50xf32>
    %454 = arith.mulf %453, %435 : vector<32x50xf32>
    %455 = arith.addf %421, %454 : vector<32x50xf32>
    %c88 = arith.constant 88 : index
    %456 = memref.load %arg5[%c88] : memref<120xf32, #tpu.memory_space<smem>>
    %457 = vector.broadcast %456 : f32 to vector<32x50xf32>
    %458 = arith.mulf %457, %435 : vector<32x50xf32>
    %459 = arith.addf %425, %458 : vector<32x50xf32>
    %c103 = arith.constant 103 : index
    %460 = memref.load %arg5[%c103] : memref<120xf32, #tpu.memory_space<smem>>
    %461 = vector.broadcast %460 : f32 to vector<32x50xf32>
    %462 = arith.mulf %461, %435 : vector<32x50xf32>
    %463 = arith.addf %429, %462 : vector<32x50xf32>
    %c118 = arith.constant 118 : index
    %464 = memref.load %arg5[%c118] : memref<120xf32, #tpu.memory_space<smem>>
    %465 = vector.broadcast %464 : f32 to vector<32x50xf32>
    %466 = arith.mulf %465, %435 : vector<32x50xf32>
    %467 = arith.addf %433, %466 : vector<32x50xf32>
    %c0_56 = arith.constant 0 : index
    %c0_57 = arith.constant 0 : index
    %c1_58 = arith.constant 1 : index
    %c2_59 = arith.constant 2 : index
    %468 = vector.load %arg1[%c0_56, %c0_57, %c1_58, %c2_59] : memref<1x1x33x52xf32, #tpu.memory_space<vmem>>, vector<1x1x32x50xf32>
    %469 = vector.shape_cast %468 : vector<1x1x32x50xf32> to vector<32x50xf32>
    %c14 = arith.constant 14 : index
    %470 = memref.load %arg5[%c14] : memref<120xf32, #tpu.memory_space<smem>>
    %471 = vector.broadcast %470 : f32 to vector<32x50xf32>
    %472 = arith.mulf %471, %469 : vector<32x50xf32>
    %473 = arith.addf %439, %472 : vector<32x50xf32>
    %c29 = arith.constant 29 : index
    %474 = memref.load %arg5[%c29] : memref<120xf32, #tpu.memory_space<smem>>
    %475 = vector.broadcast %474 : f32 to vector<32x50xf32>
    %476 = arith.mulf %475, %469 : vector<32x50xf32>
    %477 = arith.addf %443, %476 : vector<32x50xf32>
    %c44 = arith.constant 44 : index
    %478 = memref.load %arg5[%c44] : memref<120xf32, #tpu.memory_space<smem>>
    %479 = vector.broadcast %478 : f32 to vector<32x50xf32>
    %480 = arith.mulf %479, %469 : vector<32x50xf32>
    %481 = arith.addf %447, %480 : vector<32x50xf32>
    %c59 = arith.constant 59 : index
    %482 = memref.load %arg5[%c59] : memref<120xf32, #tpu.memory_space<smem>>
    %483 = vector.broadcast %482 : f32 to vector<32x50xf32>
    %484 = arith.mulf %483, %469 : vector<32x50xf32>
    %485 = arith.addf %451, %484 : vector<32x50xf32>
    %c74 = arith.constant 74 : index
    %486 = memref.load %arg5[%c74] : memref<120xf32, #tpu.memory_space<smem>>
    %487 = vector.broadcast %486 : f32 to vector<32x50xf32>
    %488 = arith.mulf %487, %469 : vector<32x50xf32>
    %489 = arith.addf %455, %488 : vector<32x50xf32>
    %c89 = arith.constant 89 : index
    %490 = memref.load %arg5[%c89] : memref<120xf32, #tpu.memory_space<smem>>
    %491 = vector.broadcast %490 : f32 to vector<32x50xf32>
    %492 = arith.mulf %491, %469 : vector<32x50xf32>
    %493 = arith.addf %459, %492 : vector<32x50xf32>
    %c104 = arith.constant 104 : index
    %494 = memref.load %arg5[%c104] : memref<120xf32, #tpu.memory_space<smem>>
    %495 = vector.broadcast %494 : f32 to vector<32x50xf32>
    %496 = arith.mulf %495, %469 : vector<32x50xf32>
    %497 = arith.addf %463, %496 : vector<32x50xf32>
    %c119 = arith.constant 119 : index
    %498 = memref.load %arg5[%c119] : memref<120xf32, #tpu.memory_space<smem>>
    %499 = vector.broadcast %498 : f32 to vector<32x50xf32>
    %500 = arith.mulf %499, %469 : vector<32x50xf32>
    %501 = arith.addf %467, %500 : vector<32x50xf32>
    %c0_60 = arith.constant 0 : index
    %502 = memref.load %arg6[%c0_60] : memref<8xf32, #tpu.memory_space<smem>>
    %503 = vector.broadcast %502 : f32 to vector<32x50xf32>
    %504 = arith.addf %473, %503 : vector<32x50xf32>
    %505 = arith.truncf %504 : vector<32x50xf32> to vector<32x50xbf16>
    %c0_61 = arith.constant 0 : index
    %c0_62 = arith.constant 0 : index
    %c0_63 = arith.constant 0 : index
    %c0_64 = arith.constant 0 : index
    %506 = vector.load %arg7[%c0_61, %c0_62, %c0_63, %c0_64] : memref<1x8x32x50xbf16, #tpu.memory_space<vmem>>, vector<1x1x32x50xbf16>
    %507 = vector.shape_cast %506 : vector<1x1x32x50xbf16> to vector<32x50xbf16>
    %508 = vector.shape_cast %505 : vector<32x50xbf16> to vector<1x1x32x50xbf16>
    tpu.vector_store %arg7[%c0_61, %c0_62, %c0_63, %c0_64], %508 {strides = array<i32>} : memref<1x8x32x50xbf16, #tpu.memory_space<vmem>>, vector<1x1x32x50xbf16>,
    %cst = arith.constant dense<0.000000e+00> : vector<32xf32>
    %509 = vector.multi_reduction <add>, %504, %cst [1] : vector<32x50xf32> to vector<32xf32>
    %510 = vector.shape_cast %509 : vector<32xf32> to vector<32x1xf32>
    %511 = arith.mulf %504, %504 : vector<32x50xf32>
    %cst_65 = arith.constant dense<0.000000e+00> : vector<32xf32>
    %512 = vector.multi_reduction <add>, %511, %cst_65 [1] : vector<32x50xf32> to vector<32xf32>
    %513 = vector.shape_cast %512 : vector<32xf32> to vector<32x1xf32>
    %cst_66 = arith.constant dense<0.000000e+00> : vector<1xf32>
    %514 = vector.multi_reduction <add>, %510, %cst_66 [0] : vector<32x1xf32> to vector<1xf32>
    %515 = vector.shape_cast %514 : vector<1xf32> to vector<1x1xf32>
    %cst_67 = arith.constant dense<0.000000e+00> : vector<1xf32>
    %516 = vector.multi_reduction <add>, %513, %cst_67 [0] : vector<32x1xf32> to vector<1xf32>
    %517 = vector.shape_cast %516 : vector<1xf32> to vector<1x1xf32>
    %518 = tpu.concatenate %515, %517 in 1 : vector<1x1xf32>, vector<1x1xf32> -> vector<1x2xf32>
    %c1_68 = arith.constant 1 : index
    %519 = memref.load %arg6[%c1_68] : memref<8xf32, #tpu.memory_space<smem>>
    %520 = vector.broadcast %519 : f32 to vector<32x50xf32>
    %521 = arith.addf %477, %520 : vector<32x50xf32>
    %522 = arith.truncf %521 : vector<32x50xf32> to vector<32x50xbf16>
    %c0_69 = arith.constant 0 : index
    %c1_70 = arith.constant 1 : index
    %c0_71 = arith.constant 0 : index
    %c0_72 = arith.constant 0 : index
    %523 = vector.load %arg7[%c0_69, %c1_70, %c0_71, %c0_72] : memref<1x8x32x50xbf16, #tpu.memory_space<vmem>>, vector<1x1x32x50xbf16>
    %524 = vector.shape_cast %523 : vector<1x1x32x50xbf16> to vector<32x50xbf16>
    %525 = vector.shape_cast %522 : vector<32x50xbf16> to vector<1x1x32x50xbf16>
    tpu.vector_store %arg7[%c0_69, %c1_70, %c0_71, %c0_72], %525 {strides = array<i32>} : memref<1x8x32x50xbf16, #tpu.memory_space<vmem>>, vector<1x1x32x50xbf16>,
    %cst_73 = arith.constant dense<0.000000e+00> : vector<32xf32>
    %526 = vector.multi_reduction <add>, %521, %cst_73 [1] : vector<32x50xf32> to vector<32xf32>
    %527 = vector.shape_cast %526 : vector<32xf32> to vector<32x1xf32>
    %528 = arith.mulf %521, %521 : vector<32x50xf32>
    %cst_74 = arith.constant dense<0.000000e+00> : vector<32xf32>
    %529 = vector.multi_reduction <add>, %528, %cst_74 [1] : vector<32x50xf32> to vector<32xf32>
    %530 = vector.shape_cast %529 : vector<32xf32> to vector<32x1xf32>
    %cst_75 = arith.constant dense<0.000000e+00> : vector<1xf32>
    %531 = vector.multi_reduction <add>, %527, %cst_75 [0] : vector<32x1xf32> to vector<1xf32>
    %532 = vector.shape_cast %531 : vector<1xf32> to vector<1x1xf32>
    %cst_76 = arith.constant dense<0.000000e+00> : vector<1xf32>
    %533 = vector.multi_reduction <add>, %530, %cst_76 [0] : vector<32x1xf32> to vector<1xf32>
    %534 = vector.shape_cast %533 : vector<1xf32> to vector<1x1xf32>
    %535 = tpu.concatenate %532, %534 in 1 : vector<1x1xf32>, vector<1x1xf32> -> vector<1x2xf32>
    %c2_77 = arith.constant 2 : index
    %536 = memref.load %arg6[%c2_77] : memref<8xf32, #tpu.memory_space<smem>>
    %537 = vector.broadcast %536 : f32 to vector<32x50xf32>
    %538 = arith.addf %481, %537 : vector<32x50xf32>
    %539 = arith.truncf %538 : vector<32x50xf32> to vector<32x50xbf16>
    %c0_78 = arith.constant 0 : index
    %c2_79 = arith.constant 2 : index
    %c0_80 = arith.constant 0 : index
    %c0_81 = arith.constant 0 : index
    %540 = vector.load %arg7[%c0_78, %c2_79, %c0_80, %c0_81] : memref<1x8x32x50xbf16, #tpu.memory_space<vmem>>, vector<1x1x32x50xbf16>
    %541 = vector.shape_cast %540 : vector<1x1x32x50xbf16> to vector<32x50xbf16>
    %542 = vector.shape_cast %539 : vector<32x50xbf16> to vector<1x1x32x50xbf16>
    tpu.vector_store %arg7[%c0_78, %c2_79, %c0_80, %c0_81], %542 {strides = array<i32>} : memref<1x8x32x50xbf16, #tpu.memory_space<vmem>>, vector<1x1x32x50xbf16>,
    %cst_82 = arith.constant dense<0.000000e+00> : vector<32xf32>
    %543 = vector.multi_reduction <add>, %538, %cst_82 [1] : vector<32x50xf32> to vector<32xf32>
    %544 = vector.shape_cast %543 : vector<32xf32> to vector<32x1xf32>
    %545 = arith.mulf %538, %538 : vector<32x50xf32>
    %cst_83 = arith.constant dense<0.000000e+00> : vector<32xf32>
    %546 = vector.multi_reduction <add>, %545, %cst_83 [1] : vector<32x50xf32> to vector<32xf32>
    %547 = vector.shape_cast %546 : vector<32xf32> to vector<32x1xf32>
    %cst_84 = arith.constant dense<0.000000e+00> : vector<1xf32>
    %548 = vector.multi_reduction <add>, %544, %cst_84 [0] : vector<32x1xf32> to vector<1xf32>
    %549 = vector.shape_cast %548 : vector<1xf32> to vector<1x1xf32>
    %cst_85 = arith.constant dense<0.000000e+00> : vector<1xf32>
    %550 = vector.multi_reduction <add>, %547, %cst_85 [0] : vector<32x1xf32> to vector<1xf32>
    %551 = vector.shape_cast %550 : vector<1xf32> to vector<1x1xf32>
    %552 = tpu.concatenate %549, %551 in 1 : vector<1x1xf32>, vector<1x1xf32> -> vector<1x2xf32>
    %c3_86 = arith.constant 3 : index
    %553 = memref.load %arg6[%c3_86] : memref<8xf32, #tpu.memory_space<smem>>
    %554 = vector.broadcast %553 : f32 to vector<32x50xf32>
    %555 = arith.addf %485, %554 : vector<32x50xf32>
    %556 = arith.truncf %555 : vector<32x50xf32> to vector<32x50xbf16>
    %c0_87 = arith.constant 0 : index
    %c3_88 = arith.constant 3 : index
    %c0_89 = arith.constant 0 : index
    %c0_90 = arith.constant 0 : index
    %557 = vector.load %arg7[%c0_87, %c3_88, %c0_89, %c0_90] : memref<1x8x32x50xbf16, #tpu.memory_space<vmem>>, vector<1x1x32x50xbf16>
    %558 = vector.shape_cast %557 : vector<1x1x32x50xbf16> to vector<32x50xbf16>
    %559 = vector.shape_cast %556 : vector<32x50xbf16> to vector<1x1x32x50xbf16>
    tpu.vector_store %arg7[%c0_87, %c3_88, %c0_89, %c0_90], %559 {strides = array<i32>} : memref<1x8x32x50xbf16, #tpu.memory_space<vmem>>, vector<1x1x32x50xbf16>,
    %cst_91 = arith.constant dense<0.000000e+00> : vector<32xf32>
    %560 = vector.multi_reduction <add>, %555, %cst_91 [1] : vector<32x50xf32> to vector<32xf32>
    %561 = vector.shape_cast %560 : vector<32xf32> to vector<32x1xf32>
    %562 = arith.mulf %555, %555 : vector<32x50xf32>
    %cst_92 = arith.constant dense<0.000000e+00> : vector<32xf32>
    %563 = vector.multi_reduction <add>, %562, %cst_92 [1] : vector<32x50xf32> to vector<32xf32>
    %564 = vector.shape_cast %563 : vector<32xf32> to vector<32x1xf32>
    %cst_93 = arith.constant dense<0.000000e+00> : vector<1xf32>
    %565 = vector.multi_reduction <add>, %561, %cst_93 [0] : vector<32x1xf32> to vector<1xf32>
    %566 = vector.shape_cast %565 : vector<1xf32> to vector<1x1xf32>
    %cst_94 = arith.constant dense<0.000000e+00> : vector<1xf32>
    %567 = vector.multi_reduction <add>, %564, %cst_94 [0] : vector<32x1xf32> to vector<1xf32>
    %568 = vector.shape_cast %567 : vector<1xf32> to vector<1x1xf32>
    %569 = tpu.concatenate %566, %568 in 1 : vector<1x1xf32>, vector<1x1xf32> -> vector<1x2xf32>
    %c4_95 = arith.constant 4 : index
    %570 = memref.load %arg6[%c4_95] : memref<8xf32, #tpu.memory_space<smem>>
    %571 = vector.broadcast %570 : f32 to vector<32x50xf32>
    %572 = arith.addf %489, %571 : vector<32x50xf32>
    %573 = arith.truncf %572 : vector<32x50xf32> to vector<32x50xbf16>
    %c0_96 = arith.constant 0 : index
    %c4_97 = arith.constant 4 : index
    %c0_98 = arith.constant 0 : index
    %c0_99 = arith.constant 0 : index
    %574 = vector.load %arg7[%c0_96, %c4_97, %c0_98, %c0_99] : memref<1x8x32x50xbf16, #tpu.memory_space<vmem>>, vector<1x1x32x50xbf16>
    %575 = vector.shape_cast %574 : vector<1x1x32x50xbf16> to vector<32x50xbf16>
    %576 = vector.shape_cast %573 : vector<32x50xbf16> to vector<1x1x32x50xbf16>
    tpu.vector_store %arg7[%c0_96, %c4_97, %c0_98, %c0_99], %576 {strides = array<i32>} : memref<1x8x32x50xbf16, #tpu.memory_space<vmem>>, vector<1x1x32x50xbf16>,
    %cst_100 = arith.constant dense<0.000000e+00> : vector<32xf32>
    %577 = vector.multi_reduction <add>, %572, %cst_100 [1] : vector<32x50xf32> to vector<32xf32>
    %578 = vector.shape_cast %577 : vector<32xf32> to vector<32x1xf32>
    %579 = arith.mulf %572, %572 : vector<32x50xf32>
    %cst_101 = arith.constant dense<0.000000e+00> : vector<32xf32>
    %580 = vector.multi_reduction <add>, %579, %cst_101 [1] : vector<32x50xf32> to vector<32xf32>
    %581 = vector.shape_cast %580 : vector<32xf32> to vector<32x1xf32>
    %cst_102 = arith.constant dense<0.000000e+00> : vector<1xf32>
    %582 = vector.multi_reduction <add>, %578, %cst_102 [0] : vector<32x1xf32> to vector<1xf32>
    %583 = vector.shape_cast %582 : vector<1xf32> to vector<1x1xf32>
    %cst_103 = arith.constant dense<0.000000e+00> : vector<1xf32>
    %584 = vector.multi_reduction <add>, %581, %cst_103 [0] : vector<32x1xf32> to vector<1xf32>
    %585 = vector.shape_cast %584 : vector<1xf32> to vector<1x1xf32>
    %586 = tpu.concatenate %583, %585 in 1 : vector<1x1xf32>, vector<1x1xf32> -> vector<1x2xf32>
    %c5_104 = arith.constant 5 : index
    %587 = memref.load %arg6[%c5_104] : memref<8xf32, #tpu.memory_space<smem>>
    %588 = vector.broadcast %587 : f32 to vector<32x50xf32>
    %589 = arith.addf %493, %588 : vector<32x50xf32>
    %590 = arith.truncf %589 : vector<32x50xf32> to vector<32x50xbf16>
    %c0_105 = arith.constant 0 : index
    %c5_106 = arith.constant 5 : index
    %c0_107 = arith.constant 0 : index
    %c0_108 = arith.constant 0 : index
    %591 = vector.load %arg7[%c0_105, %c5_106, %c0_107, %c0_108] : memref<1x8x32x50xbf16, #tpu.memory_space<vmem>>, vector<1x1x32x50xbf16>
    %592 = vector.shape_cast %591 : vector<1x1x32x50xbf16> to vector<32x50xbf16>
    %593 = vector.shape_cast %590 : vector<32x50xbf16> to vector<1x1x32x50xbf16>
    tpu.vector_store %arg7[%c0_105, %c5_106, %c0_107, %c0_108], %593 {strides = array<i32>} : memref<1x8x32x50xbf16, #tpu.memory_space<vmem>>, vector<1x1x32x50xbf16>,
    %cst_109 = arith.constant dense<0.000000e+00> : vector<32xf32>
    %594 = vector.multi_reduction <add>, %589, %cst_109 [1] : vector<32x50xf32> to vector<32xf32>
    %595 = vector.shape_cast %594 : vector<32xf32> to vector<32x1xf32>
    %596 = arith.mulf %589, %589 : vector<32x50xf32>
    %cst_110 = arith.constant dense<0.000000e+00> : vector<32xf32>
    %597 = vector.multi_reduction <add>, %596, %cst_110 [1] : vector<32x50xf32> to vector<32xf32>
    %598 = vector.shape_cast %597 : vector<32xf32> to vector<32x1xf32>
    %cst_111 = arith.constant dense<0.000000e+00> : vector<1xf32>
    %599 = vector.multi_reduction <add>, %595, %cst_111 [0] : vector<32x1xf32> to vector<1xf32>
    %600 = vector.shape_cast %599 : vector<1xf32> to vector<1x1xf32>
    %cst_112 = arith.constant dense<0.000000e+00> : vector<1xf32>
    %601 = vector.multi_reduction <add>, %598, %cst_112 [0] : vector<32x1xf32> to vector<1xf32>
    %602 = vector.shape_cast %601 : vector<1xf32> to vector<1x1xf32>
    %603 = tpu.concatenate %600, %602 in 1 : vector<1x1xf32>, vector<1x1xf32> -> vector<1x2xf32>
    %c6_113 = arith.constant 6 : index
    %604 = memref.load %arg6[%c6_113] : memref<8xf32, #tpu.memory_space<smem>>
    %605 = vector.broadcast %604 : f32 to vector<32x50xf32>
    %606 = arith.addf %497, %605 : vector<32x50xf32>
    %607 = arith.truncf %606 : vector<32x50xf32> to vector<32x50xbf16>
    %c0_114 = arith.constant 0 : index
    %c6_115 = arith.constant 6 : index
    %c0_116 = arith.constant 0 : index
    %c0_117 = arith.constant 0 : index
    %608 = vector.load %arg7[%c0_114, %c6_115, %c0_116, %c0_117] : memref<1x8x32x50xbf16, #tpu.memory_space<vmem>>, vector<1x1x32x50xbf16>
    %609 = vector.shape_cast %608 : vector<1x1x32x50xbf16> to vector<32x50xbf16>
    %610 = vector.shape_cast %607 : vector<32x50xbf16> to vector<1x1x32x50xbf16>
    tpu.vector_store %arg7[%c0_114, %c6_115, %c0_116, %c0_117], %610 {strides = array<i32>} : memref<1x8x32x50xbf16, #tpu.memory_space<vmem>>, vector<1x1x32x50xbf16>,
    %cst_118 = arith.constant dense<0.000000e+00> : vector<32xf32>
    %611 = vector.multi_reduction <add>, %606, %cst_118 [1] : vector<32x50xf32> to vector<32xf32>
    %612 = vector.shape_cast %611 : vector<32xf32> to vector<32x1xf32>
    %613 = arith.mulf %606, %606 : vector<32x50xf32>
    %cst_119 = arith.constant dense<0.000000e+00> : vector<32xf32>
    %614 = vector.multi_reduction <add>, %613, %cst_119 [1] : vector<32x50xf32> to vector<32xf32>
    %615 = vector.shape_cast %614 : vector<32xf32> to vector<32x1xf32>
    %cst_120 = arith.constant dense<0.000000e+00> : vector<1xf32>
    %616 = vector.multi_reduction <add>, %612, %cst_120 [0] : vector<32x1xf32> to vector<1xf32>
    %617 = vector.shape_cast %616 : vector<1xf32> to vector<1x1xf32>
    %cst_121 = arith.constant dense<0.000000e+00> : vector<1xf32>
    %618 = vector.multi_reduction <add>, %615, %cst_121 [0] : vector<32x1xf32> to vector<1xf32>
    %619 = vector.shape_cast %618 : vector<1xf32> to vector<1x1xf32>
    %620 = tpu.concatenate %617, %619 in 1 : vector<1x1xf32>, vector<1x1xf32> -> vector<1x2xf32>
    %c7_122 = arith.constant 7 : index
    %621 = memref.load %arg6[%c7_122] : memref<8xf32, #tpu.memory_space<smem>>
    %622 = vector.broadcast %621 : f32 to vector<32x50xf32>
    %623 = arith.addf %501, %622 : vector<32x50xf32>
    %624 = arith.truncf %623 : vector<32x50xf32> to vector<32x50xbf16>
    %c0_123 = arith.constant 0 : index
    %c7_124 = arith.constant 7 : index
    %c0_125 = arith.constant 0 : index
    %c0_126 = arith.constant 0 : index
    %625 = vector.load %arg7[%c0_123, %c7_124, %c0_125, %c0_126] : memref<1x8x32x50xbf16, #tpu.memory_space<vmem>>, vector<1x1x32x50xbf16>
    %626 = vector.shape_cast %625 : vector<1x1x32x50xbf16> to vector<32x50xbf16>
    %627 = vector.shape_cast %624 : vector<32x50xbf16> to vector<1x1x32x50xbf16>
    tpu.vector_store %arg7[%c0_123, %c7_124, %c0_125, %c0_126], %627 {strides = array<i32>} : memref<1x8x32x50xbf16, #tpu.memory_space<vmem>>, vector<1x1x32x50xbf16>,
    %cst_127 = arith.constant dense<0.000000e+00> : vector<32xf32>
    %628 = vector.multi_reduction <add>, %623, %cst_127 [1] : vector<32x50xf32> to vector<32xf32>
    %629 = vector.shape_cast %628 : vector<32xf32> to vector<32x1xf32>
    %630 = arith.mulf %623, %623 : vector<32x50xf32>
    %cst_128 = arith.constant dense<0.000000e+00> : vector<32xf32>
    %631 = vector.multi_reduction <add>, %630, %cst_128 [1] : vector<32x50xf32> to vector<32xf32>
    %632 = vector.shape_cast %631 : vector<32xf32> to vector<32x1xf32>
    %cst_129 = arith.constant dense<0.000000e+00> : vector<1xf32>
    %633 = vector.multi_reduction <add>, %629, %cst_129 [0] : vector<32x1xf32> to vector<1xf32>
    %634 = vector.shape_cast %633 : vector<1xf32> to vector<1x1xf32>
    %cst_130 = arith.constant dense<0.000000e+00> : vector<1xf32>
    %635 = vector.multi_reduction <add>, %632, %cst_130 [0] : vector<32x1xf32> to vector<1xf32>
    %636 = vector.shape_cast %635 : vector<1xf32> to vector<1x1xf32>
    %637 = tpu.concatenate %634, %636 in 1 : vector<1x1xf32>, vector<1x1xf32> -> vector<1x2xf32>
    %638 = tpu.concatenate %518, %535, %552, %569, %586, %603, %620, %637 in 0 : vector<1x2xf32>, vector<1x2xf32>, vector<1x2xf32>, vector<1x2xf32>, vector<1x2xf32>, vector<1x2xf32>, vector<1x2xf32>, vector<1x2xf32> -> vector<8x2xf32>
    %c0_131 = arith.constant 0 : index
    %c0_132 = arith.constant 0 : index
    %c0_133 = arith.constant 0 : index
    %639 = vector.load %arg8[%c0_131, %c0_132, %c0_133] : memref<1x8x2xf32, #tpu.memory_space<vmem>>, vector<1x8x2xf32>
    %640 = vector.shape_cast %639 : vector<1x8x2xf32> to vector<8x2xf32>
    %641 = vector.shape_cast %638 : vector<8x2xf32> to vector<1x8x2xf32>
    tpu.vector_store %arg8[%c0_131, %c0_132, %c0_133], %641 {strides = array<i32>} : memref<1x8x2xf32, #tpu.memory_space<vmem>>, vector<1x8x2xf32>,
    return
  }
  func.func @transform_0(%arg0: i32) -> (i32, i32, i32, i32) {
    %c0_i32 = arith.constant 0 : i32
    %c0_i32_0 = arith.constant 0 : i32
    %c0_i32_1 = arith.constant 0 : i32
    %c0_i32_2 = arith.constant 0 : i32
    return %arg0, %c0_i32, %c0_i32_0, %c0_i32_1 : i32, i32, i32, i32
  }
  func.func @transform_1(%arg0: i32) -> (i32, i32, i32, i32) {
    %c0_i32 = arith.constant 0 : i32
    %c0_i32_0 = arith.constant 0 : i32
    %c0_i32_1 = arith.constant 0 : i32
    %c0_i32_2 = arith.constant 0 : i32
    return %arg0, %c0_i32, %c0_i32_0, %c0_i32_1 : i32, i32, i32, i32
  }
  func.func @transform_2(%arg0: i32) -> (i32, i32, i32, i32) {
    %c0_i32 = arith.constant 0 : i32
    %c0_i32_0 = arith.constant 0 : i32
    %c0_i32_1 = arith.constant 0 : i32
    %c0_i32_2 = arith.constant 0 : i32
    return %arg0, %c0_i32, %c0_i32_0, %c0_i32_1 : i32, i32, i32, i32
  }
  func.func @transform_3(%arg0: i32) -> (i32, i32, i32, i32) {
    %c0_i32 = arith.constant 0 : i32
    %c0_i32_0 = arith.constant 0 : i32
    %c0_i32_1 = arith.constant 0 : i32
    %c0_i32_2 = arith.constant 0 : i32
    return %arg0, %c0_i32, %c0_i32_0, %c0_i32_1 : i32, i32, i32, i32
  }
  func.func @transform_4(%arg0: i32) -> i32 {
    %c0_i32 = arith.constant 0 : i32
    %c0_i32_0 = arith.constant 0 : i32
    return %c0_i32 : i32
  }
  func.func @transform_5(%arg0: i32) -> i32 {
    %c0_i32 = arith.constant 0 : i32
    %c0_i32_0 = arith.constant 0 : i32
    return %c0_i32 : i32
  }
  func.func @transform_6(%arg0: i32) -> (i32, i32, i32, i32) {
    %c0_i32 = arith.constant 0 : i32
    %c0_i32_0 = arith.constant 0 : i32
    %c0_i32_1 = arith.constant 0 : i32
    %c0_i32_2 = arith.constant 0 : i32
    return %arg0, %c0_i32, %c0_i32_0, %c0_i32_1 : i32, i32, i32, i32
  }
  func.func @transform_7(%arg0: i32) -> (i32, i32, i32) {
    %c0_i32 = arith.constant 0 : i32
    %c0_i32_0 = arith.constant 0 : i32
    %c0_i32_1 = arith.constant 0 : i32
    return %arg0, %c0_i32, %c0_i32_0 : i32, i32, i32
  }
}

</mosaic_0001>

<llo_original>
// kernel: tpu_custom_call.1
$region0: #{tpu_custom_call.1}
  #allocation0 [shape = 'u32[]', space=smem, size = 0x4, offset = 0x4, fixed_abs, tag = 'smem constant byte address 0x4 - core index']
  #allocation1 [shape = 'u32[72,128]{1,0:T(1,128)}', space=vmem, size = 0x9000, scoped, tag = 'internal scratch']
  %s0 = inlined_call_operand.vmem [shape: f32[2,1,33,52], index: 0, kind: input, shape index: {}]
  %s1 = inlined_call_operand.vmem [shape: f32[2,1,33,52], index: 1, kind: input, shape index: {}]
  %s2 = inlined_call_operand.vmem [shape: f32[2,1,33,52], index: 2, kind: input, shape index: {}]
  %s3 = inlined_call_operand.vmem [shape: f32[2,1,33,52], index: 3, kind: input, shape index: {}]
  %s4 = inlined_call_operand.vmem [shape: f32[120], index: 4, kind: input, shape index: {}]
  %s5 = inlined_call_operand.vmem [shape: f32[8], index: 5, kind: input, shape index: {}]
  %s6 = inlined_call_operand.hbm [shape: bf16[2,8,32,50], index: 6, kind: output, shape index: {0}]
  %s7 = inlined_call_operand.vmem [shape: f32[2,8,2], index: 7, kind: output, shape index: {1}]
  %8 = xla_tuple %s6, %s7
  %s9 = sld [smem:[#allocation0]]
  $region73: #{tpu_custom_call.1} parent=0
    _
  %s11 = ssub.s32 1, %s9
  %s12 = scalar_select 0, %s11, %s9
  $region1: #{tpu_custom_call.1} parent=0
    #allocation2 [shape = 'u8[512]{0}', space=smem, size = 0x200, scoped, tag = 'input window, operand 4, single buffered']
    #allocation3 [shape = 's32[2]{0}', space=sflag, size = 0x8, scoped, tag = 'scoped memory for tpu_custom_call.1']
    #allocation4 [shape = 's32[2]{0}', space=sflag, size = 0x8, scoped, tag = 'scoped memory for tpu_custom_call.1']
    #allocation5 [shape = 'u8[512]{0}', space=smem, size = 0x200, scoped, tag = 'input window, operand 5, single buffered']
    #allocation6 [shape = 's32[1]{0}', space=sflag, size = 0x4, scoped, tag = 'scoped memory for tpu_custom_call.1']
    #allocation7 [shape = 'u8[131072]{0}', space=vmem, size = 0x20000, scoped, tag = 'output window, operand 0']
    %13 = vsyncpa [#allocation4], 0
    %14 = vsyncpa [#allocation6], 0
    %15 = vsyncpa [#allocation3], 0
    %s16 = scalar_lea.sflag [#allocation3], 1
    %17 = vsyncpa %s16, 0
    loop: start=0, step=1, limit=4
    $region2: #{tpu_custom_call.1} parent=1 // loop_pre_header
      _
    $region3: #{tpu_custom_call.1} parent=1 // loop_header
      %s19 = sphi 0, %s23
      %p20 = scmp.ge.s32.totalorder %s19, 4
      %s29 = sphi 0, %s31
      %s32 = sphi 0, %s29
      %s33 = sphi 0, %s32
      %s49 = sphi 0, %s33
      %s55 = sphi 0, %s57
      %s58 = sphi 0, %s55
      %s59 = sphi 0, %s58
      %s75 = sphi 0, %s59
      %s81 = sphi 0, %s83
      %s84 = sphi 0, %s81
      %s85 = sphi 0, %s84
      %s101 = sphi 0, %s85
      %s107 = sphi 0, %s109
      %s110 = sphi 0, %s107
      %s111 = sphi 0, %s110
      %s127 = sphi 0, %s111
      %s131 = sphi 0, %s131
      %s133 = sphi 0, %s131
      %s134 = sphi 0, %s133
      %s148 = sphi 0, %s134
      %s152 = sphi 0, %s152
      %s154 = sphi 0, %s152
      %s155 = sphi 0, %s154
      %s169 = sphi 0, %s155
      %s175 = sphi 0, %s177
      %s178 = sphi 0, %s175
      %s179 = sphi 0, %s178
      %s195 = sphi 0, %s179
      %s201 = sphi 0, %s203
      %s204 = sphi 0, %s201
      %s205 = sphi 0, %s204
      %s221 = sphi 0, %s205
    $region4: #{tpu_custom_call.1} parent=1 // loop_header_branch
      %22 = sbr.rel (%p20) target = $region8
    $region5: #{tpu_custom_call.1} parent=1 // loop_body
      %s24 = ssub.s32 %s19, 1
      %s25 = ssub.s32 %s19, 2
      %s26 = sadd.s32 %s19, 1
      %s27 = ssub.s32 %s19, %s26
      %p28 = scmp.eq.s32.totalorder %s27, 0
      %s30 = sadd.s32 %s29, 1
      %s31 = scalar_select %p28, %s29, %s30
      %p34 = pneg %p28
      %p35 = scmp.eq.s32.totalorder %s19, 1
      %p36 = por %p34, %p35
      %p37 = scmp.ne.s32.totalorder %s29, %s32
      %p38 = scmp.eq.s32.totalorder %s19, 0
      %p39 = por %p37, %p38
      %p40 = scmp.ne.s32.totalorder %s29, %s32
      %p41 = scmp.eq.s32.totalorder %s24, 1
      %p42 = por %p40, %p41
      %p43 = scmp.ne.s32.totalorder %s32, %s33
      %p44 = scmp.eq.s32.totalorder %s24, 0
      %p45 = por %p43, %p44
      %p46 = scmp.ne.s32.totalorder %s32, %s33
      %p47 = scmp.eq.s32.totalorder %s25, 1
      %p48 = por %p46, %p47
      %p50 = scmp.ne.s32.totalorder %s33, %s49
      %p51 = scmp.eq.s32.totalorder %s25, 0
      %p52 = por %p50, %p51
      %s53 = ssub.s32 %s19, %s26
      %p54 = scmp.eq.s32.totalorder %s53, 0
      %s56 = sadd.s32 %s55, 1
      %s57 = scalar_select %p54, %s55, %s56
      %p60 = pneg %p54
      %p61 = scmp.eq.s32.totalorder %s19, 1
      %p62 = por %p60, %p61
      %p63 = scmp.ne.s32.totalorder %s55, %s58
      %p64 = scmp.eq.s32.totalorder %s19, 0
      %p65 = por %p63, %p64
      %p66 = scmp.ne.s32.totalorder %s55, %s58
      %p67 = scmp.eq.s32.totalorder %s24, 1
      %p68 = por %p66, %p67
      %p69 = scmp.ne.s32.totalorder %s58, %s59
      %p70 = scmp.eq.s32.totalorder %s24, 0
      %p71 = por %p69, %p70
      %p72 = scmp.ne.s32.totalorder %s58, %s59
      %p73 = scmp.eq.s32.totalorder %s25, 1
      %p74 = por %p72, %p73
      %p76 = scmp.ne.s32.totalorder %s59, %s75
      %p77 = scmp.eq.s32.totalorder %s25, 0
      %p78 = por %p76, %p77
      %s79 = ssub.s32 %s19, %s26
      %p80 = scmp.eq.s32.totalorder %s79, 0
      %s82 = sadd.s32 %s81, 1
      %s83 = scalar_select %p80, %s81, %s82
      %p86 = pneg %p80
      %p87 = scmp.eq.s32.totalorder %s19, 1
      %p88 = por %p86, %p87
      %p89 = scmp.ne.s32.totalorder %s81, %s84
      %p90 = scmp.eq.s32.totalorder %s19, 0
      %p91 = por %p89, %p90
      %p92 = scmp.ne.s32.totalorder %s81, %s84
      %p93 = scmp.eq.s32.totalorder %s24, 1
      %p94 = por %p92, %p93
      %p95 = scmp.ne.s32.totalorder %s84, %s85
      %p96 = scmp.eq.s32.totalorder %s24, 0
      %p97 = por %p95, %p96
      %p98 = scmp.ne.s32.totalorder %s84, %s85
      %p99 = scmp.eq.s32.totalorder %s25, 1
      %p100 = por %p98, %p99
      %p102 = scmp.ne.s32.totalorder %s85, %s101
      %p103 = scmp.eq.s32.totalorder %s25, 0
      %p104 = por %p102, %p103
      %s105 = ssub.s32 %s19, %s26
      %p106 = scmp.eq.s32.totalorder %s105, 0
      %s108 = sadd.s32 %s107, 1
      %s109 = scalar_select %p106, %s107, %s108
      %p112 = pneg %p106
      %p113 = scmp.eq.s32.totalorder %s19, 1
      %p114 = por %p112, %p113
      %p115 = scmp.ne.s32.totalorder %s107, %s110
      %p116 = scmp.eq.s32.totalorder %s19, 0
      %p117 = por %p115, %p116
      %p118 = scmp.ne.s32.totalorder %s107, %s110
      %p119 = scmp.eq.s32.totalorder %s24, 1
      %p120 = por %p118, %p119
      %p121 = scmp.ne.s32.totalorder %s110, %s111
      %p122 = scmp.eq.s32.totalorder %s24, 0
      %p123 = por %p121, %p122
      %p124 = scmp.ne.s32.totalorder %s110, %s111
      %p125 = scmp.eq.s32.totalorder %s25, 1
      %p126 = por %p124, %p125
      %p128 = scmp.ne.s32.totalorder %s111, %s127
      %p129 = scmp.eq.s32.totalorder %s25, 0
      %p130 = por %p128, %p129
      %s132 = sadd.s32 %s131, 1
      %p135 = scmp.eq.s32.totalorder %s19, 1
      %p136 = scmp.ne.s32.totalorder %s131, %s133
      %p137 = scmp.eq.s32.totalorder %s19, 0
      %p138 = por %p136, %p137
      %p139 = scmp.ne.s32.totalorder %s131, %s133
      %p140 = scmp.eq.s32.totalorder %s24, 1
      %p141 = por %p139, %p140
      %p142 = scmp.ne.s32.totalorder %s133, %s134
      %p143 = scmp.eq.s32.totalorder %s24, 0
      %p144 = por %p142, %p143
      %p145 = scmp.ne.s32.totalorder %s133, %s134
      %p146 = scmp.eq.s32.totalorder %s25, 1
      %p147 = por %p145, %p146
      %p149 = scmp.ne.s32.totalorder %s134, %s148
      %p150 = scmp.eq.s32.totalorder %s25, 0
      %p151 = por %p149, %p150
      %s153 = sadd.s32 %s152, 1
      %p156 = scmp.eq.s32.totalorder %s19, 1
      %p157 = scmp.ne.s32.totalorder %s152, %s154
      %p158 = scmp.eq.s32.totalorder %s19, 0
      %p159 = por %p157, %p158
      %p160 = scmp.ne.s32.totalorder %s152, %s154
      %p161 = scmp.eq.s32.totalorder %s24, 1
      %p162 = por %p160, %p161
      %p163 = scmp.ne.s32.totalorder %s154, %s155
      %p164 = scmp.eq.s32.totalorder %s24, 0
      %p165 = por %p163, %p164
      %p166 = scmp.ne.s32.totalorder %s154, %s155
      %p167 = scmp.eq.s32.totalorder %s25, 1
      %p168 = por %p166, %p167
      %p170 = scmp.ne.s32.totalorder %s155, %s169
      %p171 = scmp.eq.s32.totalorder %s25, 0
      %p172 = por %p170, %p171
      %s173 = ssub.s32 %s19, %s26
      %p174 = scmp.eq.s32.totalorder %s173, 0
      %s176 = sadd.s32 %s175, 1
      %s177 = scalar_select %p174, %s175, %s176
      %p180 = pneg %p174
      %p181 = scmp.eq.s32.totalorder %s19, 1
      %p182 = por %p180, %p181
      %p183 = scmp.ne.s32.totalorder %s175, %s178
      %p184 = scmp.eq.s32.totalorder %s19, 0
      %p185 = por %p183, %p184
      %p186 = scmp.ne.s32.totalorder %s175, %s178
      %p187 = scmp.eq.s32.totalorder %s24, 1
      %p188 = por %p186, %p187
      %p189 = scmp.ne.s32.totalorder %s178, %s179
      %p190 = scmp.eq.s32.totalorder %s24, 0
      %p191 = por %p189, %p190
      %p192 = scmp.ne.s32.totalorder %s178, %s179
      %p193 = scmp.eq.s32.totalorder %s25, 1
      %p194 = por %p192, %p193
      %p196 = scmp.ne.s32.totalorder %s179, %s195
      %p197 = scmp.eq.s32.totalorder %s25, 0
      %p198 = por %p196, %p197
      %s199 = ssub.s32 %s19, %s26
      %p200 = scmp.eq.s32.totalorder %s199, 0
      %s202 = sadd.s32 %s201, 1
      %s203 = scalar_select %p200, %s201, %s202
      %p206 = pneg %p200
      %p207 = scmp.eq.s32.totalorder %s19, 1
      %p208 = por %p206, %p207
      %p209 = scmp.ne.s32.totalorder %s201, %s204
      %p210 = scmp.eq.s32.totalorder %s19, 0
      %p211 = por %p209, %p210
      %p212 = scmp.ne.s32.totalorder %s201, %s204
      %p213 = scmp.eq.s32.totalorder %s24, 1
      %p214 = por %p212, %p213
      %p215 = scmp.ne.s32.totalorder %s204, %s205
      %p216 = scmp.eq.s32.totalorder %s24, 0
      %p217 = por %p215, %p216
      %p218 = scmp.ne.s32.totalorder %s204, %s205
      %p219 = scmp.eq.s32.totalorder %s25, 1
      %p220 = por %p218, %p219
      %p222 = scmp.ne.s32.totalorder %s205, %s221
      %p223 = scmp.eq.s32.totalorder %s25, 0
      %p224 = por %p222, %p223
      %p225 = scmp.le.s32.totalorder 1, %s19
      %p226 = scmp.lt.s32.totalorder %s19, 3
      %p227 = pnand %p225, %p226
      %p228 = pneg %p227
      // Predicated region
      $region9: #{tpu_custom_call.1} parent=5 // pred_check
        _
      $region10: #{tpu_custom_call.1} parent=5 // pred_check_branch
        %230 = sbr.rel (%p227) target = $region12
      $region11: #{tpu_custom_call.1} parent=5 // pred_region
        %s231 = ssub.s32 %s19, 1
        // Predicated region
        $region13: #{tpu_custom_call.1} parent=11 // pred_check
          %p232 = pneg %p144
        $region14: #{tpu_custom_call.1} parent=11 // pred_check_branch
          %234 = sbr.rel (%p232) target = $region16
        $region15: #{tpu_custom_call.1} parent=11 // pred_region
          %236 = vsyncadd [#allocation4], 0
          %s238 = sshll.u32 %s4, 4
          %s239 = int_to_ptr.vmem [resolvable:$true] %s238
          %241 = dma.vmem_to_smem %s239, 16, [#allocation2], [#allocation4]
        $region16: #{tpu_custom_call.1} parent=11 // pred_fallthru
          _
        // Predicated region
        $region17: #{tpu_custom_call.1} parent=11 // pred_check
          %p242 = pneg %p165
        $region18: #{tpu_custom_call.1} parent=11 // pred_check_branch
          %244 = sbr.rel (%p242) target = $region20
        $region19: #{tpu_custom_call.1} parent=11 // pred_region
          %246 = vsyncadd [#allocation6], 0
          %s248 = sshll.u32 %s5, 4
          %s249 = int_to_ptr.vmem [resolvable:$true] %s248
          %251 = dma.vmem_to_smem %s249, 16, [#allocation5], [#allocation6]
        $region20: #{tpu_custom_call.1} parent=11 // pred_fallthru
          _
      $region12: #{tpu_custom_call.1} parent=5 // pred_fallthru
        _
      %p252 = scmp.lt.s32.totalorder %s19, 2
      // Predicated region
      $region21: #{tpu_custom_call.1} parent=5 // pred_check
        %p253 = pneg %p252
      $region22: #{tpu_custom_call.1} parent=5 // pred_check_branch
        %255 = sbr.rel (%p253) target = $region24
      $region23: #{tpu_custom_call.1} parent=5 // pred_region
        // Predicated region
        $region25: #{tpu_custom_call.1} parent=23 // pred_check
          %p256 = pneg %p39
        $region26: #{tpu_custom_call.1} parent=23 // pred_check_branch
          %258 = sbr.rel (%p256) target = $region28
        $region27: #{tpu_custom_call.1} parent=23 // pred_region
          %p259 = scmp.lt.s32.totalorder %s19, 1
          %s260 = scalar_select %p259, %s19, 1
          %s261 = smul.addr %s260, 5
          %s262 = smul.addr %s261, 8
          %s263 = scalar_lea.vmem %s0, %s262
        $region28: #{tpu_custom_call.1} parent=23 // pred_fallthru
          _
        // Predicated region
        $region29: #{tpu_custom_call.1} parent=23 // pred_check
          %p264 = pneg %p65
        $region30: #{tpu_custom_call.1} parent=23 // pred_check_branch
          %266 = sbr.rel (%p264) target = $region32
        $region31: #{tpu_custom_call.1} parent=23 // pred_region
          %p267 = scmp.lt.s32.totalorder %s19, 1
          %s268 = scalar_select %p267, %s19, 1
          %s269 = smul.addr %s268, 5
          %s270 = smul.addr %s269, 8
          %s271 = scalar_lea.vmem %s1, %s270
        $region32: #{tpu_custom_call.1} parent=23 // pred_fallthru
          _
        // Predicated region
        $region33: #{tpu_custom_call.1} parent=23 // pred_check
          %p272 = pneg %p91
        $region34: #{tpu_custom_call.1} parent=23 // pred_check_branch
          %274 = sbr.rel (%p272) target = $region36
        $region35: #{tpu_custom_call.1} parent=23 // pred_region
          %p275 = scmp.lt.s32.totalorder %s19, 1
          %s276 = scalar_select %p275, %s19, 1
          %s277 = smul.addr %s276, 5
          %s278 = smul.addr %s277, 8
          %s279 = scalar_lea.vmem %s2, %s278
        $region36: #{tpu_custom_call.1} parent=23 // pred_fallthru
          _
        // Predicated region
        $region37: #{tpu_custom_call.1} parent=23 // pred_check
          %p280 = pneg %p117
        $region38: #{tpu_custom_call.1} parent=23 // pred_check_branch
          %282 = sbr.rel (%p280) target = $region40
        $region39: #{tpu_custom_call.1} parent=23 // pred_region
          %p283 = scmp.lt.s32.totalorder %s19, 1
          %s284 = scalar_select %p283, %s19, 1
          %s285 = smul.addr %s284, 5
          %s286 = smul.addr %s285, 8
          %s287 = scalar_lea.vmem %s3, %s286
        $region40: #{tpu_custom_call.1} parent=23 // pred_fallthru
          _
      $region24: #{tpu_custom_call.1} parent=5 // pred_fallthru
        _
      %p288 = scmp.le.s32.totalorder 1, %s19
      %p289 = scmp.lt.s32.totalorder %s19, 3
      %p290 = pnand %p288, %p289
      %p291 = pneg %p290
      // Predicated region
      $region41: #{tpu_custom_call.1} parent=5 // pred_check
        _
      $region42: #{tpu_custom_call.1} parent=5 // pred_check_branch
        %293 = sbr.rel (%p290) target = $region44
      $region43: #{tpu_custom_call.1} parent=5 // pred_region
        %s294 = ssub.s32 %s19, 1
        // Predicated region
        $region45: #{tpu_custom_call.1} parent=43 // pred_check
          %p295 = pneg %p144
        $region46: #{tpu_custom_call.1} parent=43 // pred_check_branch
          %297 = sbr.rel (%p295) target = $region48
        $region47: #{tpu_custom_call.1} parent=43 // pred_region
          %299 = dma.done [#allocation4], 16
        $region48: #{tpu_custom_call.1} parent=43 // pred_fallthru
          _
        // Predicated region
        $region49: #{tpu_custom_call.1} parent=43 // pred_check
          %p300 = pneg %p165
        $region50: #{tpu_custom_call.1} parent=43 // pred_check_branch
          %302 = sbr.rel (%p300) target = $region52
        $region51: #{tpu_custom_call.1} parent=43 // pred_region
          %304 = dma.done [#allocation6], 16
        $region52: #{tpu_custom_call.1} parent=43 // pred_fallthru
          _
        %305 = sfence
        %p306 = scmp.lt.s32.totalorder %s24, 1
        %s307 = scalar_select %p306, %s24, 1
        %s308 = smul.addr %s307, 5
        %s309 = smul.addr %s308, 8
        %s310 = scalar_lea.vmem %s0, %s309
        %p311 = pneg %p45
        %p312 = pneg %p42
        %p313 = scmp.lt.s32.totalorder %s24, 1
        %s314 = scalar_select %p313, %s24, 1
        %s315 = smul.addr %s314, 5
        %s316 = smul.addr %s315, 8
        %s317 = scalar_lea.vmem %s1, %s316
        %p318 = pneg %p71
        %p319 = pneg %p68
        %p320 = scmp.lt.s32.totalorder %s24, 1
        %s321 = scalar_select %p320, %s24, 1
        %s322 = smul.addr %s321, 5
        %s323 = smul.addr %s322, 8
        %s324 = scalar_lea.vmem %s2, %s323
        %p325 = pneg %p97
        %p326 = pneg %p94
        %p327 = scmp.lt.s32.totalorder %s24, 1
        %s328 = scalar_select %p327, %s24, 1
        %s329 = smul.addr %s328, 5
        %s330 = smul.addr %s329, 8
        %s331 = scalar_lea.vmem %s3, %s330
        %p332 = pneg %p123
        %p333 = pneg %p120
        %p334 = pneg %p144
        %p335 = pneg %p141
        %p336 = pneg %p165
        %p337 = pneg %p162
        %p338 = pneg %p191
        %p339 = pneg %p188
        %s340 = sand.u32 %s178, 1
        %s341 = scalar_lea.sflag [#allocation3], %s340
        %s342 = sand.u32 %s178, 1
        %s343 = smul.addr %s342, 128
        %s344 = scalar_lea.vmem [#allocation7], %s343
        %p345 = pneg %p217
        %p346 = pneg %p214
        %p347 = scmp.lt.s32.totalorder %s24, 1
        %s348 = scalar_select %p347, %s24, 1
        %s349 = smul.addr %s348, 8
        %s350 = scalar_lea.vmem %s7, %s349
        %p351 = scmp.lt.s32.totalorder %s24, 1
        %s352 = scalar_select %p351, %s24, 1
        %s353 = smul.addr %s352, 5
        %s354 = smul.addr %s353, 8
        %s355 = scalar_lea.vmem %s0, %s354
        %p356 = scmp.lt.s32.totalorder %s24, 1
        %s357 = scalar_select %p356, %s24, 1
        %s358 = smul.addr %s357, 5
        %s359 = smul.addr %s358, 8
        %s360 = scalar_lea.vmem %s1, %s359
        %p361 = scmp.lt.s32.totalorder %s24, 1
        %s362 = scalar_select %p361, %s24, 1
        %s363 = smul.addr %s362, 5
        %s364 = smul.addr %s363, 8
        %s365 = scalar_lea.vmem %s2, %s364
        %p366 = scmp.lt.s32.totalorder %s24, 1
        %s367 = scalar_select %p366, %s24, 1
        %s368 = smul.addr %s367, 5
        %s369 = smul.addr %s368, 8
        %s370 = scalar_lea.vmem %s3, %s369
        %p371 = scmp.lt.s32.totalorder %s24, 1
        %s372 = scalar_select %p371, %s24, 1
        %s373 = smul.addr %s372, 8
        %s374 = scalar_lea.vmem %s7, %s373
        %v375 = vld [vmem:[%s355] sm:$0xff]
        %v376 = vld [vmem:[%s355 + $0x8] sm:$0xff]
        %v377 = vld [vmem:[%s355 + $0x10] sm:$0xff]
        %v378 = vld [vmem:[%s355 + $0x18] sm:$0xff]
        %s379 = sld [smem:[#allocation2]]
        %v380 = vstv %s379
        %v381 = vmul.f32 %v380, %v375
        %v382 = vmul.f32 %v380, %v376
        %v383 = vmul.f32 %v380, %v377
        %v384 = vmul.f32 %v380, %v378
        %s385 = sld [smem:[#allocation2 + $0xf]]
        %v386 = vstv %s385
        %v387 = vmul.f32 %v386, %v375
        %v388 = vmul.f32 %v386, %v376
        %v389 = vmul.f32 %v386, %v377
        %v390 = vmul.f32 %v386, %v378
        %s391 = sld [smem:[#allocation2 + $0x1e]]
        %v392 = vstv %s391
        %v393 = vmul.f32 %v392, %v375
        %v394 = vmul.f32 %v392, %v376
        %v395 = vmul.f32 %v392, %v377
        %v396 = vmul.f32 %v392, %v378
        %s397 = sld [smem:[#allocation2 + $0x2d]]
        %v398 = vstv %s397
        %v399 = vmul.f32 %v398, %v375
        %v400 = vmul.f32 %v398, %v376
        %v401 = vmul.f32 %v398, %v377
        %v402 = vmul.f32 %v398, %v378
        %s403 = sld [smem:[#allocation2 + $0x3c]]
        %v404 = vstv %s403
        %v405 = vmul.f32 %v404, %v375
        %v406 = vmul.f32 %v404, %v376
        %v407 = vmul.f32 %v404, %v377
        %v408 = vmul.f32 %v404, %v378
        %s409 = sld [smem:[#allocation2 + $0x4b]]
        %v410 = vstv %s409
        %v411 = vmul.f32 %v410, %v375
        %v412 = vmul.f32 %v410, %v376
        %v413 = vmul.f32 %v410, %v377
        %v414 = vmul.f32 %v410, %v378
        %s415 = sld [smem:[#allocation2 + $0x5a]]
        %v416 = vstv %s415
        %v417 = vmul.f32 %v416, %v375
        %v418 = vmul.f32 %v416, %v376
        %v419 = vmul.f32 %v416, %v377
        %v420 = vmul.f32 %v416, %v378
        %s421 = sld [smem:[#allocation2 + $0x69]]
        %v422 = vstv %s421
        %v423 = vmul.f32 %v422, %v375
        %v424 = vmul.f32 %v422, %v376
        %v425 = vmul.f32 %v422, %v377
        %v426 = vmul.f32 %v422, %v378
        %v427 = vld [vmem:[%s360] sm:$0xff]
        %v428 = vld [vmem:[%s360 + $0x8] sm:$0xff]
        %v429 = vld [vmem:[%s360 + $0x10] sm:$0xff]
        %v430 = vld [vmem:[%s360 + $0x18] sm:$0xff]
        %s431 = sld [smem:[#allocation2 + $0x1]]
        %v432 = vstv %s431
        %v433 = vmul.f32 %v432, %v427
        %v434 = vmul.f32 %v432, %v428
        %v435 = vmul.f32 %v432, %v429
        %v436 = vmul.f32 %v432, %v430
        %v437 = vadd.f32 %v381, %v433
        %v438 = vadd.f32 %v382, %v434
        %v439 = vadd.f32 %v383, %v435
        %v440 = vadd.f32 %v384, %v436
        %s441 = sld [smem:[#allocation2 + $0x10]]
        %v442 = vstv %s441
        %v443 = vmul.f32 %v442, %v427
        %v444 = vmul.f32 %v442, %v428
        %v445 = vmul.f32 %v442, %v429
        %v446 = vmul.f32 %v442, %v430
        %v447 = vadd.f32 %v387, %v443
        %v448 = vadd.f32 %v388, %v444
        %v449 = vadd.f32 %v389, %v445
        %v450 = vadd.f32 %v390, %v446
        %s451 = sld [smem:[#allocation2 + $0x1f]]
        %v452 = vstv %s451
        %v453 = vmul.f32 %v452, %v427
        %v454 = vmul.f32 %v452, %v428
        %v455 = vmul.f32 %v452, %v429
        %v456 = vmul.f32 %v452, %v430
        %v457 = vadd.f32 %v393, %v453
        %v458 = vadd.f32 %v394, %v454
        %v459 = vadd.f32 %v395, %v455
        %v460 = vadd.f32 %v396, %v456
        %s461 = sld [smem:[#allocation2 + $0x2e]]
        %v462 = vstv %s461
        %v463 = vmul.f32 %v462, %v427
        %v464 = vmul.f32 %v462, %v428
        %v465 = vmul.f32 %v462, %v429
        %v466 = vmul.f32 %v462, %v430
        %v467 = vadd.f32 %v399, %v463
        %v468 = vadd.f32 %v400, %v464
        %v469 = vadd.f32 %v401, %v465
        %v470 = vadd.f32 %v402, %v466
        %s471 = sld [smem:[#allocation2 + $0x3d]]
        %v472 = vstv %s471
        %v473 = vmul.f32 %v472, %v427
        %v474 = vmul.f32 %v472, %v428
        %v475 = vmul.f32 %v472, %v429
        %v476 = vmul.f32 %v472, %v430
        %v477 = vadd.f32 %v405, %v473
        %v478 = vadd.f32 %v406, %v474
        %v479 = vadd.f32 %v407, %v475
        %v480 = vadd.f32 %v408, %v476
        %s481 = sld [smem:[#allocation2 + $0x4c]]
        %v482 = vstv %s481
        %v483 = vmul.f32 %v482, %v427
        %v484 = vmul.f32 %v482, %v428
        %v485 = vmul.f32 %v482, %v429
        %v486 = vmul.f32 %v482, %v430
        %v487 = vadd.f32 %v411, %v483
        %v488 = vadd.f32 %v412, %v484
        %v489 = vadd.f32 %v413, %v485
        %v490 = vadd.f32 %v414, %v486
        %s491 = sld [smem:[#allocation2 + $0x5b]]
        %v492 = vstv %s491
        %v493 = vmul.f32 %v492, %v427
        %v494 = vmul.f32 %v492, %v428
        %v495 = vmul.f32 %v492, %v429
        %v496 = vmul.f32 %v492, %v430
        %v497 = vadd.f32 %v417, %v493
        %v498 = vadd.f32 %v418, %v494
        %v499 = vadd.f32 %v419, %v495
        %v500 = vadd.f32 %v420, %v496
        %s501 = sld [smem:[#allocation2 + $0x6a]]
        %v502 = vstv %s501
        %v503 = vmul.f32 %v502, %v427
        %v504 = vmul.f32 %v502, %v428
        %v505 = vmul.f32 %v502, %v429
        %v506 = vmul.f32 %v502, %v430
        %v507 = vadd.f32 %v423, %v503
        %v508 = vadd.f32 %v424, %v504
        %v509 = vadd.f32 %v425, %v505
        %v510 = vadd.f32 %v426, %v506
        %s511 = sld [smem:[#allocation2 + $0x2]]
        %v512 = vstv %s511
        %v513 = vmul.f32 %v512, %v375
        %v514 = vmul.f32 %v512, %v376
        %v515 = vmul.f32 %v512, %v377
        %v516 = vmul.f32 %v512, %v378
        %521 = vrot.lane.b32.xlu0 %v513, 127
        %v522 = vpop.permute.xlu0 %521
        %523 = vrot.lane.b32.xlu0 %v514, 127
        %v524 = vpop.permute.xlu0 %523
        %525 = vrot.lane.b32.xlu0 %v515, 127
        %v526 = vpop.permute.xlu0 %525
        %527 = vrot.lane.b32.xlu0 %v516, 127
        %v528 = vpop.permute.xlu0 %527
        %v533 = vadd.f32 %v437, %v522
        %v534 = vadd.f32 %v438, %v524
        %v535 = vadd.f32 %v439, %v526
        %v536 = vadd.f32 %v440, %v528
        %s537 = sld [smem:[#allocation2 + $0x11]]
        %v538 = vstv %s537
        %v539 = vmul.f32 %v538, %v375
        %v540 = vmul.f32 %v538, %v376
        %v541 = vmul.f32 %v538, %v377
        %v542 = vmul.f32 %v538, %v378
        %547 = vrot.lane.b32.xlu0 %v539, 127
        %v548 = vpop.permute.xlu0 %547
        %549 = vrot.lane.b32.xlu0 %v540, 127
        %v550 = vpop.permute.xlu0 %549
        %551 = vrot.lane.b32.xlu0 %v541, 127
        %v552 = vpop.permute.xlu0 %551
        %553 = vrot.lane.b32.xlu0 %v542, 127
        %v554 = vpop.permute.xlu0 %553
        %v559 = vadd.f32 %v447, %v548
        %v560 = vadd.f32 %v448, %v550
        %v561 = vadd.f32 %v449, %v552
        %v562 = vadd.f32 %v450, %v554
        %s563 = sld [smem:[#allocation2 + $0x20]]
        %v564 = vstv %s563
        %v565 = vmul.f32 %v564, %v375
        %v566 = vmul.f32 %v564, %v376
        %v567 = vmul.f32 %v564, %v377
        %v568 = vmul.f32 %v564, %v378
        %573 = vrot.lane.b32.xlu0 %v565, 127
        %v574 = vpop.permute.xlu0 %573
        %575 = vrot.lane.b32.xlu0 %v566, 127
        %v576 = vpop.permute.xlu0 %575
        %577 = vrot.lane.b32.xlu0 %v567, 127
        %v578 = vpop.permute.xlu0 %577
        %579 = vrot.lane.b32.xlu0 %v568, 127
        %v580 = vpop.permute.xlu0 %579
        %v585 = vadd.f32 %v457, %v574
        %v586 = vadd.f32 %v458, %v576
        %v587 = vadd.f32 %v459, %v578
        %v588 = vadd.f32 %v460, %v580
        %s589 = sld [smem:[#allocation2 + $0x2f]]
        %v590 = vstv %s589
        %v591 = vmul.f32 %v590, %v375
        %v592 = vmul.f32 %v590, %v376
        %v593 = vmul.f32 %v590, %v377
        %v594 = vmul.f32 %v590, %v378
        %599 = vrot.lane.b32.xlu0 %v591, 127
        %v600 = vpop.permute.xlu0 %599
        %601 = vrot.lane.b32.xlu0 %v592, 127
        %v602 = vpop.permute.xlu0 %601
        %603 = vrot.lane.b32.xlu0 %v593, 127
        %v604 = vpop.permute.xlu0 %603
        %605 = vrot.lane.b32.xlu0 %v594, 127
        %v606 = vpop.permute.xlu0 %605
        %v611 = vadd.f32 %v467, %v600
        %v612 = vadd.f32 %v468, %v602
        %v613 = vadd.f32 %v469, %v604
        %v614 = vadd.f32 %v470, %v606
        %s615 = sld [smem:[#allocation2 + $0x3e]]
        %v616 = vstv %s615
        %v617 = vmul.f32 %v616, %v375
        %v618 = vmul.f32 %v616, %v376
        %v619 = vmul.f32 %v616, %v377
        %v620 = vmul.f32 %v616, %v378
        %625 = vrot.lane.b32.xlu0 %v617, 127
        %v626 = vpop.permute.xlu0 %625
        %627 = vrot.lane.b32.xlu0 %v618, 127
        %v628 = vpop.permute.xlu0 %627
        %629 = vrot.lane.b32.xlu0 %v619, 127
        %v630 = vpop.permute.xlu0 %629
        %631 = vrot.lane.b32.xlu0 %v620, 127
        %v632 = vpop.permute.xlu0 %631
        %v637 = vadd.f32 %v477, %v626
        %v638 = vadd.f32 %v478, %v628
        %v639 = vadd.f32 %v479, %v630
        %v640 = vadd.f32 %v480, %v632
        %s641 = sld [smem:[#allocation2 + $0x4d]]
        %v642 = vstv %s641
        %v643 = vmul.f32 %v642, %v375
        %v644 = vmul.f32 %v642, %v376
        %v645 = vmul.f32 %v642, %v377
        %v646 = vmul.f32 %v642, %v378
        %651 = vrot.lane.b32.xlu0 %v643, 127
        %v652 = vpop.permute.xlu0 %651
        %653 = vrot.lane.b32.xlu0 %v644, 127
        %v654 = vpop.permute.xlu0 %653
        %655 = vrot.lane.b32.xlu0 %v645, 127
        %v656 = vpop.permute.xlu0 %655
        %657 = vrot.lane.b32.xlu0 %v646, 127
        %v658 = vpop.permute.xlu0 %657
        %v663 = vadd.f32 %v487, %v652
        %v664 = vadd.f32 %v488, %v654
        %v665 = vadd.f32 %v489, %v656
        %v666 = vadd.f32 %v490, %v658
        %s667 = sld [smem:[#allocation2 + $0x5c]]
        %v668 = vstv %s667
        %v669 = vmul.f32 %v668, %v375
        %v670 = vmul.f32 %v668, %v376
        %v671 = vmul.f32 %v668, %v377
        %v672 = vmul.f32 %v668, %v378
        %677 = vrot.lane.b32.xlu0 %v669, 127
        %v678 = vpop.permute.xlu0 %677
        %679 = vrot.lane.b32.xlu0 %v670, 127
        %v680 = vpop.permute.xlu0 %679
        %681 = vrot.lane.b32.xlu0 %v671, 127
        %v682 = vpop.permute.xlu0 %681
        %683 = vrot.lane.b32.xlu0 %v672, 127
        %v684 = vpop.permute.xlu0 %683
        %v689 = vadd.f32 %v497, %v678
        %v690 = vadd.f32 %v498, %v680
        %v691 = vadd.f32 %v499, %v682
        %v692 = vadd.f32 %v500, %v684
        %s693 = sld [smem:[#allocation2 + $0x6b]]
        %v694 = vstv %s693
        %v695 = vmul.f32 %v694, %v375
        %v696 = vmul.f32 %v694, %v376
        %v697 = vmul.f32 %v694, %v377
        %v698 = vmul.f32 %v694, %v378
        %703 = vrot.lane.b32.xlu0 %v695, 127
        %v704 = vpop.permute.xlu0 %703
        %705 = vrot.lane.b32.xlu0 %v696, 127
        %v706 = vpop.permute.xlu0 %705
        %707 = vrot.lane.b32.xlu0 %v697, 127
        %v708 = vpop.permute.xlu0 %707
        %709 = vrot.lane.b32.xlu0 %v698, 127
        %v710 = vpop.permute.xlu0 %709
        %v715 = vadd.f32 %v507, %v704
        %v716 = vadd.f32 %v508, %v706
        %v717 = vadd.f32 %v509, %v708
        %v718 = vadd.f32 %v510, %v710
        %s719 = sld [smem:[#allocation2 + $0x3]]
        %v720 = vstv %s719
        %v721 = vmul.f32 %v720, %v427
        %v722 = vmul.f32 %v720, %v428
        %v723 = vmul.f32 %v720, %v429
        %v724 = vmul.f32 %v720, %v430
        %729 = vrot.lane.b32.xlu0 %v721, 127
        %v730 = vpop.permute.xlu0 %729
        %731 = vrot.lane.b32.xlu0 %v722, 127
        %v732 = vpop.permute.xlu0 %731
        %733 = vrot.lane.b32.xlu0 %v723, 127
        %v734 = vpop.permute.xlu0 %733
        %735 = vrot.lane.b32.xlu0 %v724, 127
        %v736 = vpop.permute.xlu0 %735
        %v741 = vadd.f32 %v533, %v730
        %v742 = vadd.f32 %v534, %v732
        %v743 = vadd.f32 %v535, %v734
        %v744 = vadd.f32 %v536, %v736
        %s745 = sld [smem:[#allocation2 + $0x12]]
        %v746 = vstv %s745
        %v747 = vmul.f32 %v746, %v427
        %v748 = vmul.f32 %v746, %v428
        %v749 = vmul.f32 %v746, %v429
        %v750 = vmul.f32 %v746, %v430
        %755 = vrot.lane.b32.xlu0 %v747, 127
        %v756 = vpop.permute.xlu0 %755
        %757 = vrot.lane.b32.xlu0 %v748, 127
        %v758 = vpop.permute.xlu0 %757
        %759 = vrot.lane.b32.xlu0 %v749, 127
        %v760 = vpop.permute.xlu0 %759
        %761 = vrot.lane.b32.xlu0 %v750, 127
        %v762 = vpop.permute.xlu0 %761
        %v767 = vadd.f32 %v559, %v756
        %v768 = vadd.f32 %v560, %v758
        %v769 = vadd.f32 %v561, %v760
        %v770 = vadd.f32 %v562, %v762
        %s771 = sld [smem:[#allocation2 + $0x21]]
        %v772 = vstv %s771
        %v773 = vmul.f32 %v772, %v427
        %v774 = vmul.f32 %v772, %v428
        %v775 = vmul.f32 %v772, %v429
        %v776 = vmul.f32 %v772, %v430
        %781 = vrot.lane.b32.xlu0 %v773, 127
        %v782 = vpop.permute.xlu0 %781
        %783 = vrot.lane.b32.xlu0 %v774, 127
        %v784 = vpop.permute.xlu0 %783
        %785 = vrot.lane.b32.xlu0 %v775, 127
        %v786 = vpop.permute.xlu0 %785
        %787 = vrot.lane.b32.xlu0 %v776, 127
        %v788 = vpop.permute.xlu0 %787
        %v793 = vadd.f32 %v585, %v782
        %v794 = vadd.f32 %v586, %v784
        %v795 = vadd.f32 %v587, %v786
        %v796 = vadd.f32 %v588, %v788
        %s797 = sld [smem:[#allocation2 + $0x30]]
        %v798 = vstv %s797
        %v799 = vmul.f32 %v798, %v427
        %v800 = vmul.f32 %v798, %v428
        %v801 = vmul.f32 %v798, %v429
        %v802 = vmul.f32 %v798, %v430
        %807 = vrot.lane.b32.xlu0 %v799, 127
        %v808 = vpop.permute.xlu0 %807
        %809 = vrot.lane.b32.xlu0 %v800, 127
        %v810 = vpop.permute.xlu0 %809
        %811 = vrot.lane.b32.xlu0 %v801, 127
        %v812 = vpop.permute.xlu0 %811
        %813 = vrot.lane.b32.xlu0 %v802, 127
        %v814 = vpop.permute.xlu0 %813
        %v819 = vadd.f32 %v611, %v808
        %v820 = vadd.f32 %v612, %v810
        %v821 = vadd.f32 %v613, %v812
        %v822 = vadd.f32 %v614, %v814
        %s823 = sld [smem:[#allocation2 + $0x3f]]
        %v824 = vstv %s823
        %v825 = vmul.f32 %v824, %v427
        %v826 = vmul.f32 %v824, %v428
        %v827 = vmul.f32 %v824, %v429
        %v828 = vmul.f32 %v824, %v430
        %833 = vrot.lane.b32.xlu0 %v825, 127
        %v834 = vpop.permute.xlu0 %833
        %835 = vrot.lane.b32.xlu0 %v826, 127
        %v836 = vpop.permute.xlu0 %835
        %837 = vrot.lane.b32.xlu0 %v827, 127
        %v838 = vpop.permute.xlu0 %837
        %839 = vrot.lane.b32.xlu0 %v828, 127
        %v840 = vpop.permute.xlu0 %839
        %v845 = vadd.f32 %v637, %v834
        %v846 = vadd.f32 %v638, %v836
        %v847 = vadd.f32 %v639, %v838
        %v848 = vadd.f32 %v640, %v840
        %s849 = sld [smem:[#allocation2 + $0x4e]]
        %v850 = vstv %s849
        %v851 = vmul.f32 %v850, %v427
        %v852 = vmul.f32 %v850, %v428
        %v853 = vmul.f32 %v850, %v429
        %v854 = vmul.f32 %v850, %v430
        %859 = vrot.lane.b32.xlu0 %v851, 127
        %v860 = vpop.permute.xlu0 %859
        %861 = vrot.lane.b32.xlu0 %v852, 127
        %v862 = vpop.permute.xlu0 %861
        %863 = vrot.lane.b32.xlu0 %v853, 127
        %v864 = vpop.permute.xlu0 %863
        %865 = vrot.lane.b32.xlu0 %v854, 127
        %v866 = vpop.permute.xlu0 %865
        %v871 = vadd.f32 %v663, %v860
        %v872 = vadd.f32 %v664, %v862
        %v873 = vadd.f32 %v665, %v864
        %v874 = vadd.f32 %v666, %v866
        %s875 = sld [smem:[#allocation2 + $0x5d]]
        %v876 = vstv %s875
        %v877 = vmul.f32 %v876, %v427
        %v878 = vmul.f32 %v876, %v428
        %v879 = vmul.f32 %v876, %v429
        %v880 = vmul.f32 %v876, %v430
        %885 = vrot.lane.b32.xlu0 %v877, 127
        %v886 = vpop.permute.xlu0 %885
        %887 = vrot.lane.b32.xlu0 %v878, 127
        %v888 = vpop.permute.xlu0 %887
        %889 = vrot.lane.b32.xlu0 %v879, 127
        %v890 = vpop.permute.xlu0 %889
        %891 = vrot.lane.b32.xlu0 %v880, 127
        %v892 = vpop.permute.xlu0 %891
        %v897 = vadd.f32 %v689, %v886
        %v898 = vadd.f32 %v690, %v888
        %v899 = vadd.f32 %v691, %v890
        %v900 = vadd.f32 %v692, %v892
        %s901 = sld [smem:[#allocation2 + $0x6c]]
        %v902 = vstv %s901
        %v903 = vmul.f32 %v902, %v427
        %v904 = vmul.f32 %v902, %v428
        %v905 = vmul.f32 %v902, %v429
        %v906 = vmul.f32 %v902, %v430
        %911 = vrot.lane.b32.xlu0 %v903, 127
        %v912 = vpop.permute.xlu0 %911
        %913 = vrot.lane.b32.xlu0 %v904, 127
        %v914 = vpop.permute.xlu0 %913
        %915 = vrot.lane.b32.xlu0 %v905, 127
        %v916 = vpop.permute.xlu0 %915
        %917 = vrot.lane.b32.xlu0 %v906, 127
        %v918 = vpop.permute.xlu0 %917
        %v923 = vadd.f32 %v715, %v912
        %v924 = vadd.f32 %v716, %v914
        %v925 = vadd.f32 %v717, %v916
        %v926 = vadd.f32 %v718, %v918
        %s927 = sld [smem:[#allocation2 + $0x4]]
        %v928 = vstv %s927
        %v929 = vmul.f32 %v928, %v375
        %v930 = vmul.f32 %v928, %v376
        %v931 = vmul.f32 %v928, %v377
        %v932 = vmul.f32 %v928, %v378
        %937 = vrot.lane.b32.xlu0 %v929, 126
        %v938 = vpop.permute.xlu0 %937
        %939 = vrot.lane.b32.xlu0 %v930, 126
        %v940 = vpop.permute.xlu0 %939
        %941 = vrot.lane.b32.xlu0 %v931, 126
        %v942 = vpop.permute.xlu0 %941
        %943 = vrot.lane.b32.xlu0 %v932, 126
        %v944 = vpop.permute.xlu0 %943
        %v949 = vadd.f32 %v741, %v938
        %v950 = vadd.f32 %v742, %v940
        %v951 = vadd.f32 %v743, %v942
        %v952 = vadd.f32 %v744, %v944
        %s953 = sld [smem:[#allocation2 + $0x13]]
        %v954 = vstv %s953
        %v955 = vmul.f32 %v954, %v375
        %v956 = vmul.f32 %v954, %v376
        %v957 = vmul.f32 %v954, %v377
        %v958 = vmul.f32 %v954, %v378
        %963 = vrot.lane.b32.xlu0 %v955, 126
        %v964 = vpop.permute.xlu0 %963
        %965 = vrot.lane.b32.xlu0 %v956, 126
        %v966 = vpop.permute.xlu0 %965
        %967 = vrot.lane.b32.xlu0 %v957, 126
        %v968 = vpop.permute.xlu0 %967
        %969 = vrot.lane.b32.xlu0 %v958, 126
        %v970 = vpop.permute.xlu0 %969
        %v975 = vadd.f32 %v767, %v964
        %v976 = vadd.f32 %v768, %v966
        %v977 = vadd.f32 %v769, %v968
        %v978 = vadd.f32 %v770, %v970
        %s979 = sld [smem:[#allocation2 + $0x22]]
        %v980 = vstv %s979
        %v981 = vmul.f32 %v980, %v375
        %v982 = vmul.f32 %v980, %v376
        %v983 = vmul.f32 %v980, %v377
        %v984 = vmul.f32 %v980, %v378
        %989 = vrot.lane.b32.xlu0 %v981, 126
        %v990 = vpop.permute.xlu0 %989
        %991 = vrot.lane.b32.xlu0 %v982, 126
        %v992 = vpop.permute.xlu0 %991
        %993 = vrot.lane.b32.xlu0 %v983, 126
        %v994 = vpop.permute.xlu0 %993
        %995 = vrot.lane.b32.xlu0 %v984, 126
        %v996 = vpop.permute.xlu0 %995
        %v1001 = vadd.f32 %v793, %v990
        %v1002 = vadd.f32 %v794, %v992
        %v1003 = vadd.f32 %v795, %v994
        %v1004 = vadd.f32 %v796, %v996
        %s1005 = sld [smem:[#allocation2 + $0x31]]
        %v1006 = vstv %s1005
        %v1007 = vmul.f32 %v1006, %v375
        %v1008 = vmul.f32 %v1006, %v376
        %v1009 = vmul.f32 %v1006, %v377
        %v1010 = vmul.f32 %v1006, %v378
        %1015 = vrot.lane.b32.xlu0 %v1007, 126
        %v1016 = vpop.permute.xlu0 %1015
        %1017 = vrot.lane.b32.xlu0 %v1008, 126
        %v1018 = vpop.permute.xlu0 %1017
        %1019 = vrot.lane.b32.xlu0 %v1009, 126
        %v1020 = vpop.permute.xlu0 %1019
        %1021 = vrot.lane.b32.xlu0 %v1010, 126
        %v1022 = vpop.permute.xlu0 %1021
        %v1027 = vadd.f32 %v819, %v1016
        %v1028 = vadd.f32 %v820, %v1018
        %v1029 = vadd.f32 %v821, %v1020
        %v1030 = vadd.f32 %v822, %v1022
        %s1031 = sld [smem:[#allocation2 + $0x40]]
        %v1032 = vstv %s1031
        %v1033 = vmul.f32 %v1032, %v375
        %v1034 = vmul.f32 %v1032, %v376
        %v1035 = vmul.f32 %v1032, %v377
        %v1036 = vmul.f32 %v1032, %v378
        %1041 = vrot.lane.b32.xlu0 %v1033, 126
        %v1042 = vpop.permute.xlu0 %1041
        %1043 = vrot.lane.b32.xlu0 %v1034, 126
        %v1044 = vpop.permute.xlu0 %1043
        %1045 = vrot.lane.b32.xlu0 %v1035, 126
        %v1046 = vpop.permute.xlu0 %1045
        %1047 = vrot.lane.b32.xlu0 %v1036, 126
        %v1048 = vpop.permute.xlu0 %1047
        %v1053 = vadd.f32 %v845, %v1042
        %v1054 = vadd.f32 %v846, %v1044
        %v1055 = vadd.f32 %v847, %v1046
        %v1056 = vadd.f32 %v848, %v1048
        %s1057 = sld [smem:[#allocation2 + $0x4f]]
        %v1058 = vstv %s1057
        %v1059 = vmul.f32 %v1058, %v375
        %v1060 = vmul.f32 %v1058, %v376
        %v1061 = vmul.f32 %v1058, %v377
        %v1062 = vmul.f32 %v1058, %v378
        %1067 = vrot.lane.b32.xlu0 %v1059, 126
        %v1068 = vpop.permute.xlu0 %1067
        %1069 = vrot.lane.b32.xlu0 %v1060, 126
        %v1070 = vpop.permute.xlu0 %1069
        %1071 = vrot.lane.b32.xlu0 %v1061, 126
        %v1072 = vpop.permute.xlu0 %1071
        %1073 = vrot.lane.b32.xlu0 %v1062, 126
        %v1074 = vpop.permute.xlu0 %1073
        %v1079 = vadd.f32 %v871, %v1068
        %v1080 = vadd.f32 %v872, %v1070
        %v1081 = vadd.f32 %v873, %v1072
        %v1082 = vadd.f32 %v874, %v1074
        %s1083 = sld [smem:[#allocation2 + $0x5e]]
        %v1084 = vstv %s1083
        %v1085 = vmul.f32 %v1084, %v375
        %v1086 = vmul.f32 %v1084, %v376
        %v1087 = vmul.f32 %v1084, %v377
        %v1088 = vmul.f32 %v1084, %v378
        %1093 = vrot.lane.b32.xlu0 %v1085, 126
        %v1094 = vpop.permute.xlu0 %1093
        %1095 = vrot.lane.b32.xlu0 %v1086, 126
        %v1096 = vpop.permute.xlu0 %1095
        %1097 = vrot.lane.b32.xlu0 %v1087, 126
        %v1098 = vpop.permute.xlu0 %1097
        %1099 = vrot.lane.b32.xlu0 %v1088, 126
        %v1100 = vpop.permute.xlu0 %1099
        %v1105 = vadd.f32 %v897, %v1094
        %v1106 = vadd.f32 %v898, %v1096
        %v1107 = vadd.f32 %v899, %v1098
        %v1108 = vadd.f32 %v900, %v1100
        %s1109 = sld [smem:[#allocation2 + $0x6d]]
        %v1110 = vstv %s1109
        %v1111 = vmul.f32 %v1110, %v375
        %v1112 = vmul.f32 %v1110, %v376
        %v1113 = vmul.f32 %v1110, %v377
        %v1114 = vmul.f32 %v1110, %v378
        %1119 = vrot.lane.b32.xlu0 %v1111, 126
        %v1120 = vpop.permute.xlu0 %1119
        %1121 = vrot.lane.b32.xlu0 %v1112, 126
        %v1122 = vpop.permute.xlu0 %1121
        %1123 = vrot.lane.b32.xlu0 %v1113, 126
        %v1124 = vpop.permute.xlu0 %1123
        %1125 = vrot.lane.b32.xlu0 %v1114, 126
        %v1126 = vpop.permute.xlu0 %1125
        %v1131 = vadd.f32 %v923, %v1120
        %v1132 = vadd.f32 %v924, %v1122
        %v1133 = vadd.f32 %v925, %v1124
        %v1134 = vadd.f32 %v926, %v1126
        %v1135 = vld [vmem:[%s365] sm:$0xff]
        %v1136 = vld [vmem:[%s365 + $0x8] sm:$0xff]
        %v1137 = vld [vmem:[%s365 + $0x10] sm:$0xff]
        %v1138 = vld [vmem:[%s365 + $0x18] sm:$0xff]
        %s1139 = sld [smem:[#allocation2 + $0x5]]
        %v1140 = vstv %s1139
        %v1141 = vmul.f32 %v1140, %v1135
        %v1142 = vmul.f32 %v1140, %v1136
        %v1143 = vmul.f32 %v1140, %v1137
        %v1144 = vmul.f32 %v1140, %v1138
        %v1145 = vadd.f32 %v949, %v1141
        %v1146 = vadd.f32 %v950, %v1142
        %v1147 = vadd.f32 %v951, %v1143
        %v1148 = vadd.f32 %v952, %v1144
        %s1149 = sld [smem:[#allocation2 + $0x14]]
        %v1150 = vstv %s1149
        %v1151 = vmul.f32 %v1150, %v1135
        %v1152 = vmul.f32 %v1150, %v1136
        %v1153 = vmul.f32 %v1150, %v1137
        %v1154 = vmul.f32 %v1150, %v1138
        %v1155 = vadd.f32 %v975, %v1151
        %v1156 = vadd.f32 %v976, %v1152
        %v1157 = vadd.f32 %v977, %v1153
        %v1158 = vadd.f32 %v978, %v1154
        %s1159 = sld [smem:[#allocation2 + $0x23]]
        %v1160 = vstv %s1159
        %v1161 = vmul.f32 %v1160, %v1135
        %v1162 = vmul.f32 %v1160, %v1136
        %v1163 = vmul.f32 %v1160, %v1137
        %v1164 = vmul.f32 %v1160, %v1138
        %v1165 = vadd.f32 %v1001, %v1161
        %v1166 = vadd.f32 %v1002, %v1162
        %v1167 = vadd.f32 %v1003, %v1163
        %v1168 = vadd.f32 %v1004, %v1164
        %s1169 = sld [smem:[#allocation2 + $0x32]]
        %v1170 = vstv %s1169
        %v1171 = vmul.f32 %v1170, %v1135
        %v1172 = vmul.f32 %v1170, %v1136
        %v1173 = vmul.f32 %v1170, %v1137
        %v1174 = vmul.f32 %v1170, %v1138
        %v1175 = vadd.f32 %v1027, %v1171
        %v1176 = vadd.f32 %v1028, %v1172
        %v1177 = vadd.f32 %v1029, %v1173
        %v1178 = vadd.f32 %v1030, %v1174
        %s1179 = sld [smem:[#allocation2 + $0x41]]
        %v1180 = vstv %s1179
        %v1181 = vmul.f32 %v1180, %v1135
        %v1182 = vmul.f32 %v1180, %v1136
        %v1183 = vmul.f32 %v1180, %v1137
        %v1184 = vmul.f32 %v1180, %v1138
        %v1185 = vadd.f32 %v1053, %v1181
        %v1186 = vadd.f32 %v1054, %v1182
        %v1187 = vadd.f32 %v1055, %v1183
        %v1188 = vadd.f32 %v1056, %v1184
        %s1189 = sld [smem:[#allocation2 + $0x50]]
        %v1190 = vstv %s1189
        %v1191 = vmul.f32 %v1190, %v1135
        %v1192 = vmul.f32 %v1190, %v1136
        %v1193 = vmul.f32 %v1190, %v1137
        %v1194 = vmul.f32 %v1190, %v1138
        %v1195 = vadd.f32 %v1079, %v1191
        %v1196 = vadd.f32 %v1080, %v1192
        %v1197 = vadd.f32 %v1081, %v1193
        %v1198 = vadd.f32 %v1082, %v1194
        %s1199 = sld [smem:[#allocation2 + $0x5f]]
        %v1200 = vstv %s1199
        %v1201 = vmul.f32 %v1200, %v1135
        %v1202 = vmul.f32 %v1200, %v1136
        %v1203 = vmul.f32 %v1200, %v1137
        %v1204 = vmul.f32 %v1200, %v1138
        %v1205 = vadd.f32 %v1105, %v1201
        %v1206 = vadd.f32 %v1106, %v1202
        %v1207 = vadd.f32 %v1107, %v1203
        %v1208 = vadd.f32 %v1108, %v1204
        %s1209 = sld [smem:[#allocation2 + $0x6e]]
        %v1210 = vstv %s1209
        %v1211 = vmul.f32 %v1210, %v1135
        %v1212 = vmul.f32 %v1210, %v1136
        %v1213 = vmul.f32 %v1210, %v1137
        %v1214 = vmul.f32 %v1210, %v1138
        %v1215 = vadd.f32 %v1131, %v1211
        %v1216 = vadd.f32 %v1132, %v1212
        %v1217 = vadd.f32 %v1133, %v1213
        %v1218 = vadd.f32 %v1134, %v1214
        %v1219 = vld [vmem:[%s370] sm:$0xff]
        %v1220 = vld [vmem:[%s370 + $0x8] sm:$0xff]
        %v1221 = vld [vmem:[%s370 + $0x10] sm:$0xff]
        %v1222 = vld [vmem:[%s370 + $0x18] sm:$0xff]
        %s1223 = sld [smem:[#allocation2 + $0x6]]
        %v1224 = vstv %s1223
        %v1225 = vmul.f32 %v1224, %v1219
        %v1226 = vmul.f32 %v1224, %v1220
        %v1227 = vmul.f32 %v1224, %v1221
        %v1228 = vmul.f32 %v1224, %v1222
        %v1229 = vadd.f32 %v1145, %v1225
        %v1230 = vadd.f32 %v1146, %v1226
        %v1231 = vadd.f32 %v1147, %v1227
        %v1232 = vadd.f32 %v1148, %v1228
        %s1233 = sld [smem:[#allocation2 + $0x15]]
        %v1234 = vstv %s1233
        %v1235 = vmul.f32 %v1234, %v1219
        %v1236 = vmul.f32 %v1234, %v1220
        %v1237 = vmul.f32 %v1234, %v1221
        %v1238 = vmul.f32 %v1234, %v1222
        %v1239 = vadd.f32 %v1155, %v1235
        %v1240 = vadd.f32 %v1156, %v1236
        %v1241 = vadd.f32 %v1157, %v1237
        %v1242 = vadd.f32 %v1158, %v1238
        %s1243 = sld [smem:[#allocation2 + $0x24]]
        %v1244 = vstv %s1243
        %v1245 = vmul.f32 %v1244, %v1219
        %v1246 = vmul.f32 %v1244, %v1220
        %v1247 = vmul.f32 %v1244, %v1221
        %v1248 = vmul.f32 %v1244, %v1222
        %v1249 = vadd.f32 %v1165, %v1245
        %v1250 = vadd.f32 %v1166, %v1246
        %v1251 = vadd.f32 %v1167, %v1247
        %v1252 = vadd.f32 %v1168, %v1248
        %s1253 = sld [smem:[#allocation2 + $0x33]]
        %v1254 = vstv %s1253
        %v1255 = vmul.f32 %v1254, %v1219
        %v1256 = vmul.f32 %v1254, %v1220
        %v1257 = vmul.f32 %v1254, %v1221
        %v1258 = vmul.f32 %v1254, %v1222
        %v1259 = vadd.f32 %v1175, %v1255
        %v1260 = vadd.f32 %v1176, %v1256
        %v1261 = vadd.f32 %v1177, %v1257
        %v1262 = vadd.f32 %v1178, %v1258
        %s1263 = sld [smem:[#allocation2 + $0x42]]
        %v1264 = vstv %s1263
        %v1265 = vmul.f32 %v1264, %v1219
        %v1266 = vmul.f32 %v1264, %v1220
        %v1267 = vmul.f32 %v1264, %v1221
        %v1268 = vmul.f32 %v1264, %v1222
        %v1269 = vadd.f32 %v1185, %v1265
        %v1270 = vadd.f32 %v1186, %v1266
        %v1271 = vadd.f32 %v1187, %v1267
        %v1272 = vadd.f32 %v1188, %v1268
        %s1273 = sld [smem:[#allocation2 + $0x51]]
        %v1274 = vstv %s1273
        %v1275 = vmul.f32 %v1274, %v1219
        %v1276 = vmul.f32 %v1274, %v1220
        %v1277 = vmul.f32 %v1274, %v1221
        %v1278 = vmul.f32 %v1274, %v1222
        %v1279 = vadd.f32 %v1195, %v1275
        %v1280 = vadd.f32 %v1196, %v1276
        %v1281 = vadd.f32 %v1197, %v1277
        %v1282 = vadd.f32 %v1198, %v1278
        %s1283 = sld [smem:[#allocation2 + $0x60]]
        %v1284 = vstv %s1283
        %v1285 = vmul.f32 %v1284, %v1219
        %v1286 = vmul.f32 %v1284, %v1220
        %v1287 = vmul.f32 %v1284, %v1221
        %v1288 = vmul.f32 %v1284, %v1222
        %v1289 = vadd.f32 %v1205, %v1285
        %v1290 = vadd.f32 %v1206, %v1286
        %v1291 = vadd.f32 %v1207, %v1287
        %v1292 = vadd.f32 %v1208, %v1288
        %s1293 = sld [smem:[#allocation2 + $0x6f]]
        %v1294 = vstv %s1293
        %v1295 = vmul.f32 %v1294, %v1219
        %v1296 = vmul.f32 %v1294, %v1220
        %v1297 = vmul.f32 %v1294, %v1221
        %v1298 = vmul.f32 %v1294, %v1222
        %v1299 = vadd.f32 %v1215, %v1295
        %v1300 = vadd.f32 %v1216, %v1296
        %v1301 = vadd.f32 %v1217, %v1297
        %v1302 = vadd.f32 %v1218, %v1298
        %s1303 = sld [smem:[#allocation2 + $0x7]]
        %v1304 = vstv %s1303
        %v1305 = vmul.f32 %v1304, %v1135
        %v1306 = vmul.f32 %v1304, %v1136
        %v1307 = vmul.f32 %v1304, %v1137
        %v1308 = vmul.f32 %v1304, %v1138
        %1313 = vrot.lane.b32.xlu0 %v1305, 127
        %v1314 = vpop.permute.xlu0 %1313
        %1315 = vrot.lane.b32.xlu0 %v1306, 127
        %v1316 = vpop.permute.xlu0 %1315
        %1317 = vrot.lane.b32.xlu0 %v1307, 127
        %v1318 = vpop.permute.xlu0 %1317
        %1319 = vrot.lane.b32.xlu0 %v1308, 127
        %v1320 = vpop.permute.xlu0 %1319
        %v1325 = vadd.f32 %v1229, %v1314
        %v1326 = vadd.f32 %v1230, %v1316
        %v1327 = vadd.f32 %v1231, %v1318
        %v1328 = vadd.f32 %v1232, %v1320
        %s1329 = sld [smem:[#allocation2 + $0x16]]
        %v1330 = vstv %s1329
        %v1331 = vmul.f32 %v1330, %v1135
        %v1332 = vmul.f32 %v1330, %v1136
        %v1333 = vmul.f32 %v1330, %v1137
        %v1334 = vmul.f32 %v1330, %v1138
        %1339 = vrot.lane.b32.xlu0 %v1331, 127
        %v1340 = vpop.permute.xlu0 %1339
        %1341 = vrot.lane.b32.xlu0 %v1332, 127
        %v1342 = vpop.permute.xlu0 %1341
        %1343 = vrot.lane.b32.xlu0 %v1333, 127
        %v1344 = vpop.permute.xlu0 %1343
        %1345 = vrot.lane.b32.xlu0 %v1334, 127
        %v1346 = vpop.permute.xlu0 %1345
        %v1351 = vadd.f32 %v1239, %v1340
        %v1352 = vadd.f32 %v1240, %v1342
        %v1353 = vadd.f32 %v1241, %v1344
        %v1354 = vadd.f32 %v1242, %v1346
        %s1355 = sld [smem:[#allocation2 + $0x25]]
        %v1356 = vstv %s1355
        %v1357 = vmul.f32 %v1356, %v1135
        %v1358 = vmul.f32 %v1356, %v1136
        %v1359 = vmul.f32 %v1356, %v1137
        %v1360 = vmul.f32 %v1356, %v1138
        %1365 = vrot.lane.b32.xlu0 %v1357, 127
        %v1366 = vpop.permute.xlu0 %1365
        %1367 = vrot.lane.b32.xlu0 %v1358, 127
        %v1368 = vpop.permute.xlu0 %1367
        %1369 = vrot.lane.b32.xlu0 %v1359, 127
        %v1370 = vpop.permute.xlu0 %1369
        %1371 = vrot.lane.b32.xlu0 %v1360, 127
        %v1372 = vpop.permute.xlu0 %1371
        %v1377 = vadd.f32 %v1249, %v1366
        %v1378 = vadd.f32 %v1250, %v1368
        %v1379 = vadd.f32 %v1251, %v1370
        %v1380 = vadd.f32 %v1252, %v1372
        %s1381 = sld [smem:[#allocation2 + $0x34]]
        %v1382 = vstv %s1381
        %v1383 = vmul.f32 %v1382, %v1135
        %v1384 = vmul.f32 %v1382, %v1136
        %v1385 = vmul.f32 %v1382, %v1137
        %v1386 = vmul.f32 %v1382, %v1138
        %1391 = vrot.lane.b32.xlu0 %v1383, 127
        %v1392 = vpop.permute.xlu0 %1391
        %1393 = vrot.lane.b32.xlu0 %v1384, 127
        %v1394 = vpop.permute.xlu0 %1393
        %1395 = vrot.lane.b32.xlu0 %v1385, 127
        %v1396 = vpop.permute.xlu0 %1395
        %1397 = vrot.lane.b32.xlu0 %v1386, 127
        %v1398 = vpop.permute.xlu0 %1397
        %v1403 = vadd.f32 %v1259, %v1392
        %v1404 = vadd.f32 %v1260, %v1394
        %v1405 = vadd.f32 %v1261, %v1396
        %v1406 = vadd.f32 %v1262, %v1398
        %s1407 = sld [smem:[#allocation2 + $0x43]]
        %v1408 = vstv %s1407
        %v1409 = vmul.f32 %v1408, %v1135
        %v1410 = vmul.f32 %v1408, %v1136
        %v1411 = vmul.f32 %v1408, %v1137
        %v1412 = vmul.f32 %v1408, %v1138
        %1417 = vrot.lane.b32.xlu0 %v1409, 127
        %v1418 = vpop.permute.xlu0 %1417
        %1419 = vrot.lane.b32.xlu0 %v1410, 127
        %v1420 = vpop.permute.xlu0 %1419
        %1421 = vrot.lane.b32.xlu0 %v1411, 127
        %v1422 = vpop.permute.xlu0 %1421
        %1423 = vrot.lane.b32.xlu0 %v1412, 127
        %v1424 = vpop.permute.xlu0 %1423
        %v1429 = vadd.f32 %v1269, %v1418
        %v1430 = vadd.f32 %v1270, %v1420
        %v1431 = vadd.f32 %v1271, %v1422
        %v1432 = vadd.f32 %v1272, %v1424
        %s1433 = sld [smem:[#allocation2 + $0x52]]
        %v1434 = vstv %s1433
        %v1435 = vmul.f32 %v1434, %v1135
        %v1436 = vmul.f32 %v1434, %v1136
        %v1437 = vmul.f32 %v1434, %v1137
        %v1438 = vmul.f32 %v1434, %v1138
        %1443 = vrot.lane.b32.xlu0 %v1435, 127
        %v1444 = vpop.permute.xlu0 %1443
        %1445 = vrot.lane.b32.xlu0 %v1436, 127
        %v1446 = vpop.permute.xlu0 %1445
        %1447 = vrot.lane.b32.xlu0 %v1437, 127
        %v1448 = vpop.permute.xlu0 %1447
        %1449 = vrot.lane.b32.xlu0 %v1438, 127
        %v1450 = vpop.permute.xlu0 %1449
        %v1455 = vadd.f32 %v1279, %v1444
        %v1456 = vadd.f32 %v1280, %v1446
        %v1457 = vadd.f32 %v1281, %v1448
        %v1458 = vadd.f32 %v1282, %v1450
        %s1459 = sld [smem:[#allocation2 + $0x61]]
        %v1460 = vstv %s1459
        %v1461 = vmul.f32 %v1460, %v1135
        %v1462 = vmul.f32 %v1460, %v1136
        %v1463 = vmul.f32 %v1460, %v1137
        %v1464 = vmul.f32 %v1460, %v1138
        %1469 = vrot.lane.b32.xlu0 %v1461, 127
        %v1470 = vpop.permute.xlu0 %1469
        %1471 = vrot.lane.b32.xlu0 %v1462, 127
        %v1472 = vpop.permute.xlu0 %1471
        %1473 = vrot.lane.b32.xlu0 %v1463, 127
        %v1474 = vpop.permute.xlu0 %1473
        %1475 = vrot.lane.b32.xlu0 %v1464, 127
        %v1476 = vpop.permute.xlu0 %1475
        %v1481 = vadd.f32 %v1289, %v1470
        %v1482 = vadd.f32 %v1290, %v1472
        %v1483 = vadd.f32 %v1291, %v1474
        %v1484 = vadd.f32 %v1292, %v1476
        %s1485 = sld [smem:[#allocation2 + $0x70]]
        %v1486 = vstv %s1485
        %v1487 = vmul.f32 %v1486, %v1135
        %v1488 = vmul.f32 %v1486, %v1136
        %v1489 = vmul.f32 %v1486, %v1137
        %v1490 = vmul.f32 %v1486, %v1138
        %1495 = vrot.lane.b32.xlu0 %v1487, 127
        %v1496 = vpop.permute.xlu0 %1495
        %1497 = vrot.lane.b32.xlu0 %v1488, 127
        %v1498 = vpop.permute.xlu0 %1497
        %1499 = vrot.lane.b32.xlu0 %v1489, 127
        %v1500 = vpop.permute.xlu0 %1499
        %1501 = vrot.lane.b32.xlu0 %v1490, 127
        %v1502 = vpop.permute.xlu0 %1501
        %v1507 = vadd.f32 %v1299, %v1496
        %v1508 = vadd.f32 %v1300, %v1498
        %v1509 = vadd.f32 %v1301, %v1500
        %v1510 = vadd.f32 %v1302, %v1502
        %s1511 = sld [smem:[#allocation2 + $0x8]]
        %v1512 = vstv %s1511
        %v1513 = vmul.f32 %v1512, %v1219
        %v1514 = vmul.f32 %v1512, %v1220
        %v1515 = vmul.f32 %v1512, %v1221
        %v1516 = vmul.f32 %v1512, %v1222
        %1521 = vrot.lane.b32.xlu0 %v1513, 127
        %v1522 = vpop.permute.xlu0 %1521
        %1523 = vrot.lane.b32.xlu0 %v1514, 127
        %v1524 = vpop.permute.xlu0 %1523
        %1525 = vrot.lane.b32.xlu0 %v1515, 127
        %v1526 = vpop.permute.xlu0 %1525
        %1527 = vrot.lane.b32.xlu0 %v1516, 127
        %v1528 = vpop.permute.xlu0 %1527
        %v1533 = vadd.f32 %v1325, %v1522
        %v1534 = vadd.f32 %v1326, %v1524
        %v1535 = vadd.f32 %v1327, %v1526
        %v1536 = vadd.f32 %v1328, %v1528
        %s1537 = sld [smem:[#allocation2 + $0x17]]
        %v1538 = vstv %s1537
        %v1539 = vmul.f32 %v1538, %v1219
        %v1540 = vmul.f32 %v1538, %v1220
        %v1541 = vmul.f32 %v1538, %v1221
        %v1542 = vmul.f32 %v1538, %v1222
        %1547 = vrot.lane.b32.xlu0 %v1539, 127
        %v1548 = vpop.permute.xlu0 %1547
        %1549 = vrot.lane.b32.xlu0 %v1540, 127
        %v1550 = vpop.permute.xlu0 %1549
        %1551 = vrot.lane.b32.xlu0 %v1541, 127
        %v1552 = vpop.permute.xlu0 %1551
        %1553 = vrot.lane.b32.xlu0 %v1542, 127
        %v1554 = vpop.permute.xlu0 %1553
        %v1559 = vadd.f32 %v1351, %v1548
        %v1560 = vadd.f32 %v1352, %v1550
        %v1561 = vadd.f32 %v1353, %v1552
        %v1562 = vadd.f32 %v1354, %v1554
        %s1563 = sld [smem:[#allocation2 + $0x26]]
        %v1564 = vstv %s1563
        %v1565 = vmul.f32 %v1564, %v1219
        %v1566 = vmul.f32 %v1564, %v1220
        %v1567 = vmul.f32 %v1564, %v1221
        %v1568 = vmul.f32 %v1564, %v1222
        %1573 = vrot.lane.b32.xlu0 %v1565, 127
        %v1574 = vpop.permute.xlu0 %1573
        %1575 = vrot.lane.b32.xlu0 %v1566, 127
        %v1576 = vpop.permute.xlu0 %1575
        %1577 = vrot.lane.b32.xlu0 %v1567, 127
        %v1578 = vpop.permute.xlu0 %1577
        %1579 = vrot.lane.b32.xlu0 %v1568, 127
        %v1580 = vpop.permute.xlu0 %1579
        %v1585 = vadd.f32 %v1377, %v1574
        %v1586 = vadd.f32 %v1378, %v1576
        %v1587 = vadd.f32 %v1379, %v1578
        %v1588 = vadd.f32 %v1380, %v1580
        %s1589 = sld [smem:[#allocation2 + $0x35]]
        %v1590 = vstv %s1589
        %v1591 = vmul.f32 %v1590, %v1219
        %v1592 = vmul.f32 %v1590, %v1220
        %v1593 = vmul.f32 %v1590, %v1221
        %v1594 = vmul.f32 %v1590, %v1222
        %1599 = vrot.lane.b32.xlu0 %v1591, 127
        %v1600 = vpop.permute.xlu0 %1599
        %1601 = vrot.lane.b32.xlu0 %v1592, 127
        %v1602 = vpop.permute.xlu0 %1601
        %1603 = vrot.lane.b32.xlu0 %v1593, 127
        %v1604 = vpop.permute.xlu0 %1603
        %1605 = vrot.lane.b32.xlu0 %v1594, 127
        %v1606 = vpop.permute.xlu0 %1605
        %v1611 = vadd.f32 %v1403, %v1600
        %v1612 = vadd.f32 %v1404, %v1602
        %v1613 = vadd.f32 %v1405, %v1604
        %v1614 = vadd.f32 %v1406, %v1606
        %s1615 = sld [smem:[#allocation2 + $0x44]]
        %v1616 = vstv %s1615
        %v1617 = vmul.f32 %v1616, %v1219
        %v1618 = vmul.f32 %v1616, %v1220
        %v1619 = vmul.f32 %v1616, %v1221
        %v1620 = vmul.f32 %v1616, %v1222
        %1625 = vrot.lane.b32.xlu0 %v1617, 127
        %v1626 = vpop.permute.xlu0 %1625
        %1627 = vrot.lane.b32.xlu0 %v1618, 127
        %v1628 = vpop.permute.xlu0 %1627
        %1629 = vrot.lane.b32.xlu0 %v1619, 127
        %v1630 = vpop.permute.xlu0 %1629
        %1631 = vrot.lane.b32.xlu0 %v1620, 127
        %v1632 = vpop.permute.xlu0 %1631
        %v1637 = vadd.f32 %v1429, %v1626
        %v1638 = vadd.f32 %v1430, %v1628
        %v1639 = vadd.f32 %v1431, %v1630
        %v1640 = vadd.f32 %v1432, %v1632
        %s1641 = sld [smem:[#allocation2 + $0x53]]
        %v1642 = vstv %s1641
        %v1643 = vmul.f32 %v1642, %v1219
        %v1644 = vmul.f32 %v1642, %v1220
        %v1645 = vmul.f32 %v1642, %v1221
        %v1646 = vmul.f32 %v1642, %v1222
        %1651 = vrot.lane.b32.xlu0 %v1643, 127
        %v1652 = vpop.permute.xlu0 %1651
        %1653 = vrot.lane.b32.xlu0 %v1644, 127
        %v1654 = vpop.permute.xlu0 %1653
        %1655 = vrot.lane.b32.xlu0 %v1645, 127
        %v1656 = vpop.permute.xlu0 %1655
        %1657 = vrot.lane.b32.xlu0 %v1646, 127
        %v1658 = vpop.permute.xlu0 %1657
        %v1663 = vadd.f32 %v1455, %v1652
        %v1664 = vadd.f32 %v1456, %v1654
        %v1665 = vadd.f32 %v1457, %v1656
        %v1666 = vadd.f32 %v1458, %v1658
        %s1667 = sld [smem:[#allocation2 + $0x62]]
        %v1668 = vstv %s1667
        %v1669 = vmul.f32 %v1668, %v1219
        %v1670 = vmul.f32 %v1668, %v1220
        %v1671 = vmul.f32 %v1668, %v1221
        %v1672 = vmul.f32 %v1668, %v1222
        %1677 = vrot.lane.b32.xlu0 %v1669, 127
        %v1678 = vpop.permute.xlu0 %1677
        %1679 = vrot.lane.b32.xlu0 %v1670, 127
        %v1680 = vpop.permute.xlu0 %1679
        %1681 = vrot.lane.b32.xlu0 %v1671, 127
        %v1682 = vpop.permute.xlu0 %1681
        %1683 = vrot.lane.b32.xlu0 %v1672, 127
        %v1684 = vpop.permute.xlu0 %1683
        %v1689 = vadd.f32 %v1481, %v1678
        %v1690 = vadd.f32 %v1482, %v1680
        %v1691 = vadd.f32 %v1483, %v1682
        %v1692 = vadd.f32 %v1484, %v1684
        %s1693 = sld [smem:[#allocation2 + $0x71]]
        %v1694 = vstv %s1693
        %v1695 = vmul.f32 %v1694, %v1219
        %v1696 = vmul.f32 %v1694, %v1220
        %v1697 = vmul.f32 %v1694, %v1221
        %v1698 = vmul.f32 %v1694, %v1222
        %1703 = vrot.lane.b32.xlu0 %v1695, 127
        %v1704 = vpop.permute.xlu0 %1703
        %1705 = vrot.lane.b32.xlu0 %v1696, 127
        %v1706 = vpop.permute.xlu0 %1705
        %1707 = vrot.lane.b32.xlu0 %v1697, 127
        %v1708 = vpop.permute.xlu0 %1707
        %1709 = vrot.lane.b32.xlu0 %v1698, 127
        %v1710 = vpop.permute.xlu0 %1709
        %v1715 = vadd.f32 %v1507, %v1704
        %v1716 = vadd.f32 %v1508, %v1706
        %v1717 = vadd.f32 %v1509, %v1708
        %v1718 = vadd.f32 %v1510, %v1710
        %s1719 = sld [smem:[#allocation2 + $0x9]]
        %v1720 = vstv %s1719
        %v1721 = vmul.f32 %v1720, %v1135
        %v1722 = vmul.f32 %v1720, %v1136
        %v1723 = vmul.f32 %v1720, %v1137
        %v1724 = vmul.f32 %v1720, %v1138
        %1729 = vrot.lane.b32.xlu0 %v1721, 126
        %v1730 = vpop.permute.xlu0 %1729
        %1731 = vrot.lane.b32.xlu0 %v1722, 126
        %v1732 = vpop.permute.xlu0 %1731
        %1733 = vrot.lane.b32.xlu0 %v1723, 126
        %v1734 = vpop.permute.xlu0 %1733
        %1735 = vrot.lane.b32.xlu0 %v1724, 126
        %v1736 = vpop.permute.xlu0 %1735
        %v1741 = vadd.f32 %v1533, %v1730
        %v1742 = vadd.f32 %v1534, %v1732
        %v1743 = vadd.f32 %v1535, %v1734
        %v1744 = vadd.f32 %v1536, %v1736
        %s1745 = sld [smem:[#allocation2 + $0x18]]
        %v1746 = vstv %s1745
        %v1747 = vmul.f32 %v1746, %v1135
        %v1748 = vmul.f32 %v1746, %v1136
        %v1749 = vmul.f32 %v1746, %v1137
        %v1750 = vmul.f32 %v1746, %v1138
        %1755 = vrot.lane.b32.xlu0 %v1747, 126
        %v1756 = vpop.permute.xlu0 %1755
        %1757 = vrot.lane.b32.xlu0 %v1748, 126
        %v1758 = vpop.permute.xlu0 %1757
        %1759 = vrot.lane.b32.xlu0 %v1749, 126
        %v1760 = vpop.permute.xlu0 %1759
        %1761 = vrot.lane.b32.xlu0 %v1750, 126
        %v1762 = vpop.permute.xlu0 %1761
        %v1767 = vadd.f32 %v1559, %v1756
        %v1768 = vadd.f32 %v1560, %v1758
        %v1769 = vadd.f32 %v1561, %v1760
        %v1770 = vadd.f32 %v1562, %v1762
        %s1771 = sld [smem:[#allocation2 + $0x27]]
        %v1772 = vstv %s1771
        %v1773 = vmul.f32 %v1772, %v1135
        %v1774 = vmul.f32 %v1772, %v1136
        %v1775 = vmul.f32 %v1772, %v1137
        %v1776 = vmul.f32 %v1772, %v1138
        %1781 = vrot.lane.b32.xlu0 %v1773, 126
        %v1782 = vpop.permute.xlu0 %1781
        %1783 = vrot.lane.b32.xlu0 %v1774, 126
        %v1784 = vpop.permute.xlu0 %1783
        %1785 = vrot.lane.b32.xlu0 %v1775, 126
        %v1786 = vpop.permute.xlu0 %1785
        %1787 = vrot.lane.b32.xlu0 %v1776, 126
        %v1788 = vpop.permute.xlu0 %1787
        %v1793 = vadd.f32 %v1585, %v1782
        %v1794 = vadd.f32 %v1586, %v1784
        %v1795 = vadd.f32 %v1587, %v1786
        %v1796 = vadd.f32 %v1588, %v1788
        %s1797 = sld [smem:[#allocation2 + $0x36]]
        %v1798 = vstv %s1797
        %v1799 = vmul.f32 %v1798, %v1135
        %v1800 = vmul.f32 %v1798, %v1136
        %v1801 = vmul.f32 %v1798, %v1137
        %v1802 = vmul.f32 %v1798, %v1138
        %1807 = vrot.lane.b32.xlu0 %v1799, 126
        %v1808 = vpop.permute.xlu0 %1807
        %1809 = vrot.lane.b32.xlu0 %v1800, 126
        %v1810 = vpop.permute.xlu0 %1809
        %1811 = vrot.lane.b32.xlu0 %v1801, 126
        %v1812 = vpop.permute.xlu0 %1811
        %1813 = vrot.lane.b32.xlu0 %v1802, 126
        %v1814 = vpop.permute.xlu0 %1813
        %v1819 = vadd.f32 %v1611, %v1808
        %v1820 = vadd.f32 %v1612, %v1810
        %v1821 = vadd.f32 %v1613, %v1812
        %v1822 = vadd.f32 %v1614, %v1814
        %s1823 = sld [smem:[#allocation2 + $0x45]]
        %v1824 = vstv %s1823
        %v1825 = vmul.f32 %v1824, %v1135
        %v1826 = vmul.f32 %v1824, %v1136
        %v1827 = vmul.f32 %v1824, %v1137
        %v1828 = vmul.f32 %v1824, %v1138
        %1833 = vrot.lane.b32.xlu0 %v1825, 126
        %v1834 = vpop.permute.xlu0 %1833
        %1835 = vrot.lane.b32.xlu0 %v1826, 126
        %v1836 = vpop.permute.xlu0 %1835
        %1837 = vrot.lane.b32.xlu0 %v1827, 126
        %v1838 = vpop.permute.xlu0 %1837
        %1839 = vrot.lane.b32.xlu0 %v1828, 126
        %v1840 = vpop.permute.xlu0 %1839
        %v1845 = vadd.f32 %v1637, %v1834
        %v1846 = vadd.f32 %v1638, %v1836
        %v1847 = vadd.f32 %v1639, %v1838
        %v1848 = vadd.f32 %v1640, %v1840
        %s1849 = sld [smem:[#allocation2 + $0x54]]
        %v1850 = vstv %s1849
        %v1851 = vmul.f32 %v1850, %v1135
        %v1852 = vmul.f32 %v1850, %v1136
        %v1853 = vmul.f32 %v1850, %v1137
        %v1854 = vmul.f32 %v1850, %v1138
        %1859 = vrot.lane.b32.xlu0 %v1851, 126
        %v1860 = vpop.permute.xlu0 %1859
        %1861 = vrot.lane.b32.xlu0 %v1852, 126
        %v1862 = vpop.permute.xlu0 %1861
        %1863 = vrot.lane.b32.xlu0 %v1853, 126
        %v1864 = vpop.permute.xlu0 %1863
        %1865 = vrot.lane.b32.xlu0 %v1854, 126
        %v1866 = vpop.permute.xlu0 %1865
        %v1871 = vadd.f32 %v1663, %v1860
        %v1872 = vadd.f32 %v1664, %v1862
        %v1873 = vadd.f32 %v1665, %v1864
        %v1874 = vadd.f32 %v1666, %v1866
        %s1875 = sld [smem:[#allocation2 + $0x63]]
        %v1876 = vstv %s1875
        %v1877 = vmul.f32 %v1876, %v1135
        %v1878 = vmul.f32 %v1876, %v1136
        %v1879 = vmul.f32 %v1876, %v1137
        %v1880 = vmul.f32 %v1876, %v1138
        %1885 = vrot.lane.b32.xlu0 %v1877, 126
        %v1886 = vpop.permute.xlu0 %1885
        %1887 = vrot.lane.b32.xlu0 %v1878, 126
        %v1888 = vpop.permute.xlu0 %1887
        %1889 = vrot.lane.b32.xlu0 %v1879, 126
        %v1890 = vpop.permute.xlu0 %1889
        %1891 = vrot.lane.b32.xlu0 %v1880, 126
        %v1892 = vpop.permute.xlu0 %1891
        %v1897 = vadd.f32 %v1689, %v1886
        %v1898 = vadd.f32 %v1690, %v1888
        %v1899 = vadd.f32 %v1691, %v1890
        %v1900 = vadd.f32 %v1692, %v1892
        %s1901 = sld [smem:[#allocation2 + $0x72]]
        %v1902 = vstv %s1901
        %v1903 = vmul.f32 %v1902, %v1135
        %v1904 = vmul.f32 %v1902, %v1136
        %v1905 = vmul.f32 %v1902, %v1137
        %v1906 = vmul.f32 %v1902, %v1138
        %1911 = vrot.lane.b32.xlu0 %v1903, 126
        %v1912 = vpop.permute.xlu0 %1911
        %1913 = vrot.lane.b32.xlu0 %v1904, 126
        %v1914 = vpop.permute.xlu0 %1913
        %1915 = vrot.lane.b32.xlu0 %v1905, 126
        %v1916 = vpop.permute.xlu0 %1915
        %1917 = vrot.lane.b32.xlu0 %v1906, 126
        %v1918 = vpop.permute.xlu0 %1917
        %v1923 = vadd.f32 %v1715, %v1912
        %v1924 = vadd.f32 %v1716, %v1914
        %v1925 = vadd.f32 %v1717, %v1916
        %v1926 = vadd.f32 %v1718, %v1918
        %v1927 = vld [vmem:[%s355 + $0x1] sm:$0xff]
        %v1928 = vld [vmem:[%s355 + $0x9] sm:$0xff]
        %v1929 = vld [vmem:[%s355 + $0x11] sm:$0xff]
        %v1930 = vld [vmem:[%s355 + $0x19] sm:$0xff]
        %s1931 = sld [smem:[#allocation2 + $0xa]]
        %v1932 = vstv %s1931
        %v1933 = vmul.f32 %v1932, %v1927
        %v1934 = vmul.f32 %v1932, %v1928
        %v1935 = vmul.f32 %v1932, %v1929
        %v1936 = vmul.f32 %v1932, %v1930
        %v1937 = vadd.f32 %v1741, %v1933
        %v1938 = vadd.f32 %v1742, %v1934
        %v1939 = vadd.f32 %v1743, %v1935
        %v1940 = vadd.f32 %v1744, %v1936
        %s1941 = sld [smem:[#allocation2 + $0x19]]
        %v1942 = vstv %s1941
        %v1943 = vmul.f32 %v1942, %v1927
        %v1944 = vmul.f32 %v1942, %v1928
        %v1945 = vmul.f32 %v1942, %v1929
        %v1946 = vmul.f32 %v1942, %v1930
        %v1947 = vadd.f32 %v1767, %v1943
        %v1948 = vadd.f32 %v1768, %v1944
        %v1949 = vadd.f32 %v1769, %v1945
        %v1950 = vadd.f32 %v1770, %v1946
        %s1951 = sld [smem:[#allocation2 + $0x28]]
        %v1952 = vstv %s1951
        %v1953 = vmul.f32 %v1952, %v1927
        %v1954 = vmul.f32 %v1952, %v1928
        %v1955 = vmul.f32 %v1952, %v1929
        %v1956 = vmul.f32 %v1952, %v1930
        %v1957 = vadd.f32 %v1793, %v1953
        %v1958 = vadd.f32 %v1794, %v1954
        %v1959 = vadd.f32 %v1795, %v1955
        %v1960 = vadd.f32 %v1796, %v1956
        %s1961 = sld [smem:[#allocation2 + $0x37]]
        %v1962 = vstv %s1961
        %v1963 = vmul.f32 %v1962, %v1927
        %v1964 = vmul.f32 %v1962, %v1928
        %v1965 = vmul.f32 %v1962, %v1929
        %v1966 = vmul.f32 %v1962, %v1930
        %v1967 = vadd.f32 %v1819, %v1963
        %v1968 = vadd.f32 %v1820, %v1964
        %v1969 = vadd.f32 %v1821, %v1965
        %v1970 = vadd.f32 %v1822, %v1966
        %s1971 = sld [smem:[#allocation2 + $0x46]]
        %v1972 = vstv %s1971
        %v1973 = vmul.f32 %v1972, %v1927
        %v1974 = vmul.f32 %v1972, %v1928
        %v1975 = vmul.f32 %v1972, %v1929
        %v1976 = vmul.f32 %v1972, %v1930
        %v1977 = vadd.f32 %v1845, %v1973
        %v1978 = vadd.f32 %v1846, %v1974
        %v1979 = vadd.f32 %v1847, %v1975
        %v1980 = vadd.f32 %v1848, %v1976
        %s1981 = sld [smem:[#allocation2 + $0x55]]
        %v1982 = vstv %s1981
        %v1983 = vmul.f32 %v1982, %v1927
        %v1984 = vmul.f32 %v1982, %v1928
        %v1985 = vmul.f32 %v1982, %v1929
        %v1986 = vmul.f32 %v1982, %v1930
        %v1987 = vadd.f32 %v1871, %v1983
        %v1988 = vadd.f32 %v1872, %v1984
        %v1989 = vadd.f32 %v1873, %v1985
        %v1990 = vadd.f32 %v1874, %v1986
        %s1991 = sld [smem:[#allocation2 + $0x64]]
        %v1992 = vstv %s1991
        %v1993 = vmul.f32 %v1992, %v1927
        %v1994 = vmul.f32 %v1992, %v1928
        %v1995 = vmul.f32 %v1992, %v1929
        %v1996 = vmul.f32 %v1992, %v1930
        %v1997 = vadd.f32 %v1897, %v1993
        %v1998 = vadd.f32 %v1898, %v1994
        %v1999 = vadd.f32 %v1899, %v1995
        %v2000 = vadd.f32 %v1900, %v1996
        %s2001 = sld [smem:[#allocation2 + $0x73]]
        %v2002 = vstv %s2001
        %v2003 = vmul.f32 %v2002, %v1927
        %v2004 = vmul.f32 %v2002, %v1928
        %v2005 = vmul.f32 %v2002, %v1929
        %v2006 = vmul.f32 %v2002, %v1930
        %v2007 = vadd.f32 %v1923, %v2003
        %v2008 = vadd.f32 %v1924, %v2004
        %v2009 = vadd.f32 %v1925, %v2005
        %v2010 = vadd.f32 %v1926, %v2006
        %v2011 = vld [vmem:[%s360 + $0x1] sm:$0xff]
        %v2012 = vld [vmem:[%s360 + $0x9] sm:$0xff]
        %v2013 = vld [vmem:[%s360 + $0x11] sm:$0xff]
        %v2014 = vld [vmem:[%s360 + $0x19] sm:$0xff]
        %s2015 = sld [smem:[#allocation2 + $0xb]]
        %v2016 = vstv %s2015
        %v2017 = vmul.f32 %v2016, %v2011
        %v2018 = vmul.f32 %v2016, %v2012
        %v2019 = vmul.f32 %v2016, %v2013
        %v2020 = vmul.f32 %v2016, %v2014
        %v2021 = vadd.f32 %v1937, %v2017
        %v2022 = vadd.f32 %v1938, %v2018
        %v2023 = vadd.f32 %v1939, %v2019
        %v2024 = vadd.f32 %v1940, %v2020
        %s2025 = sld [smem:[#allocation2 + $0x1a]]
        %v2026 = vstv %s2025
        %v2027 = vmul.f32 %v2026, %v2011
        %v2028 = vmul.f32 %v2026, %v2012
        %v2029 = vmul.f32 %v2026, %v2013
        %v2030 = vmul.f32 %v2026, %v2014
        %v2031 = vadd.f32 %v1947, %v2027
        %v2032 = vadd.f32 %v1948, %v2028
        %v2033 = vadd.f32 %v1949, %v2029
        %v2034 = vadd.f32 %v1950, %v2030
        %s2035 = sld [smem:[#allocation2 + $0x29]]
        %v2036 = vstv %s2035
        %v2037 = vmul.f32 %v2036, %v2011
        %v2038 = vmul.f32 %v2036, %v2012
        %v2039 = vmul.f32 %v2036, %v2013
        %v2040 = vmul.f32 %v2036, %v2014
        %v2041 = vadd.f32 %v1957, %v2037
        %v2042 = vadd.f32 %v1958, %v2038
        %v2043 = vadd.f32 %v1959, %v2039
        %v2044 = vadd.f32 %v1960, %v2040
        %s2045 = sld [smem:[#allocation2 + $0x38]]
        %v2046 = vstv %s2045
        %v2047 = vmul.f32 %v2046, %v2011
        %v2048 = vmul.f32 %v2046, %v2012
        %v2049 = vmul.f32 %v2046, %v2013
        %v2050 = vmul.f32 %v2046, %v2014
        %v2051 = vadd.f32 %v1967, %v2047
        %v2052 = vadd.f32 %v1968, %v2048
        %v2053 = vadd.f32 %v1969, %v2049
        %v2054 = vadd.f32 %v1970, %v2050
        %s2055 = sld [smem:[#allocation2 + $0x47]]
        %v2056 = vstv %s2055
        %v2057 = vmul.f32 %v2056, %v2011
        %v2058 = vmul.f32 %v2056, %v2012
        %v2059 = vmul.f32 %v2056, %v2013
        %v2060 = vmul.f32 %v2056, %v2014
        %v2061 = vadd.f32 %v1977, %v2057
        %v2062 = vadd.f32 %v1978, %v2058
        %v2063 = vadd.f32 %v1979, %v2059
        %v2064 = vadd.f32 %v1980, %v2060
        %s2065 = sld [smem:[#allocation2 + $0x56]]
        %v2066 = vstv %s2065
        %v2067 = vmul.f32 %v2066, %v2011
        %v2068 = vmul.f32 %v2066, %v2012
        %v2069 = vmul.f32 %v2066, %v2013
        %v2070 = vmul.f32 %v2066, %v2014
        %v2071 = vadd.f32 %v1987, %v2067
        %v2072 = vadd.f32 %v1988, %v2068
        %v2073 = vadd.f32 %v1989, %v2069
        %v2074 = vadd.f32 %v1990, %v2070
        %s2075 = sld [smem:[#allocation2 + $0x65]]
        %v2076 = vstv %s2075
        %v2077 = vmul.f32 %v2076, %v2011
        %v2078 = vmul.f32 %v2076, %v2012
        %v2079 = vmul.f32 %v2076, %v2013
        %v2080 = vmul.f32 %v2076, %v2014
        %v2081 = vadd.f32 %v1997, %v2077
        %v2082 = vadd.f32 %v1998, %v2078
        %v2083 = vadd.f32 %v1999, %v2079
        %v2084 = vadd.f32 %v2000, %v2080
        %s2085 = sld [smem:[#allocation2 + $0x74]]
        %v2086 = vstv %s2085
        %v2087 = vmul.f32 %v2086, %v2011
        %v2088 = vmul.f32 %v2086, %v2012
        %v2089 = vmul.f32 %v2086, %v2013
        %v2090 = vmul.f32 %v2086, %v2014
        %v2091 = vadd.f32 %v2007, %v2087
        %v2092 = vadd.f32 %v2008, %v2088
        %v2093 = vadd.f32 %v2009, %v2089
        %v2094 = vadd.f32 %v2010, %v2090
        %s2095 = sld [smem:[#allocation2 + $0xc]]
        %v2096 = vstv %s2095
        %v2097 = vmul.f32 %v2096, %v1927
        %v2098 = vmul.f32 %v2096, %v1928
        %v2099 = vmul.f32 %v2096, %v1929
        %v2100 = vmul.f32 %v2096, %v1930
        %2105 = vrot.lane.b32.xlu0 %v2097, 127
        %v2106 = vpop.permute.xlu0 %2105
        %2107 = vrot.lane.b32.xlu0 %v2098, 127
        %v2108 = vpop.permute.xlu0 %2107
        %2109 = vrot.lane.b32.xlu0 %v2099, 127
        %v2110 = vpop.permute.xlu0 %2109
        %2111 = vrot.lane.b32.xlu0 %v2100, 127
        %v2112 = vpop.permute.xlu0 %2111
        %v2117 = vadd.f32 %v2021, %v2106
        %v2118 = vadd.f32 %v2022, %v2108
        %v2119 = vadd.f32 %v2023, %v2110
        %v2120 = vadd.f32 %v2024, %v2112
        %s2121 = sld [smem:[#allocation2 + $0x1b]]
        %v2122 = vstv %s2121
        %v2123 = vmul.f32 %v2122, %v1927
        %v2124 = vmul.f32 %v2122, %v1928
        %v2125 = vmul.f32 %v2122, %v1929
        %v2126 = vmul.f32 %v2122, %v1930
        %2131 = vrot.lane.b32.xlu0 %v2123, 127
        %v2132 = vpop.permute.xlu0 %2131
        %2133 = vrot.lane.b32.xlu0 %v2124, 127
        %v2134 = vpop.permute.xlu0 %2133
        %2135 = vrot.lane.b32.xlu0 %v2125, 127
        %v2136 = vpop.permute.xlu0 %2135
        %2137 = vrot.lane.b32.xlu0 %v2126, 127
        %v2138 = vpop.permute.xlu0 %2137
        %v2143 = vadd.f32 %v2031, %v2132
        %v2144 = vadd.f32 %v2032, %v2134
        %v2145 = vadd.f32 %v2033, %v2136
        %v2146 = vadd.f32 %v2034, %v2138
        %s2147 = sld [smem:[#allocation2 + $0x2a]]
        %v2148 = vstv %s2147
        %v2149 = vmul.f32 %v2148, %v1927
        %v2150 = vmul.f32 %v2148, %v1928
        %v2151 = vmul.f32 %v2148, %v1929
        %v2152 = vmul.f32 %v2148, %v1930
        %2157 = vrot.lane.b32.xlu0 %v2149, 127
        %v2158 = vpop.permute.xlu0 %2157
        %2159 = vrot.lane.b32.xlu0 %v2150, 127
        %v2160 = vpop.permute.xlu0 %2159
        %2161 = vrot.lane.b32.xlu0 %v2151, 127
        %v2162 = vpop.permute.xlu0 %2161
        %2163 = vrot.lane.b32.xlu0 %v2152, 127
        %v2164 = vpop.permute.xlu0 %2163
        %v2169 = vadd.f32 %v2041, %v2158
        %v2170 = vadd.f32 %v2042, %v2160
        %v2171 = vadd.f32 %v2043, %v2162
        %v2172 = vadd.f32 %v2044, %v2164
        %s2173 = sld [smem:[#allocation2 + $0x39]]
        %v2174 = vstv %s2173
        %v2175 = vmul.f32 %v2174, %v1927
        %v2176 = vmul.f32 %v2174, %v1928
        %v2177 = vmul.f32 %v2174, %v1929
        %v2178 = vmul.f32 %v2174, %v1930
        %2183 = vrot.lane.b32.xlu0 %v2175, 127
        %v2184 = vpop.permute.xlu0 %2183
        %2185 = vrot.lane.b32.xlu0 %v2176, 127
        %v2186 = vpop.permute.xlu0 %2185
        %2187 = vrot.lane.b32.xlu0 %v2177, 127
        %v2188 = vpop.permute.xlu0 %2187
        %2189 = vrot.lane.b32.xlu0 %v2178, 127
        %v2190 = vpop.permute.xlu0 %2189
        %v2195 = vadd.f32 %v2051, %v2184
        %v2196 = vadd.f32 %v2052, %v2186
        %v2197 = vadd.f32 %v2053, %v2188
        %v2198 = vadd.f32 %v2054, %v2190
        %s2199 = sld [smem:[#allocation2 + $0x48]]
        %v2200 = vstv %s2199
        %v2201 = vmul.f32 %v2200, %v1927
        %v2202 = vmul.f32 %v2200, %v1928
        %v2203 = vmul.f32 %v2200, %v1929
        %v2204 = vmul.f32 %v2200, %v1930
        %2209 = vrot.lane.b32.xlu0 %v2201, 127
        %v2210 = vpop.permute.xlu0 %2209
        %2211 = vrot.lane.b32.xlu0 %v2202, 127
        %v2212 = vpop.permute.xlu0 %2211
        %2213 = vrot.lane.b32.xlu0 %v2203, 127
        %v2214 = vpop.permute.xlu0 %2213
        %2215 = vrot.lane.b32.xlu0 %v2204, 127
        %v2216 = vpop.permute.xlu0 %2215
        %v2221 = vadd.f32 %v2061, %v2210
        %v2222 = vadd.f32 %v2062, %v2212
        %v2223 = vadd.f32 %v2063, %v2214
        %v2224 = vadd.f32 %v2064, %v2216
        %s2225 = sld [smem:[#allocation2 + $0x57]]
        %v2226 = vstv %s2225
        %v2227 = vmul.f32 %v2226, %v1927
        %v2228 = vmul.f32 %v2226, %v1928
        %v2229 = vmul.f32 %v2226, %v1929
        %v2230 = vmul.f32 %v2226, %v1930
        %2235 = vrot.lane.b32.xlu0 %v2227, 127
        %v2236 = vpop.permute.xlu0 %2235
        %2237 = vrot.lane.b32.xlu0 %v2228, 127
        %v2238 = vpop.permute.xlu0 %2237
        %2239 = vrot.lane.b32.xlu0 %v2229, 127
        %v2240 = vpop.permute.xlu0 %2239
        %2241 = vrot.lane.b32.xlu0 %v2230, 127
        %v2242 = vpop.permute.xlu0 %2241
        %v2247 = vadd.f32 %v2071, %v2236
        %v2248 = vadd.f32 %v2072, %v2238
        %v2249 = vadd.f32 %v2073, %v2240
        %v2250 = vadd.f32 %v2074, %v2242
        %s2251 = sld [smem:[#allocation2 + $0x66]]
        %v2252 = vstv %s2251
        %v2253 = vmul.f32 %v2252, %v1927
        %v2254 = vmul.f32 %v2252, %v1928
        %v2255 = vmul.f32 %v2252, %v1929
        %v2256 = vmul.f32 %v2252, %v1930
        %2261 = vrot.lane.b32.xlu0 %v2253, 127
        %v2262 = vpop.permute.xlu0 %2261
        %2263 = vrot.lane.b32.xlu0 %v2254, 127
        %v2264 = vpop.permute.xlu0 %2263
        %2265 = vrot.lane.b32.xlu0 %v2255, 127
        %v2266 = vpop.permute.xlu0 %2265
        %2267 = vrot.lane.b32.xlu0 %v2256, 127
        %v2268 = vpop.permute.xlu0 %2267
        %v2273 = vadd.f32 %v2081, %v2262
        %v2274 = vadd.f32 %v2082, %v2264
        %v2275 = vadd.f32 %v2083, %v2266
        %v2276 = vadd.f32 %v2084, %v2268
        %s2277 = sld [smem:[#allocation2 + $0x75]]
        %v2278 = vstv %s2277
        %v2279 = vmul.f32 %v2278, %v1927
        %v2280 = vmul.f32 %v2278, %v1928
        %v2281 = vmul.f32 %v2278, %v1929
        %v2282 = vmul.f32 %v2278, %v1930
        %2287 = vrot.lane.b32.xlu0 %v2279, 127
        %v2288 = vpop.permute.xlu0 %2287
        %2289 = vrot.lane.b32.xlu0 %v2280, 127
        %v2290 = vpop.permute.xlu0 %2289
        %2291 = vrot.lane.b32.xlu0 %v2281, 127
        %v2292 = vpop.permute.xlu0 %2291
        %2293 = vrot.lane.b32.xlu0 %v2282, 127
        %v2294 = vpop.permute.xlu0 %2293
        %v2299 = vadd.f32 %v2091, %v2288
        %v2300 = vadd.f32 %v2092, %v2290
        %v2301 = vadd.f32 %v2093, %v2292
        %v2302 = vadd.f32 %v2094, %v2294
        %s2303 = sld [smem:[#allocation2 + $0xd]]
        %v2304 = vstv %s2303
        %v2305 = vmul.f32 %v2304, %v2011
        %v2306 = vmul.f32 %v2304, %v2012
        %v2307 = vmul.f32 %v2304, %v2013
        %v2308 = vmul.f32 %v2304, %v2014
        %2313 = vrot.lane.b32.xlu0 %v2305, 127
        %v2314 = vpop.permute.xlu0 %2313
        %2315 = vrot.lane.b32.xlu0 %v2306, 127
        %v2316 = vpop.permute.xlu0 %2315
        %2317 = vrot.lane.b32.xlu0 %v2307, 127
        %v2318 = vpop.permute.xlu0 %2317
        %2319 = vrot.lane.b32.xlu0 %v2308, 127
        %v2320 = vpop.permute.xlu0 %2319
        %v2325 = vadd.f32 %v2117, %v2314
        %v2326 = vadd.f32 %v2118, %v2316
        %v2327 = vadd.f32 %v2119, %v2318
        %v2328 = vadd.f32 %v2120, %v2320
        %s2329 = sld [smem:[#allocation2 + $0x1c]]
        %v2330 = vstv %s2329
        %v2331 = vmul.f32 %v2330, %v2011
        %v2332 = vmul.f32 %v2330, %v2012
        %v2333 = vmul.f32 %v2330, %v2013
        %v2334 = vmul.f32 %v2330, %v2014
        %2339 = vrot.lane.b32.xlu0 %v2331, 127
        %v2340 = vpop.permute.xlu0 %2339
        %2341 = vrot.lane.b32.xlu0 %v2332, 127
        %v2342 = vpop.permute.xlu0 %2341
        %2343 = vrot.lane.b32.xlu0 %v2333, 127
        %v2344 = vpop.permute.xlu0 %2343
        %2345 = vrot.lane.b32.xlu0 %v2334, 127
        %v2346 = vpop.permute.xlu0 %2345
        %v2351 = vadd.f32 %v2143, %v2340
        %v2352 = vadd.f32 %v2144, %v2342
        %v2353 = vadd.f32 %v2145, %v2344
        %v2354 = vadd.f32 %v2146, %v2346
        %s2355 = sld [smem:[#allocation2 + $0x2b]]
        %v2356 = vstv %s2355
        %v2357 = vmul.f32 %v2356, %v2011
        %v2358 = vmul.f32 %v2356, %v2012
        %v2359 = vmul.f32 %v2356, %v2013
        %v2360 = vmul.f32 %v2356, %v2014
        %2365 = vrot.lane.b32.xlu0 %v2357, 127
        %v2366 = vpop.permute.xlu0 %2365
        %2367 = vrot.lane.b32.xlu0 %v2358, 127
        %v2368 = vpop.permute.xlu0 %2367
        %2369 = vrot.lane.b32.xlu0 %v2359, 127
        %v2370 = vpop.permute.xlu0 %2369
        %2371 = vrot.lane.b32.xlu0 %v2360, 127
        %v2372 = vpop.permute.xlu0 %2371
        %v2377 = vadd.f32 %v2169, %v2366
        %v2378 = vadd.f32 %v2170, %v2368
        %v2379 = vadd.f32 %v2171, %v2370
        %v2380 = vadd.f32 %v2172, %v2372
        %s2381 = sld [smem:[#allocation2 + $0x3a]]
        %v2382 = vstv %s2381
        %v2383 = vmul.f32 %v2382, %v2011
        %v2384 = vmul.f32 %v2382, %v2012
        %v2385 = vmul.f32 %v2382, %v2013
        %v2386 = vmul.f32 %v2382, %v2014
        %2391 = vrot.lane.b32.xlu0 %v2383, 127
        %v2392 = vpop.permute.xlu0 %2391
        %2393 = vrot.lane.b32.xlu0 %v2384, 127
        %v2394 = vpop.permute.xlu0 %2393
        %2395 = vrot.lane.b32.xlu0 %v2385, 127
        %v2396 = vpop.permute.xlu0 %2395
        %2397 = vrot.lane.b32.xlu0 %v2386, 127
        %v2398 = vpop.permute.xlu0 %2397
        %v2403 = vadd.f32 %v2195, %v2392
        %v2404 = vadd.f32 %v2196, %v2394
        %v2405 = vadd.f32 %v2197, %v2396
        %v2406 = vadd.f32 %v2198, %v2398
        %s2407 = sld [smem:[#allocation2 + $0x49]]
        %v2408 = vstv %s2407
        %v2409 = vmul.f32 %v2408, %v2011
        %v2410 = vmul.f32 %v2408, %v2012
        %v2411 = vmul.f32 %v2408, %v2013
        %v2412 = vmul.f32 %v2408, %v2014
        %2417 = vrot.lane.b32.xlu0 %v2409, 127
        %v2418 = vpop.permute.xlu0 %2417
        %2419 = vrot.lane.b32.xlu0 %v2410, 127
        %v2420 = vpop.permute.xlu0 %2419
        %2421 = vrot.lane.b32.xlu0 %v2411, 127
        %v2422 = vpop.permute.xlu0 %2421
        %2423 = vrot.lane.b32.xlu0 %v2412, 127
        %v2424 = vpop.permute.xlu0 %2423
        %v2429 = vadd.f32 %v2221, %v2418
        %v2430 = vadd.f32 %v2222, %v2420
        %v2431 = vadd.f32 %v2223, %v2422
        %v2432 = vadd.f32 %v2224, %v2424
        %s2433 = sld [smem:[#allocation2 + $0x58]]
        %v2434 = vstv %s2433
        %v2435 = vmul.f32 %v2434, %v2011
        %v2436 = vmul.f32 %v2434, %v2012
        %v2437 = vmul.f32 %v2434, %v2013
        %v2438 = vmul.f32 %v2434, %v2014
        %2443 = vrot.lane.b32.xlu0 %v2435, 127
        %v2444 = vpop.permute.xlu0 %2443
        %2445 = vrot.lane.b32.xlu0 %v2436, 127
        %v2446 = vpop.permute.xlu0 %2445
        %2447 = vrot.lane.b32.xlu0 %v2437, 127
        %v2448 = vpop.permute.xlu0 %2447
        %2449 = vrot.lane.b32.xlu0 %v2438, 127
        %v2450 = vpop.permute.xlu0 %2449
        %v2455 = vadd.f32 %v2247, %v2444
        %v2456 = vadd.f32 %v2248, %v2446
        %v2457 = vadd.f32 %v2249, %v2448
        %v2458 = vadd.f32 %v2250, %v2450
        %s2459 = sld [smem:[#allocation2 + $0x67]]
        %v2460 = vstv %s2459
        %v2461 = vmul.f32 %v2460, %v2011
        %v2462 = vmul.f32 %v2460, %v2012
        %v2463 = vmul.f32 %v2460, %v2013
        %v2464 = vmul.f32 %v2460, %v2014
        %2469 = vrot.lane.b32.xlu0 %v2461, 127
        %v2470 = vpop.permute.xlu0 %2469
        %2471 = vrot.lane.b32.xlu0 %v2462, 127
        %v2472 = vpop.permute.xlu0 %2471
        %2473 = vrot.lane.b32.xlu0 %v2463, 127
        %v2474 = vpop.permute.xlu0 %2473
        %2475 = vrot.lane.b32.xlu0 %v2464, 127
        %v2476 = vpop.permute.xlu0 %2475
        %v2481 = vadd.f32 %v2273, %v2470
        %v2482 = vadd.f32 %v2274, %v2472
        %v2483 = vadd.f32 %v2275, %v2474
        %v2484 = vadd.f32 %v2276, %v2476
        %s2485 = sld [smem:[#allocation2 + $0x76]]
        %v2486 = vstv %s2485
        %v2487 = vmul.f32 %v2486, %v2011
        %v2488 = vmul.f32 %v2486, %v2012
        %v2489 = vmul.f32 %v2486, %v2013
        %v2490 = vmul.f32 %v2486, %v2014
        %2495 = vrot.lane.b32.xlu0 %v2487, 127
        %v2496 = vpop.permute.xlu0 %2495
        %2497 = vrot.lane.b32.xlu0 %v2488, 127
        %v2498 = vpop.permute.xlu0 %2497
        %2499 = vrot.lane.b32.xlu0 %v2489, 127
        %v2500 = vpop.permute.xlu0 %2499
        %2501 = vrot.lane.b32.xlu0 %v2490, 127
        %v2502 = vpop.permute.xlu0 %2501
        %v2507 = vadd.f32 %v2299, %v2496
        %v2508 = vadd.f32 %v2300, %v2498
        %v2509 = vadd.f32 %v2301, %v2500
        %v2510 = vadd.f32 %v2302, %v2502
        %s2511 = sld [smem:[#allocation2 + $0xe]]
        %v2512 = vstv %s2511
        %v2513 = vmul.f32 %v2512, %v1927
        %v2514 = vmul.f32 %v2512, %v1928
        %v2515 = vmul.f32 %v2512, %v1929
        %v2516 = vmul.f32 %v2512, %v1930
        %2521 = vrot.lane.b32.xlu0 %v2513, 126
        %v2522 = vpop.permute.xlu0 %2521
        %2523 = vrot.lane.b32.xlu0 %v2514, 126
        %v2524 = vpop.permute.xlu0 %2523
        %2525 = vrot.lane.b32.xlu0 %v2515, 126
        %v2526 = vpop.permute.xlu0 %2525
        %2527 = vrot.lane.b32.xlu0 %v2516, 126
        %v2528 = vpop.permute.xlu0 %2527
        %v2533 = vadd.f32 %v2325, %v2522
        %v2534 = vadd.f32 %v2326, %v2524
        %v2535 = vadd.f32 %v2327, %v2526
        %v2536 = vadd.f32 %v2328, %v2528
        %s2537 = sld [smem:[#allocation2 + $0x1d]]
        %v2538 = vstv %s2537
        %v2539 = vmul.f32 %v2538, %v1927
        %v2540 = vmul.f32 %v2538, %v1928
        %v2541 = vmul.f32 %v2538, %v1929
        %v2542 = vmul.f32 %v2538, %v1930
        %2547 = vrot.lane.b32.xlu0 %v2539, 126
        %v2548 = vpop.permute.xlu0 %2547
        %2549 = vrot.lane.b32.xlu0 %v2540, 126
        %v2550 = vpop.permute.xlu0 %2549
        %2551 = vrot.lane.b32.xlu0 %v2541, 126
        %v2552 = vpop.permute.xlu0 %2551
        %2553 = vrot.lane.b32.xlu0 %v2542, 126
        %v2554 = vpop.permute.xlu0 %2553
        %v2559 = vadd.f32 %v2351, %v2548
        %v2560 = vadd.f32 %v2352, %v2550
        %v2561 = vadd.f32 %v2353, %v2552
        %v2562 = vadd.f32 %v2354, %v2554
        %s2563 = sld [smem:[#allocation2 + $0x2c]]
        %v2564 = vstv %s2563
        %v2565 = vmul.f32 %v2564, %v1927
        %v2566 = vmul.f32 %v2564, %v1928
        %v2567 = vmul.f32 %v2564, %v1929
        %v2568 = vmul.f32 %v2564, %v1930
        %2573 = vrot.lane.b32.xlu0 %v2565, 126
        %v2574 = vpop.permute.xlu0 %2573
        %2575 = vrot.lane.b32.xlu0 %v2566, 126
        %v2576 = vpop.permute.xlu0 %2575
        %2577 = vrot.lane.b32.xlu0 %v2567, 126
        %v2578 = vpop.permute.xlu0 %2577
        %2579 = vrot.lane.b32.xlu0 %v2568, 126
        %v2580 = vpop.permute.xlu0 %2579
        %v2585 = vadd.f32 %v2377, %v2574
        %v2586 = vadd.f32 %v2378, %v2576
        %v2587 = vadd.f32 %v2379, %v2578
        %v2588 = vadd.f32 %v2380, %v2580
        %s2589 = sld [smem:[#allocation2 + $0x3b]]
        %v2590 = vstv %s2589
        %v2591 = vmul.f32 %v2590, %v1927
        %v2592 = vmul.f32 %v2590, %v1928
        %v2593 = vmul.f32 %v2590, %v1929
        %v2594 = vmul.f32 %v2590, %v1930
        %2599 = vrot.lane.b32.xlu0 %v2591, 126
        %v2600 = vpop.permute.xlu0 %2599
        %2601 = vrot.lane.b32.xlu0 %v2592, 126
        %v2602 = vpop.permute.xlu0 %2601
        %2603 = vrot.lane.b32.xlu0 %v2593, 126
        %v2604 = vpop.permute.xlu0 %2603
        %2605 = vrot.lane.b32.xlu0 %v2594, 126
        %v2606 = vpop.permute.xlu0 %2605
        %v2611 = vadd.f32 %v2403, %v2600
        %v2612 = vadd.f32 %v2404, %v2602
        %v2613 = vadd.f32 %v2405, %v2604
        %v2614 = vadd.f32 %v2406, %v2606
        %s2615 = sld [smem:[#allocation2 + $0x4a]]
        %v2616 = vstv %s2615
        %v2617 = vmul.f32 %v2616, %v1927
        %v2618 = vmul.f32 %v2616, %v1928
        %v2619 = vmul.f32 %v2616, %v1929
        %v2620 = vmul.f32 %v2616, %v1930
        %2625 = vrot.lane.b32.xlu0 %v2617, 126
        %v2626 = vpop.permute.xlu0 %2625
        %2627 = vrot.lane.b32.xlu0 %v2618, 126
        %v2628 = vpop.permute.xlu0 %2627
        %2629 = vrot.lane.b32.xlu0 %v2619, 126
        %v2630 = vpop.permute.xlu0 %2629
        %2631 = vrot.lane.b32.xlu0 %v2620, 126
        %v2632 = vpop.permute.xlu0 %2631
        %v2637 = vadd.f32 %v2429, %v2626
        %v2638 = vadd.f32 %v2430, %v2628
        %v2639 = vadd.f32 %v2431, %v2630
        %v2640 = vadd.f32 %v2432, %v2632
        %s2641 = sld [smem:[#allocation2 + $0x59]]
        %v2642 = vstv %s2641
        %v2643 = vmul.f32 %v2642, %v1927
        %v2644 = vmul.f32 %v2642, %v1928
        %v2645 = vmul.f32 %v2642, %v1929
        %v2646 = vmul.f32 %v2642, %v1930
        %2651 = vrot.lane.b32.xlu0 %v2643, 126
        %v2652 = vpop.permute.xlu0 %2651
        %2653 = vrot.lane.b32.xlu0 %v2644, 126
        %v2654 = vpop.permute.xlu0 %2653
        %2655 = vrot.lane.b32.xlu0 %v2645, 126
        %v2656 = vpop.permute.xlu0 %2655
        %2657 = vrot.lane.b32.xlu0 %v2646, 126
        %v2658 = vpop.permute.xlu0 %2657
        %v2663 = vadd.f32 %v2455, %v2652
        %v2664 = vadd.f32 %v2456, %v2654
        %v2665 = vadd.f32 %v2457, %v2656
        %v2666 = vadd.f32 %v2458, %v2658
        %s2667 = sld [smem:[#allocation2 + $0x68]]
        %v2668 = vstv %s2667
        %v2669 = vmul.f32 %v2668, %v1927
        %v2670 = vmul.f32 %v2668, %v1928
        %v2671 = vmul.f32 %v2668, %v1929
        %v2672 = vmul.f32 %v2668, %v1930
        %2677 = vrot.lane.b32.xlu0 %v2669, 126
        %v2678 = vpop.permute.xlu0 %2677
        %2679 = vrot.lane.b32.xlu0 %v2670, 126
        %v2680 = vpop.permute.xlu0 %2679
        %2681 = vrot.lane.b32.xlu0 %v2671, 126
        %v2682 = vpop.permute.xlu0 %2681
        %2683 = vrot.lane.b32.xlu0 %v2672, 126
        %v2684 = vpop.permute.xlu0 %2683
        %v2689 = vadd.f32 %v2481, %v2678
        %v2690 = vadd.f32 %v2482, %v2680
        %v2691 = vadd.f32 %v2483, %v2682
        %v2692 = vadd.f32 %v2484, %v2684
        %s2693 = sld [smem:[#allocation2 + $0x77]]
        %v2694 = vstv %s2693
        %v2695 = vmul.f32 %v2694, %v1927
        %v2696 = vmul.f32 %v2694, %v1928
        %v2697 = vmul.f32 %v2694, %v1929
        %v2698 = vmul.f32 %v2694, %v1930
        %2703 = vrot.lane.b32.xlu0 %v2695, 126
        %v2704 = vpop.permute.xlu0 %2703
        %2705 = vrot.lane.b32.xlu0 %v2696, 126
        %v2706 = vpop.permute.xlu0 %2705
        %2707 = vrot.lane.b32.xlu0 %v2697, 126
        %v2708 = vpop.permute.xlu0 %2707
        %2709 = vrot.lane.b32.xlu0 %v2698, 126
        %v2710 = vpop.permute.xlu0 %2709
        %v2715 = vadd.f32 %v2507, %v2704
        %v2716 = vadd.f32 %v2508, %v2706
        %v2717 = vadd.f32 %v2509, %v2708
        %v2718 = vadd.f32 %v2510, %v2710
        %s2719 = sld [smem:[#allocation5]]
        %v2720 = vstv %s2719
        %v2721 = vadd.f32 %v2533, %v2720
        %v2722 = vadd.f32 %v2534, %v2720
        %v2723 = vadd.f32 %v2535, %v2720
        %v2724 = vadd.f32 %v2536, %v2720
        %v2725 = vpack.c.bf16 %v2721, %v2721
        %v2726 = vpack.c.bf16 %v2722, %v2722
        %v2727 = vpack.c.bf16 %v2723, %v2723
        %v2728 = vpack.c.bf16 %v2724, %v2724
        %vm2729 = vcmask 404480
        %2730 = vst.msk [vmem:[%s344] sm:$0xf] %vm2729, %v2725
        %2731 = vst.msk [vmem:[%s344 + $0x4] sm:$0xf] %vm2729, %v2726
        %2732 = vst.msk [vmem:[%s344 + $0x8] sm:$0xf] %vm2729, %v2727
        %2733 = vst.msk [vmem:[%s344 + $0xc] sm:$0xf] %vm2729, %v2728
        %vm2734 = vcmask 408576
        %v2735 = vsel %vm2734, %v2721, 0.0
        %2736 = vadd.xlane.f32.xlu0 %v2735
        %v2737 = vpop.xlane.xlu0 %2736
        %v2738 = vsel %vm2734, %v2722, 0.0
        %2739 = vadd.xlane.f32.xlu0 %v2738
        %v2740 = vpop.xlane.xlu0 %2739
        %v2741 = vsel %vm2734, %v2723, 0.0
        %2742 = vadd.xlane.f32.xlu0 %v2741
        %v2743 = vpop.xlane.xlu0 %2742
        %v2744 = vsel %vm2734, %v2724, 0.0
        %2745 = vadd.xlane.f32.xlu0 %v2744
        %v2746 = vpop.xlane.xlu0 %2745
        %v2747 = vmul.f32 %v2721, %v2721
        %v2748 = vmul.f32 %v2722, %v2722
        %v2749 = vmul.f32 %v2723, %v2723
        %v2750 = vmul.f32 %v2724, %v2724
        %v2751 = vsel %vm2734, %v2747, 0.0
        %2752 = vadd.xlane.f32.xlu0 %v2751
        %v2753 = vpop.xlane.xlu0 %2752
        %v2754 = vsel %vm2734, %v2748, 0.0
        %2755 = vadd.xlane.f32.xlu0 %v2754
        %v2756 = vpop.xlane.xlu0 %2755
        %v2757 = vsel %vm2734, %v2749, 0.0
        %2758 = vadd.xlane.f32.xlu0 %v2757
        %v2759 = vpop.xlane.xlu0 %2758
        %v2760 = vsel %vm2734, %v2750, 0.0
        %2761 = vadd.xlane.f32.xlu0 %v2760
        %v2762 = vpop.xlane.xlu0 %2761
        %v2763 = vadd.f32 %v2737, %v2740
        %v2764 = vadd.f32 %v2763, %v2743
        %v2765 = vadd.f32 %v2764, %v2746
        %v2766 = vrot.slane %v2765, 4
        %v2767 = vadd.f32 %v2765, %v2766
        %v2768 = vrot.slane %v2767, 2
        %v2769 = vadd.f32 %v2767, %v2768
        %v2770 = vrot.slane %v2769, 1
        %v2771 = vadd.f32 %v2769, %v2770
        %v2772 = vadd.f32 %v2753, %v2756
        %v2773 = vadd.f32 %v2772, %v2759
        %v2774 = vadd.f32 %v2773, %v2762
        %v2775 = vrot.slane %v2774, 4
        %v2776 = vadd.f32 %v2774, %v2775
        %v2777 = vrot.slane %v2776, 2
        %v2778 = vadd.f32 %v2776, %v2777
        %v2779 = vrot.slane %v2778, 1
        %v2780 = vadd.f32 %v2778, %v2779
        %vm2781 = vcmask 7168
        %v2782 = vsel %vm2781, %v2771, %v2780
        %s2783 = sld [smem:[#allocation5 + $0x1]]
        %v2784 = vstv %s2783
        %v2785 = vadd.f32 %v2559, %v2784
        %v2786 = vadd.f32 %v2560, %v2784
        %v2787 = vadd.f32 %v2561, %v2784
        %v2788 = vadd.f32 %v2562, %v2784
        %v2789 = vpack.c.bf16 %v2785, %v2785
        %v2790 = vpack.c.bf16 %v2786, %v2786
        %v2791 = vpack.c.bf16 %v2787, %v2787
        %v2792 = vpack.c.bf16 %v2788, %v2788
        %s2793 = scalar_lea.vmem %s344, 16 [#allocation7]
        %2794 = vst.msk [vmem:[%s2793] sm:$0xf] %vm2729, %v2789
        %2795 = vst.msk [vmem:[%s2793 + $0x4] sm:$0xf] %vm2729, %v2790
        %2796 = vst.msk [vmem:[%s2793 + $0x8] sm:$0xf] %vm2729, %v2791
        %2797 = vst.msk [vmem:[%s2793 + $0xc] sm:$0xf] %vm2729, %v2792
        %v2798 = vsel %vm2734, %v2785, 0.0
        %2799 = vadd.xlane.f32.xlu0 %v2798
        %v2800 = vpop.xlane.xlu0 %2799
        %v2801 = vsel %vm2734, %v2786, 0.0
        %2802 = vadd.xlane.f32.xlu0 %v2801
        %v2803 = vpop.xlane.xlu0 %2802
        %v2804 = vsel %vm2734, %v2787, 0.0
        %2805 = vadd.xlane.f32.xlu0 %v2804
        %v2806 = vpop.xlane.xlu0 %2805
        %v2807 = vsel %vm2734, %v2788, 0.0
        %2808 = vadd.xlane.f32.xlu0 %v2807
        %v2809 = vpop.xlane.xlu0 %2808
        %v2810 = vmul.f32 %v2785, %v2785
        %v2811 = vmul.f32 %v2786, %v2786
        %v2812 = vmul.f32 %v2787, %v2787
        %v2813 = vmul.f32 %v2788, %v2788
        %v2814 = vsel %vm2734, %v2810, 0.0
        %2815 = vadd.xlane.f32.xlu0 %v2814
        %v2816 = vpop.xlane.xlu0 %2815
        %v2817 = vsel %vm2734, %v2811, 0.0
        %2818 = vadd.xlane.f32.xlu0 %v2817
        %v2819 = vpop.xlane.xlu0 %2818
        %v2820 = vsel %vm2734, %v2812, 0.0
        %2821 = vadd.xlane.f32.xlu0 %v2820
        %v2822 = vpop.xlane.xlu0 %2821
        %v2823 = vsel %vm2734, %v2813, 0.0
        %2824 = vadd.xlane.f32.xlu0 %v2823
        %v2825 = vpop.xlane.xlu0 %2824
        %v2826 = vadd.f32 %v2800, %v2803
        %v2827 = vadd.f32 %v2826, %v2806
        %v2828 = vadd.f32 %v2827, %v2809
        %v2829 = vrot.slane %v2828, 4
        %v2830 = vadd.f32 %v2828, %v2829
        %v2831 = vrot.slane %v2830, 2
        %v2832 = vadd.f32 %v2830, %v2831
        %v2833 = vrot.slane %v2832, 1
        %v2834 = vadd.f32 %v2832, %v2833
        %v2835 = vadd.f32 %v2816, %v2819
        %v2836 = vadd.f32 %v2835, %v2822
        %v2837 = vadd.f32 %v2836, %v2825
        %v2838 = vrot.slane %v2837, 4
        %v2839 = vadd.f32 %v2837, %v2838
        %v2840 = vrot.slane %v2839, 2
        %v2841 = vadd.f32 %v2839, %v2840
        %v2842 = vrot.slane %v2841, 1
        %v2843 = vadd.f32 %v2841, %v2842
        %v2844 = vsel %vm2781, %v2834, %v2843
        %s2845 = sld [smem:[#allocation5 + $0x2]]
        %v2846 = vstv %s2845
        %v2847 = vadd.f32 %v2585, %v2846
        %v2848 = vadd.f32 %v2586, %v2846
        %v2849 = vadd.f32 %v2587, %v2846
        %v2850 = vadd.f32 %v2588, %v2846
        %v2851 = vpack.c.bf16 %v2847, %v2847
        %v2852 = vpack.c.bf16 %v2848, %v2848
        %v2853 = vpack.c.bf16 %v2849, %v2849
        %v2854 = vpack.c.bf16 %v2850, %v2850
        %s2855 = scalar_lea.vmem %s344, 32 [#allocation7]
        %2856 = vst.msk [vmem:[%s2855] sm:$0xf] %vm2729, %v2851
        %2857 = vst.msk [vmem:[%s2855 + $0x4] sm:$0xf] %vm2729, %v2852
        %2858 = vst.msk [vmem:[%s2855 + $0x8] sm:$0xf] %vm2729, %v2853
        %2859 = vst.msk [vmem:[%s2855 + $0xc] sm:$0xf] %vm2729, %v2854
        %v2860 = vsel %vm2734, %v2847, 0.0
        %2861 = vadd.xlane.f32.xlu0 %v2860
        %v2862 = vpop.xlane.xlu0 %2861
        %v2863 = vsel %vm2734, %v2848, 0.0
        %2864 = vadd.xlane.f32.xlu0 %v2863
        %v2865 = vpop.xlane.xlu0 %2864
        %v2866 = vsel %vm2734, %v2849, 0.0
        %2867 = vadd.xlane.f32.xlu0 %v2866
        %v2868 = vpop.xlane.xlu0 %2867
        %v2869 = vsel %vm2734, %v2850, 0.0
        %2870 = vadd.xlane.f32.xlu0 %v2869
        %v2871 = vpop.xlane.xlu0 %2870
        %v2872 = vmul.f32 %v2847, %v2847
        %v2873 = vmul.f32 %v2848, %v2848
        %v2874 = vmul.f32 %v2849, %v2849
        %v2875 = vmul.f32 %v2850, %v2850
        %v2876 = vsel %vm2734, %v2872, 0.0
        %2877 = vadd.xlane.f32.xlu0 %v2876
        %v2878 = vpop.xlane.xlu0 %2877
        %v2879 = vsel %vm2734, %v2873, 0.0
        %2880 = vadd.xlane.f32.xlu0 %v2879
        %v2881 = vpop.xlane.xlu0 %2880
        %v2882 = vsel %vm2734, %v2874, 0.0
        %2883 = vadd.xlane.f32.xlu0 %v2882
        %v2884 = vpop.xlane.xlu0 %2883
        %v2885 = vsel %vm2734, %v2875, 0.0
        %2886 = vadd.xlane.f32.xlu0 %v2885
        %v2887 = vpop.xlane.xlu0 %2886
        %v2888 = vadd.f32 %v2862, %v2865
        %v2889 = vadd.f32 %v2888, %v2868
        %v2890 = vadd.f32 %v2889, %v2871
        %v2891 = vrot.slane %v2890, 4
        %v2892 = vadd.f32 %v2890, %v2891
        %v2893 = vrot.slane %v2892, 2
        %v2894 = vadd.f32 %v2892, %v2893
        %v2895 = vrot.slane %v2894, 1
        %v2896 = vadd.f32 %v2894, %v2895
        %v2897 = vadd.f32 %v2878, %v2881
        %v2898 = vadd.f32 %v2897, %v2884
        %v2899 = vadd.f32 %v2898, %v2887
        %v2900 = vrot.slane %v2899, 4
        %v2901 = vadd.f32 %v2899, %v2900
        %v2902 = vrot.slane %v2901, 2
        %v2903 = vadd.f32 %v2901, %v2902
        %v2904 = vrot.slane %v2903, 1
        %v2905 = vadd.f32 %v2903, %v2904
        %v2906 = vsel %vm2781, %v2896, %v2905
        %s2907 = sld [smem:[#allocation5 + $0x3]]
        %v2908 = vstv %s2907
        %v2909 = vadd.f32 %v2611, %v2908
        %v2910 = vadd.f32 %v2612, %v2908
        %v2911 = vadd.f32 %v2613, %v2908
        %v2912 = vadd.f32 %v2614, %v2908
        %v2913 = vpack.c.bf16 %v2909, %v2909
        %v2914 = vpack.c.bf16 %v2910, %v2910
        %v2915 = vpack.c.bf16 %v2911, %v2911
        %v2916 = vpack.c.bf16 %v2912, %v2912
        %s2917 = scalar_lea.vmem %s344, 48 [#allocation7]
        %2918 = vst.msk [vmem:[%s2917] sm:$0xf] %vm2729, %v2913
        %2919 = vst.msk [vmem:[%s2917 + $0x4] sm:$0xf] %vm2729, %v2914
        %2920 = vst.msk [vmem:[%s2917 + $0x8] sm:$0xf] %vm2729, %v2915
        %2921 = vst.msk [vmem:[%s2917 + $0xc] sm:$0xf] %vm2729, %v2916
        %v2922 = vsel %vm2734, %v2909, 0.0
        %2923 = vadd.xlane.f32.xlu0 %v2922
        %v2924 = vpop.xlane.xlu0 %2923
        %v2925 = vsel %vm2734, %v2910, 0.0
        %2926 = vadd.xlane.f32.xlu0 %v2925
        %v2927 = vpop.xlane.xlu0 %2926
        %v2928 = vsel %vm2734, %v2911, 0.0
        %2929 = vadd.xlane.f32.xlu0 %v2928
        %v2930 = vpop.xlane.xlu0 %2929
        %v2931 = vsel %vm2734, %v2912, 0.0
        %2932 = vadd.xlane.f32.xlu0 %v2931
        %v2933 = vpop.xlane.xlu0 %2932
        %v2934 = vmul.f32 %v2909, %v2909
        %v2935 = vmul.f32 %v2910, %v2910
        %v2936 = vmul.f32 %v2911, %v2911
        %v2937 = vmul.f32 %v2912, %v2912
        %v2938 = vsel %vm2734, %v2934, 0.0
        %2939 = vadd.xlane.f32.xlu0 %v2938
        %v2940 = vpop.xlane.xlu0 %2939
        %v2941 = vsel %vm2734, %v2935, 0.0
        %2942 = vadd.xlane.f32.xlu0 %v2941
        %v2943 = vpop.xlane.xlu0 %2942
        %v2944 = vsel %vm2734, %v2936, 0.0
        %2945 = vadd.xlane.f32.xlu0 %v2944
        %v2946 = vpop.xlane.xlu0 %2945
        %v2947 = vsel %vm2734, %v2937, 0.0
        %2948 = vadd.xlane.f32.xlu0 %v2947
        %v2949 = vpop.xlane.xlu0 %2948
        %v2950 = vadd.f32 %v2924, %v2927
        %v2951 = vadd.f32 %v2950, %v2930
        %v2952 = vadd.f32 %v2951, %v2933
        %v2953 = vrot.slane %v2952, 4
        %v2954 = vadd.f32 %v2952, %v2953
        %v2955 = vrot.slane %v2954, 2
        %v2956 = vadd.f32 %v2954, %v2955
        %v2957 = vrot.slane %v2956, 1
        %v2958 = vadd.f32 %v2956, %v2957
        %v2959 = vadd.f32 %v2940, %v2943
        %v2960 = vadd.f32 %v2959, %v2946
        %v2961 = vadd.f32 %v2960, %v2949
        %v2962 = vrot.slane %v2961, 4
        %v2963 = vadd.f32 %v2961, %v2962
        %v2964 = vrot.slane %v2963, 2
        %v2965 = vadd.f32 %v2963, %v2964
        %v2966 = vrot.slane %v2965, 1
        %v2967 = vadd.f32 %v2965, %v2966
        %v2968 = vsel %vm2781, %v2958, %v2967
        %s2969 = sld [smem:[#allocation5 + $0x4]]
        %v2970 = vstv %s2969
        %v2971 = vadd.f32 %v2637, %v2970
        %v2972 = vadd.f32 %v2638, %v2970
        %v2973 = vadd.f32 %v2639, %v2970
        %v2974 = vadd.f32 %v2640, %v2970
        %v2975 = vpack.c.bf16 %v2971, %v2971
        %v2976 = vpack.c.bf16 %v2972, %v2972
        %v2977 = vpack.c.bf16 %v2973, %v2973
        %v2978 = vpack.c.bf16 %v2974, %v2974
        %s2979 = scalar_lea.vmem %s344, 64 [#allocation7]
        %2980 = vst.msk [vmem:[%s2979] sm:$0xf] %vm2729, %v2975
        %2981 = vst.msk [vmem:[%s2979 + $0x4] sm:$0xf] %vm2729, %v2976
        %2982 = vst.msk [vmem:[%s2979 + $0x8] sm:$0xf] %vm2729, %v2977
        %2983 = vst.msk [vmem:[%s2979 + $0xc] sm:$0xf] %vm2729, %v2978
        %v2984 = vsel %vm2734, %v2971, 0.0
        %2985 = vadd.xlane.f32.xlu0 %v2984
        %v2986 = vpop.xlane.xlu0 %2985
        %v2987 = vsel %vm2734, %v2972, 0.0
        %2988 = vadd.xlane.f32.xlu0 %v2987
        %v2989 = vpop.xlane.xlu0 %2988
        %v2990 = vsel %vm2734, %v2973, 0.0
        %2991 = vadd.xlane.f32.xlu0 %v2990
        %v2992 = vpop.xlane.xlu0 %2991
        %v2993 = vsel %vm2734, %v2974, 0.0
        %2994 = vadd.xlane.f32.xlu0 %v2993
        %v2995 = vpop.xlane.xlu0 %2994
        %v2996 = vmul.f32 %v2971, %v2971
        %v2997 = vmul.f32 %v2972, %v2972
        %v2998 = vmul.f32 %v2973, %v2973
        %v2999 = vmul.f32 %v2974, %v2974
        %v3000 = vsel %vm2734, %v2996, 0.0
        %3001 = vadd.xlane.f32.xlu0 %v3000
        %v3002 = vpop.xlane.xlu0 %3001
        %v3003 = vsel %vm2734, %v2997, 0.0
        %3004 = vadd.xlane.f32.xlu0 %v3003
        %v3005 = vpop.xlane.xlu0 %3004
        %v3006 = vsel %vm2734, %v2998, 0.0
        %3007 = vadd.xlane.f32.xlu0 %v3006
        %v3008 = vpop.xlane.xlu0 %3007
        %v3009 = vsel %vm2734, %v2999, 0.0
        %3010 = vadd.xlane.f32.xlu0 %v3009
        %v3011 = vpop.xlane.xlu0 %3010
        %v3012 = vadd.f32 %v2986, %v2989
        %v3013 = vadd.f32 %v3012, %v2992
        %v3014 = vadd.f32 %v3013, %v2995
        %v3015 = vrot.slane %v3014, 4
        %v3016 = vadd.f32 %v3014, %v3015
        %v3017 = vrot.slane %v3016, 2
        %v3018 = vadd.f32 %v3016, %v3017
        %v3019 = vrot.slane %v3018, 1
        %v3020 = vadd.f32 %v3018, %v3019
        %v3021 = vadd.f32 %v3002, %v3005
        %v3022 = vadd.f32 %v3021, %v3008
        %v3023 = vadd.f32 %v3022, %v3011
        %v3024 = vrot.slane %v3023, 4
        %v3025 = vadd.f32 %v3023, %v3024
        %v3026 = vrot.slane %v3025, 2
        %v3027 = vadd.f32 %v3025, %v3026
        %v3028 = vrot.slane %v3027, 1
        %v3029 = vadd.f32 %v3027, %v3028
        %v3030 = vsel %vm2781, %v3020, %v3029
        %s3031 = sld [smem:[#allocation5 + $0x5]]
        %v3032 = vstv %s3031
        %v3033 = vadd.f32 %v2663, %v3032
        %v3034 = vadd.f32 %v2664, %v3032
        %v3035 = vadd.f32 %v2665, %v3032
        %v3036 = vadd.f32 %v2666, %v3032
        %v3037 = vpack.c.bf16 %v3033, %v3033
        %v3038 = vpack.c.bf16 %v3034, %v3034
        %v3039 = vpack.c.bf16 %v3035, %v3035
        %v3040 = vpack.c.bf16 %v3036, %v3036
        %s3041 = scalar_lea.vmem %s344, 80 [#allocation7]
        %3042 = vst.msk [vmem:[%s3041] sm:$0xf] %vm2729, %v3037
        %3043 = vst.msk [vmem:[%s3041 + $0x4] sm:$0xf] %vm2729, %v3038
        %3044 = vst.msk [vmem:[%s3041 + $0x8] sm:$0xf] %vm2729, %v3039
        %3045 = vst.msk [vmem:[%s3041 + $0xc] sm:$0xf] %vm2729, %v3040
        %v3046 = vsel %vm2734, %v3033, 0.0
        %3047 = vadd.xlane.f32.xlu0 %v3046
        %v3048 = vpop.xlane.xlu0 %3047
        %v3049 = vsel %vm2734, %v3034, 0.0
        %3050 = vadd.xlane.f32.xlu0 %v3049
        %v3051 = vpop.xlane.xlu0 %3050
        %v3052 = vsel %vm2734, %v3035, 0.0
        %3053 = vadd.xlane.f32.xlu0 %v3052
        %v3054 = vpop.xlane.xlu0 %3053
        %v3055 = vsel %vm2734, %v3036, 0.0
        %3056 = vadd.xlane.f32.xlu0 %v3055
        %v3057 = vpop.xlane.xlu0 %3056
        %v3058 = vmul.f32 %v3033, %v3033
        %v3059 = vmul.f32 %v3034, %v3034
        %v3060 = vmul.f32 %v3035, %v3035
        %v3061 = vmul.f32 %v3036, %v3036
        %v3062 = vsel %vm2734, %v3058, 0.0
        %3063 = vadd.xlane.f32.xlu0 %v3062
        %v3064 = vpop.xlane.xlu0 %3063
        %v3065 = vsel %vm2734, %v3059, 0.0
        %3066 = vadd.xlane.f32.xlu0 %v3065
        %v3067 = vpop.xlane.xlu0 %3066
        %v3068 = vsel %vm2734, %v3060, 0.0
        %3069 = vadd.xlane.f32.xlu0 %v3068
        %v3070 = vpop.xlane.xlu0 %3069
        %v3071 = vsel %vm2734, %v3061, 0.0
        %3072 = vadd.xlane.f32.xlu0 %v3071
        %v3073 = vpop.xlane.xlu0 %3072
        %v3074 = vadd.f32 %v3048, %v3051
        %v3075 = vadd.f32 %v3074, %v3054
        %v3076 = vadd.f32 %v3075, %v3057
        %v3077 = vrot.slane %v3076, 4
        %v3078 = vadd.f32 %v3076, %v3077
        %v3079 = vrot.slane %v3078, 2
        %v3080 = vadd.f32 %v3078, %v3079
        %v3081 = vrot.slane %v3080, 1
        %v3082 = vadd.f32 %v3080, %v3081
        %v3083 = vadd.f32 %v3064, %v3067
        %v3084 = vadd.f32 %v3083, %v3070
        %v3085 = vadd.f32 %v3084, %v3073
        %v3086 = vrot.slane %v3085, 4
        %v3087 = vadd.f32 %v3085, %v3086
        %v3088 = vrot.slane %v3087, 2
        %v3089 = vadd.f32 %v3087, %v3088
        %v3090 = vrot.slane %v3089, 1
        %v3091 = vadd.f32 %v3089, %v3090
        %v3092 = vsel %vm2781, %v3082, %v3091
        %s3093 = sld [smem:[#allocation5 + $0x6]]
        %v3094 = vstv %s3093
        %v3095 = vadd.f32 %v2689, %v3094
        %v3096 = vadd.f32 %v2690, %v3094
        %v3097 = vadd.f32 %v2691, %v3094
        %v3098 = vadd.f32 %v2692, %v3094
        %v3099 = vpack.c.bf16 %v3095, %v3095
        %v3100 = vpack.c.bf16 %v3096, %v3096
        %v3101 = vpack.c.bf16 %v3097, %v3097
        %v3102 = vpack.c.bf16 %v3098, %v3098
        %s3103 = scalar_lea.vmem %s344, 96 [#allocation7]
        %3104 = vst.msk [vmem:[%s3103] sm:$0xf] %vm2729, %v3099
        %3105 = vst.msk [vmem:[%s3103 + $0x4] sm:$0xf] %vm2729, %v3100
        %3106 = vst.msk [vmem:[%s3103 + $0x8] sm:$0xf] %vm2729, %v3101
        %3107 = vst.msk [vmem:[%s3103 + $0xc] sm:$0xf] %vm2729, %v3102
        %v3108 = vsel %vm2734, %v3095, 0.0
        %3109 = vadd.xlane.f32.xlu0 %v3108
        %v3110 = vpop.xlane.xlu0 %3109
        %v3111 = vsel %vm2734, %v3096, 0.0
        %3112 = vadd.xlane.f32.xlu0 %v3111
        %v3113 = vpop.xlane.xlu0 %3112
        %v3114 = vsel %vm2734, %v3097, 0.0
        %3115 = vadd.xlane.f32.xlu0 %v3114
        %v3116 = vpop.xlane.xlu0 %3115
        %v3117 = vsel %vm2734, %v3098, 0.0
        %3118 = vadd.xlane.f32.xlu0 %v3117
        %v3119 = vpop.xlane.xlu0 %3118
        %v3120 = vmul.f32 %v3095, %v3095
        %v3121 = vmul.f32 %v3096, %v3096
        %v3122 = vmul.f32 %v3097, %v3097
        %v3123 = vmul.f32 %v3098, %v3098
        %v3124 = vsel %vm2734, %v3120, 0.0
        %3125 = vadd.xlane.f32.xlu0 %v3124
        %v3126 = vpop.xlane.xlu0 %3125
        %v3127 = vsel %vm2734, %v3121, 0.0
        %3128 = vadd.xlane.f32.xlu0 %v3127
        %v3129 = vpop.xlane.xlu0 %3128
        %v3130 = vsel %vm2734, %v3122, 0.0
        %3131 = vadd.xlane.f32.xlu0 %v3130
        %v3132 = vpop.xlane.xlu0 %3131
        %v3133 = vsel %vm2734, %v3123, 0.0
        %3134 = vadd.xlane.f32.xlu0 %v3133
        %v3135 = vpop.xlane.xlu0 %3134
        %v3136 = vadd.f32 %v3110, %v3113
        %v3137 = vadd.f32 %v3136, %v3116
        %v3138 = vadd.f32 %v3137, %v3119
        %v3139 = vrot.slane %v3138, 4
        %v3140 = vadd.f32 %v3138, %v3139
        %v3141 = vrot.slane %v3140, 2
        %v3142 = vadd.f32 %v3140, %v3141
        %v3143 = vrot.slane %v3142, 1
        %v3144 = vadd.f32 %v3142, %v3143
        %v3145 = vadd.f32 %v3126, %v3129
        %v3146 = vadd.f32 %v3145, %v3132
        %v3147 = vadd.f32 %v3146, %v3135
        %v3148 = vrot.slane %v3147, 4
        %v3149 = vadd.f32 %v3147, %v3148
        %v3150 = vrot.slane %v3149, 2
        %v3151 = vadd.f32 %v3149, %v3150
        %v3152 = vrot.slane %v3151, 1
        %v3153 = vadd.f32 %v3151, %v3152
        %v3154 = vsel %vm2781, %v3144, %v3153
        %s3155 = sld [smem:[#allocation5 + $0x7]]
        %v3156 = vstv %s3155
        %v3157 = vadd.f32 %v2715, %v3156
        %v3158 = vadd.f32 %v2716, %v3156
        %v3159 = vadd.f32 %v2717, %v3156
        %v3160 = vadd.f32 %v2718, %v3156
        %v3161 = vpack.c.bf16 %v3157, %v3157
        %v3162 = vpack.c.bf16 %v3158, %v3158
        %v3163 = vpack.c.bf16 %v3159, %v3159
        %v3164 = vpack.c.bf16 %v3160, %v3160
        %s3165 = scalar_lea.vmem %s344, 112 [#allocation7]
        %3166 = vst.msk [vmem:[%s3165] sm:$0xf] %vm2729, %v3161
        %3167 = vst.msk [vmem:[%s3165 + $0x4] sm:$0xf] %vm2729, %v3162
        %3168 = vst.msk [vmem:[%s3165 + $0x8] sm:$0xf] %vm2729, %v3163
        %3169 = vst.msk [vmem:[%s3165 + $0xc] sm:$0xf] %vm2729, %v3164
        %v3170 = vsel %vm2734, %v3157, 0.0
        %3171 = vadd.xlane.f32.xlu0 %v3170
        %v3172 = vpop.xlane.xlu0 %3171
        %v3173 = vsel %vm2734, %v3158, 0.0
        %3174 = vadd.xlane.f32.xlu0 %v3173
        %v3175 = vpop.xlane.xlu0 %3174
        %v3176 = vsel %vm2734, %v3159, 0.0
        %3177 = vadd.xlane.f32.xlu0 %v3176
        %v3178 = vpop.xlane.xlu0 %3177
        %v3179 = vsel %vm2734, %v3160, 0.0
        %3180 = vadd.xlane.f32.xlu0 %v3179
        %v3181 = vpop.xlane.xlu0 %3180
        %v3182 = vmul.f32 %v3157, %v3157
        %v3183 = vmul.f32 %v3158, %v3158
        %v3184 = vmul.f32 %v3159, %v3159
        %v3185 = vmul.f32 %v3160, %v3160
        %v3186 = vsel %vm2734, %v3182, 0.0
        %3187 = vadd.xlane.f32.xlu0 %v3186
        %v3188 = vpop.xlane.xlu0 %3187
        %v3189 = vsel %vm2734, %v3183, 0.0
        %3190 = vadd.xlane.f32.xlu0 %v3189
        %v3191 = vpop.xlane.xlu0 %3190
        %v3192 = vsel %vm2734, %v3184, 0.0
        %3193 = vadd.xlane.f32.xlu0 %v3192
        %v3194 = vpop.xlane.xlu0 %3193
        %v3195 = vsel %vm2734, %v3185, 0.0
        %3196 = vadd.xlane.f32.xlu0 %v3195
        %v3197 = vpop.xlane.xlu0 %3196
        %v3198 = vadd.f32 %v3172, %v3175
        %v3199 = vadd.f32 %v3198, %v3178
        %v3200 = vadd.f32 %v3199, %v3181
        %v3201 = vrot.slane %v3200, 4
        %v3202 = vadd.f32 %v3200, %v3201
        %v3203 = vrot.slane %v3202, 2
        %v3204 = vadd.f32 %v3202, %v3203
        %v3205 = vrot.slane %v3204, 1
        %v3206 = vadd.f32 %v3204, %v3205
        %v3207 = vadd.f32 %v3188, %v3191
        %v3208 = vadd.f32 %v3207, %v3194
        %v3209 = vadd.f32 %v3208, %v3197
        %v3210 = vrot.slane %v3209, 4
        %v3211 = vadd.f32 %v3209, %v3210
        %v3212 = vrot.slane %v3211, 2
        %v3213 = vadd.f32 %v3211, %v3212
        %v3214 = vrot.slane %v3213, 1
        %v3215 = vadd.f32 %v3213, %v3214
        %v3216 = vsel %vm2781, %v3206, %v3215
        %v3218 = vrot.slane %v2844, 7
        %v3221 = vrot.slane %v2906, 6
        %v3224 = vrot.slane %v2968, 5
        %v3227 = vrot.slane %v3030, 4
        %v3230 = vrot.slane %v3092, 3
        %v3233 = vrot.slane %v3154, 2
        %v3236 = vrot.slane %v3216, 1
        %vm3238 = vcmask 1040384
        %v3239 = vsel %vm3238, %v2782, %v3218
        %vm3240 = vcmask 1041408
        %v3241 = vsel %vm3240, %v3239, %v3221
        %vm3242 = vcmask 1042432
        %v3243 = vsel %vm3242, %v3241, %v3224
        %vm3244 = vcmask 1043456
        %v3245 = vsel %vm3244, %v3243, %v3227
        %vm3246 = vcmask 1044480
        %v3247 = vsel %vm3246, %v3245, %v3230
        %vm3248 = vcmask 1045504
        %v3249 = vsel %vm3248, %v3247, %v3233
        %vm3250 = vcmask 1046528
        %v3251 = vsel %vm3250, %v3249, %v3236
        %vm3252 = vcmask 15360
        %3253 = vst.msk [vmem:[%s374] sm:$0xff] %vm3252, %v3251
        %s3254 = sand.u32 %s178, 1
        %s3255 = scalar_lea.sflag [#allocation3], %s3254
        %s3256 = sand.u32 %s178, 1
        %s3257 = smul.addr %s3256, 128
        %s3258 = scalar_lea.vmem [#allocation7], %s3257
        %p3259 = scmp.lt.s32.totalorder %s24, 1
        %s3260 = scalar_select %p3259, %s24, 1
        %s3261 = smul.addr %s3260, 8
        %s3262 = scalar_lea.vmem %s7, %s3261
        // Predicated region
        $region53: #{tpu_custom_call.1} parent=43 // pred_check
          %p3263 = pneg %p188
        $region54: #{tpu_custom_call.1} parent=43 // pred_check_branch
          %3265 = sbr.rel (%p3263) target = $region56
        $region55: #{tpu_custom_call.1} parent=43 // pred_region
          %3267 = vsyncadd %s3255, 0
          %s3268 = smul.addr %s24, 32
          %s3269 = smul.addr %s3268, 4
          %s3270 = scalar_lea.hbm %s6, %s3269
          %s3271 = sshll.u32 %s3258, 4
          %s3272 = int_to_ptr.vmem [resolvable:$true] %s3271
          %s3273 = sshll.u32 %s3270, 4
          %s3274 = int_to_ptr.hbm [resolvable:$true] %s3273
          %3279 = dma.vmem_to_hbm [thread:$0]  %s3272, 2048, %s3274, %s3255, 64, 64, 4
        $region56: #{tpu_custom_call.1} parent=43 // pred_fallthru
          _
        // Predicated region
        $region57: #{tpu_custom_call.1} parent=43 // pred_check
          %p3280 = pneg %p214
        $region58: #{tpu_custom_call.1} parent=43 // pred_check_branch
          %3282 = sbr.rel (%p3280) target = $region60
        $region59: #{tpu_custom_call.1} parent=43 // pred_region
          _
        $region60: #{tpu_custom_call.1} parent=43 // pred_fallthru
          _
      $region44: #{tpu_custom_call.1} parent=5 // pred_fallthru
        _
      %p3283 = scmp.le.s32.totalorder 2, %s19
      // Predicated region
      $region61: #{tpu_custom_call.1} parent=5 // pred_check
        %p3284 = pneg %p3283
      $region62: #{tpu_custom_call.1} parent=5 // pred_check_branch
        %3286 = sbr.rel (%p3284) target = $region64
      $region63: #{tpu_custom_call.1} parent=5 // pred_region
        %s3287 = ssub.s32 %s19, 2
        // Predicated region
        $region65: #{tpu_custom_call.1} parent=63 // pred_check
          %p3288 = pneg %p194
        $region66: #{tpu_custom_call.1} parent=63 // pred_check_branch
          %3290 = sbr.rel (%p3288) target = $region68
        $region67: #{tpu_custom_call.1} parent=63 // pred_region
          %s3291 = sand.u32 %s179, 1
          %s3292 = scalar_lea.sflag [#allocation3], %s3291
          %s3293 = sand.u32 %s179, 1
          %s3294 = smul.addr %s3293, 128
          %s3295 = scalar_lea.vmem [#allocation7], %s3294
          %3297 = dma.done %s3292, 2048
        $region68: #{tpu_custom_call.1} parent=63 // pred_fallthru
          _
        // Predicated region
        $region69: #{tpu_custom_call.1} parent=63 // pred_check
          %p3298 = pneg %p220
        $region70: #{tpu_custom_call.1} parent=63 // pred_check_branch
          %3300 = sbr.rel (%p3298) target = $region72
        $region71: #{tpu_custom_call.1} parent=63 // pred_region
          %p3301 = scmp.lt.s32.totalorder %s25, 1
          %s3302 = scalar_select %p3301, %s25, 1
          %s3303 = smul.addr %s3302, 8
          %s3304 = scalar_lea.vmem %s7, %s3303
        $region72: #{tpu_custom_call.1} parent=63 // pred_fallthru
          _
      $region64: #{tpu_custom_call.1} parent=5 // pred_fallthru
        _
    $region6: #{tpu_custom_call.1} parent=1 // loop_footer
      %s23 = sadd.s32 1, %s19
    $region7: #{tpu_custom_call.1} parent=1 // loop_footer_branch
      %18 = sbr.rel target = $region3
    $region8: #{tpu_custom_call.1} parent=1 // loop_exit
      _
    %3305 = vsyncpa [#allocation3], 1
    %s3306 = scalar_lea.sflag [#allocation3], 1
    %3307 = vsyncpa %s3306, 1
    %3308 = vsyncpa [#allocation4], 1
    %s3309 = scalar_lea.sflag [#allocation4], 1
    %3310 = vsyncpa %s3309, 1
    %3311 = vsyncpa [#allocation6], 1

</llo_original>
